<compile_context>
chip_gen: v7x
topology: tpu7x:2x2x1
jax: 0.10.0
libtpu: 0.0.40
codegen_flags: <defaults>
</compile_context>

<pallas_src>
import jax
import jax.numpy as jnp
from jax.experimental import pallas as pl
from jax.experimental.pallas import tpu as pltpu

H = 768        # BERT hidden size
F1 = 512       # fc1 out features
C = 2          # number of classes
C_PAD = 128    # lane-dense padded class dim


def _round_up(n, m):
    return ((n + m - 1) // m) * m


def fused_bert_arch_kernel(emb_ref, mask_ref, wp_ref, bp_ref, w1_ref, b1_ref,
                           w2_ref, b2_ref, out_ref, sum_ref, cnt_ref):
    """Streamed masked-mean pooling over S, then (pooler dense + tanh)
    -> fc1 -> ReLU -> fc2 -> LogSoftmax on the last S step.

    emb/weights are bf16 (MXU-native inputs, halved HBM traffic); pooling
    accumulation, matmul accumulation and all elementwise math are f32.
    """
    s = pl.program_id(1)

    @pl.when(s == 0)
    def _():
        sum_ref[...] = jnp.zeros_like(sum_ref)
        cnt_ref[...] = jnp.zeros_like(cnt_ref)

    m = mask_ref[...]                                   # (bb, ts, 1) f32
    e = emb_ref[...].astype(jnp.float32)                # (bb, ts, H) f32
    sum_ref[...] += jnp.sum(e * m, axis=1)              # (bb, H)
    cnt_ref[...] += jnp.sum(m, axis=1)                  # (bb, 1)

    @pl.when(s == pl.num_programs(1) - 1)
    def _():
        pooled = sum_ref[...] / jnp.maximum(cnt_ref[...], 1.0)      # (bb, H)

        # Simulated-backbone pooler dense + tanh (fused).
        cls = jnp.tanh(
            jnp.dot(pooled.astype(jnp.bfloat16), wp_ref[...],
                    preferred_element_type=jnp.float32) + bp_ref[...])

        # fc1 + ReLU. Dropout(p=0.1) is identity at inference.
        h = jnp.dot(cls.astype(jnp.bfloat16), w1_ref[...],
                    preferred_element_type=jnp.float32) + b1_ref[...]
        h = jnp.maximum(h, 0.0)
        # TODO(synk): training-mode stochastic dropout would need
        # pltpu.prng_seed / pltpu.prng_random_bits here.

        # fc2 into a lane-dense (bb, 128) padded logits tile (cols >= 2 = pad).
        logits = jnp.dot(h.astype(jnp.bfloat16), w2_ref[...],
                         preferred_element_type=jnp.float32) + b2_ref[...]

        # LogSoftmax over the 2 real classes (single-exp LSE).
        l0 = logits[:, 0:1]
        l1 = logits[:, 1:2]
        mx = jnp.maximum(l0, l1)
        lse = mx + jnp.log(1.0 + jnp.exp(-jnp.abs(l0 - l1)))
        out_ref[...] = logits - lse                                  # (bb, 128)


def bert_arch_forward(emb_bf16, mask, wp_bf16, bp, w1_bf16, b1, w2_pad_bf16,
                      b2_pad, *, block_b=256, block_s=16):
    """Fused (masked-mean pool + pooler dense + classification head) kernel.

    emb_bf16: (B, S, 768) bf16 token embeddings (simulated backbone output).
    mask:     (B, S) attention mask.
    Returns (B, 2) f32 log-probabilities (matches BERT_Arch.forward output).
    """
    B, S, h = emb_bf16.shape
    assert h == H

    # Batch tile: multiple of 16 (bf16 sublane packing).
    bb = _round_up(min(block_b, B), 16)
    if bb >= B and B >= 256:
        # v7x megacore: make sure the batch grid has >= 2 "parallel" steps.
        bb = _round_up(-(-B // 2), 16)
    ts = _round_up(min(block_s, S), 16)

    B_pad = _round_up(B, bb)
    S_pad = _round_up(S, ts)

    mask3 = mask.astype(jnp.float32).reshape(B, S, 1)
    if (B_pad, S_pad) != (B, S):
        emb_bf16 = jnp.pad(emb_bf16, ((0, B_pad - B), (0, S_pad - S), (0, 0)))
        mask3 = jnp.pad(mask3, ((0, B_pad - B), (0, S_pad - S), (0, 0)))

    grid = (B_pad // bb, S_pad // ts)

    # Advisory cost estimate for XLA's scheduler around the custom call.
    flops = 2 * B_pad * S_pad * H + 2 * B_pad * (H * H + H * F1 + F1 * C_PAD)
    bytes_accessed = (B_pad * S_pad * H * 2            # emb (bf16)
                      + B_pad * S_pad * 4              # mask (f32)
                      + (H * H + H * F1 + F1 * C_PAD) * 2   # bf16 weights
                      + (H + F1 + C_PAD) * 4           # f32 biases
                      + B_pad * C_PAD * 4)             # output tile
    cost = pl.CostEstimate(flops=flops,
                           transcendentals=B_pad * (H + 4),
                           bytes_accessed=bytes_accessed)

    out = pl.pallas_call(
        fused_bert_arch_kernel,
        out_shape=jax.ShapeDtypeStruct((B_pad, C_PAD), jnp.float32),
        grid_spec=pltpu.PrefetchScalarGridSpec(
            num_scalar_prefetch=0,
            grid=grid,
            in_specs=[
                pl.BlockSpec((bb, ts, H), lambda i, s: (i, s, 0)),   # emb
                pl.BlockSpec((bb, ts, 1), lambda i, s: (i, s, 0)),   # mask
                pl.BlockSpec((H, H), lambda i, s: (0, 0)),           # w_pool bf16
                pl.BlockSpec((1, H), lambda i, s: (0, 0)),           # b_pool f32
                pl.BlockSpec((H, F1), lambda i, s: (0, 0)),          # fc1 W bf16
                pl.BlockSpec((1, F1), lambda i, s: (0, 0)),          # fc1 b f32
                pl.BlockSpec((F1, C_PAD), lambda i, s: (0, 0)),      # fc2 W pad bf16
                pl.BlockSpec((1, C_PAD), lambda i, s: (0, 0)),       # fc2 b pad f32
            ],
            out_specs=pl.BlockSpec((bb, C_PAD), lambda i, s: (i, 0)),
            scratch_shapes=[pltpu.VMEM((bb, H), jnp.float32),   # pooled sum
                            pltpu.VMEM((bb, 1), jnp.float32)],  # token count
        ),
        compiler_params=pltpu.CompilerParams(
            dimension_semantics=("parallel", "arbitrary"),
            vmem_limit_bytes=64 * 1024 * 1024),
        cost_estimate=cost,
    )(emb_bf16, mask3, wp_bf16, bp, w1_bf16, b1, w2_pad_bf16, b2_pad)

    return out[:B, :C]


if __name__ == "__main__":
    key = jax.random.PRNGKey(0)
    k_emb, k_wp, k_bp, k_w1, k_b1, k_w2, k_b2, k_ids = jax.random.split(key, 8)

    B, S, VOCAB = 8, 16, 1000

    # Deterministic synthetic parameters (f32 masters).
    emb_table = jax.random.normal(k_emb, (VOCAB, H), jnp.float32) * 0.02
    w_pool = jax.random.normal(k_wp, (H, H), jnp.float32) * 0.02
    b_pool = jax.random.normal(k_bp, (H,), jnp.float32) * 0.02
    w1 = jax.random.normal(k_w1, (H, F1), jnp.float32) * 0.02     # fc1 (in,out)
    b1 = jax.random.normal(k_b1, (F1,), jnp.float32) * 0.02
    w2 = jax.random.normal(k_w2, (F1, C), jnp.float32) * 0.02     # fc2 (in,out)
    b2 = jax.random.normal(k_b2, (C,), jnp.float32) * 0.02

    # Inputs: token ids + attention mask.
    sent_id = jax.random.randint(k_ids, (B, S), 0, VOCAB, dtype=jnp.int32)
    mask = jnp.ones((B, S), jnp.int32)

    # Simulated `bert` glue: embedding lookup stays in plain JAX (gather has no
    # clean Pallas win); masked-mean pooling + pooler dense + tanh + head are
    # fused into the Pallas kernel.
    emb_bf16 = emb_table[sent_id].astype(jnp.bfloat16)            # (B, S, 768)

    # bf16 storage format for weights (halves dominant weight DMA); biases f32.
    wp_bf16 = w_pool.astype(jnp.bfloat16)
    w1_bf16 = w1.astype(jnp.bfloat16)
    w2_pad_bf16 = (jnp.zeros((F1, C_PAD), jnp.float32).at[:, :C].set(w2)
                   .astype(jnp.bfloat16))
    bp = b_pool.reshape(1, H)
    b1r = b1.reshape(1, F1)
    b2_pad = jnp.zeros((1, C_PAD), jnp.float32).at[:, :C].set(b2.reshape(1, C))

    out = bert_arch_forward(emb_bf16, mask, wp_bf16, bp, w1_bf16, b1r,
                            w2_pad_bf16, b2_pad)
    out = jax.block_until_ready(out)

    # Pure-JAX reference matching the kernel's rounding exactly (bf16 emb,
    # bf16-rounded MXU inputs, f32 accumulation, bf16 weights upcast to f32).
    embf = emb_bf16.astype(jnp.float32)
    mf = mask.astype(jnp.float32)[..., None]
    pooled = (embf * mf).sum(axis=1) / jnp.maximum(mf.sum(axis=1), 1.0)
    cls_ref = jnp.tanh(pooled.astype(jnp.bfloat16).astype(jnp.float32)
                       @ wp_bf16.astype(jnp.float32) + bp)
    h_ref = jnp.maximum(cls_ref.astype(jnp.bfloat16).astype(jnp.float32)
                        @ w1_bf16.astype(jnp.float32) + b1r, 0.0)
    logits_ref = (h_ref.astype(jnp.bfloat16).astype(jnp.float32)
                  @ w2_pad_bf16.astype(jnp.float32)[:, :C] + b2.reshape(1, C))
    ref = jax.nn.log_softmax(logits_ref, axis=1)

    assert out.shape == (B, C)
    max_err = float(jnp.max(jnp.abs(out - ref)))
    assert jnp.allclose(out, ref, atol=1e-2, rtol=1e-2), max_err
    # log-softmax rows exponentiate to probabilities summing to 1.
    assert jnp.allclose(jnp.exp(out).sum(axis=1), 1.0, atol=1e-5)

    print("KERNEL_OK")
</pallas_src>

<mosaic_0001>
module attributes {stable_mosaic.version = 11 : i64} {
  func.func @fused_bert_arch_kernel(%arg0: i32, %arg1: i32, %arg2: memref<16x16x768xbf16, #tpu.memory_space<vmem>>, %arg3: memref<16x16x1xf32, #tpu.memory_space<vmem>>, %arg4: memref<768x768xbf16, #tpu.memory_space<vmem>>, %arg5: memref<1x768xf32, #tpu.memory_space<vmem>>, %arg6: memref<768x512xbf16, #tpu.memory_space<vmem>>, %arg7: memref<1x512xf32, #tpu.memory_space<vmem>>, %arg8: memref<512x128xbf16, #tpu.memory_space<vmem>>, %arg9: memref<1x128xf32, #tpu.memory_space<vmem>>, %arg10: memref<16x128xf32, #tpu.memory_space<vmem>>, %arg11: memref<16x768xf32, #tpu.memory_space<vmem>>, %arg12: memref<16x1xf32, #tpu.memory_space<vmem>>) attributes {dimension_semantics = [#tpu.dimension_semantics<parallel>, #tpu.dimension_semantics<arbitrary>], iteration_bounds = array<i64: 1, 1>, scalar_prefetch = 0 : i64, scratch_operands = 2 : i64, tpu.core_type = #tpu.core_type<tc>, window_params = [{transform_indices = @transform_0, window_bounds = array<i64: 16, 16, 768>}, {transform_indices = @transform_1, window_bounds = array<i64: 16, 16, 1>}, {pipeline_mode = #tpu.pipeline_mode<synchronous>, transform_indices = @transform_2, window_bounds = array<i64: 768, 768>}, {pipeline_mode = #tpu.pipeline_mode<synchronous>, transform_indices = @transform_3, window_bounds = array<i64: 1, 768>}, {pipeline_mode = #tpu.pipeline_mode<synchronous>, transform_indices = @transform_4, window_bounds = array<i64: 768, 512>}, {pipeline_mode = #tpu.pipeline_mode<synchronous>, transform_indices = @transform_5, window_bounds = array<i64: 1, 512>}, {pipeline_mode = #tpu.pipeline_mode<synchronous>, transform_indices = @transform_6, window_bounds = array<i64: 512, 128>}, {pipeline_mode = #tpu.pipeline_mode<synchronous>, transform_indices = @transform_7, window_bounds = array<i64: 1, 128>}, {transform_indices = @transform_8, window_bounds = array<i64: 16, 128>}]} {
    %c0_i32 = arith.constant 0 : i32
    %0 = arith.cmpi eq, %arg1, %c0_i32 : i32
    %1 = arith.extui %0 : i1 to i32
    %c0_i32_0 = arith.constant 0 : i32
    %2 = arith.cmpi ne, %1, %c0_i32_0 : i32
    scf.if %2 {
      %cst_17 = arith.constant 0.000000e+00 : f32
      %19 = vector.broadcast %cst_17 : f32 to vector<16x768xf32>
      %c0_18 = arith.constant 0 : index
      %c0_19 = arith.constant 0 : index
      %20 = vector.load %arg11[%c0_18, %c0_19] : memref<16x768xf32, #tpu.memory_space<vmem>>, vector<16x768xf32>
      tpu.vector_store %arg11[%c0_18, %c0_19], %19 {strides = array<i32>} : memref<16x768xf32, #tpu.memory_space<vmem>>, vector<16x768xf32>,
      %cst_20 = arith.constant 0.000000e+00 : f32
      %21 = vector.broadcast %cst_20 : f32 to vector<16x1xf32>
      %c0_21 = arith.constant 0 : index
      %c0_22 = arith.constant 0 : index
      %22 = vector.load %arg12[%c0_21, %c0_22] : memref<16x1xf32, #tpu.memory_space<vmem>>, vector<16x1xf32>
      tpu.vector_store %arg12[%c0_21, %c0_22], %21 {strides = array<i32>} : memref<16x1xf32, #tpu.memory_space<vmem>>, vector<16x1xf32>,
    } else {
    }
    %c0 = arith.constant 0 : index
    %c0_1 = arith.constant 0 : index
    %c0_2 = arith.constant 0 : index
    %3 = vector.load %arg3[%c0, %c0_1, %c0_2] : memref<16x16x1xf32, #tpu.memory_space<vmem>>, vector<16x16x1xf32>
    %c0_3 = arith.constant 0 : index
    %c0_4 = arith.constant 0 : index
    %c0_5 = arith.constant 0 : index
    %4 = vector.load %arg2[%c0_3, %c0_4, %c0_5] : memref<16x16x768xbf16, #tpu.memory_space<vmem>>, vector<16x16x768xbf16>
    %5 = arith.extf %4 : vector<16x16x768xbf16> to vector<16x16x768xf32>
    %c0_6 = arith.constant 0 : index
    %c0_7 = arith.constant 0 : index
    %6 = vector.load %arg11[%c0_6, %c0_7] : memref<16x768xf32, #tpu.memory_space<vmem>>, vector<16x768xf32>
    %7 = vector.broadcast %3 : vector<16x16x1xf32> to vector<16x16x768xf32>
    %8 = arith.mulf %5, %7 : vector<16x16x768xf32>
    %cst = arith.constant dense<0.000000e+00> : vector<16x768xf32>
    %9 = vector.multi_reduction <add>, %8, %cst [1] : vector<16x16x768xf32> to vector<16x768xf32>
    %10 = arith.addf %6, %9 : vector<16x768xf32>
    %c0_8 = arith.constant 0 : index
    %c0_9 = arith.constant 0 : index
    %11 = vector.load %arg11[%c0_8, %c0_9] : memref<16x768xf32, #tpu.memory_space<vmem>>, vector<16x768xf32>
    tpu.vector_store %arg11[%c0_8, %c0_9], %10 {strides = array<i32>} : memref<16x768xf32, #tpu.memory_space<vmem>>, vector<16x768xf32>,
    %c0_10 = arith.constant 0 : index
    %c0_11 = arith.constant 0 : index
    %12 = vector.load %arg12[%c0_10, %c0_11] : memref<16x1xf32, #tpu.memory_space<vmem>>, vector<16x1xf32>
    %cst_12 = arith.constant dense<0.000000e+00> : vector<16x1xf32>
    %13 = vector.multi_reduction <add>, %3, %cst_12 [1] : vector<16x16x1xf32> to vector<16x1xf32>
    %14 = arith.addf %12, %13 : vector<16x1xf32>
    %c0_13 = arith.constant 0 : index
    %c0_14 = arith.constant 0 : index
    %15 = vector.load %arg12[%c0_13, %c0_14] : memref<16x1xf32, #tpu.memory_space<vmem>>, vector<16x1xf32>
    tpu.vector_store %arg12[%c0_13, %c0_14], %14 {strides = array<i32>} : memref<16x1xf32, #tpu.memory_space<vmem>>, vector<16x1xf32>,
    %c0_i32_15 = arith.constant 0 : i32
    %16 = arith.cmpi eq, %arg1, %c0_i32_15 : i32
    %17 = arith.extui %16 : i1 to i32
    %c0_i32_16 = arith.constant 0 : i32
    %18 = arith.cmpi ne, %17, %c0_i32_16 : i32
    scf.if %18 {
      %c0_17 = arith.constant 0 : index
      %c0_18 = arith.constant 0 : index
      %19 = vector.load %arg11[%c0_17, %c0_18] : memref<16x768xf32, #tpu.memory_space<vmem>>, vector<16x768xf32>
      %c0_19 = arith.constant 0 : index
      %c0_20 = arith.constant 0 : index
      %20 = vector.load %arg12[%c0_19, %c0_20] : memref<16x1xf32, #tpu.memory_space<vmem>>, vector<16x1xf32>
      %cst_21 = arith.constant 1.000000e+00 : f32
      %21 = vector.broadcast %cst_21 : f32 to vector<16x1xf32>
      %22 = arith.maximumf %20, %21 : vector<16x1xf32>
      %23 = vector.broadcast %22 : vector<16x1xf32> to vector<16x768xf32>
      %24 = arith.divf %19, %23 : vector<16x768xf32>
      %25 = arith.truncf %24 : vector<16x768xf32> to vector<16x768xbf16>
      %c0_22 = arith.constant 0 : index
      %c0_23 = arith.constant 0 : index
      %26 = vector.load %arg4[%c0_22, %c0_23] : memref<768x768xbf16, #tpu.memory_space<vmem>>, vector<768x768xbf16>
      %cst_24 = arith.constant dense<0.000000e+00> : vector<16x768xf32>
      %27 = tpu.matmul %25, %26, %cst_24 {dimension_numbers = #tpu.dot_dimension_numbers<[1], [0], [0], [1], [0, 0, 1, 1], [], []>} : vector<16x768xbf16>, vector<768x768xbf16>, vector<16x768xf32> -> vector<16x768xf32>
      %c0_25 = arith.constant 0 : index
      %c0_26 = arith.constant 0 : index
      %28 = vector.load %arg5[%c0_25, %c0_26] : memref<1x768xf32, #tpu.memory_space<vmem>>, vector<1x768xf32>
      %29 = vector.broadcast %28 : vector<1x768xf32> to vector<16x768xf32>
      %30 = arith.addf %27, %29 : vector<16x768xf32>
      %31 = math.tanh %30 : vector<16x768xf32>
      %32 = arith.truncf %31 : vector<16x768xf32> to vector<16x768xbf16>
      %c0_27 = arith.constant 0 : index
      %c0_28 = arith.constant 0 : index
      %33 = vector.load %arg6[%c0_27, %c0_28] : memref<768x512xbf16, #tpu.memory_space<vmem>>, vector<768x512xbf16>
      %cst_29 = arith.constant dense<0.000000e+00> : vector<16x512xf32>
      %34 = tpu.matmul %32, %33, %cst_29 {dimension_numbers = #tpu.dot_dimension_numbers<[1], [0], [0], [1], [0, 0, 1, 1], [], []>} : vector<16x768xbf16>, vector<768x512xbf16>, vector<16x512xf32> -> vector<16x512xf32>
      %c0_30 = arith.constant 0 : index
      %c0_31 = arith.constant 0 : index
      %35 = vector.load %arg7[%c0_30, %c0_31] : memref<1x512xf32, #tpu.memory_space<vmem>>, vector<1x512xf32>
      %36 = vector.broadcast %35 : vector<1x512xf32> to vector<16x512xf32>
      %37 = arith.addf %34, %36 : vector<16x512xf32>
      %cst_32 = arith.constant 0.000000e+00 : f32
      %38 = vector.broadcast %cst_32 : f32 to vector<16x512xf32>
      %39 = arith.maximumf %37, %38 : vector<16x512xf32>
      %40 = arith.truncf %39 : vector<16x512xf32> to vector<16x512xbf16>
      %c0_33 = arith.constant 0 : index
      %c0_34 = arith.constant 0 : index
      %41 = vector.load %arg8[%c0_33, %c0_34] : memref<512x128xbf16, #tpu.memory_space<vmem>>, vector<512x128xbf16>
      %cst_35 = arith.constant dense<0.000000e+00> : vector<16x128xf32>
      %42 = tpu.matmul %40, %41, %cst_35 {dimension_numbers = #tpu.dot_dimension_numbers<[1], [0], [0], [1], [0, 0, 1, 1], [], []>} : vector<16x512xbf16>, vector<512x128xbf16>, vector<16x128xf32> -> vector<16x128xf32>
      %c0_36 = arith.constant 0 : index
      %c0_37 = arith.constant 0 : index
      %43 = vector.load %arg9[%c0_36, %c0_37] : memref<1x128xf32, #tpu.memory_space<vmem>>, vector<1x128xf32>
      %44 = vector.broadcast %43 : vector<1x128xf32> to vector<16x128xf32>
      %45 = arith.addf %42, %44 : vector<16x128xf32>
      %46 = vector.extract_strided_slice %45 {offsets = [0, 0], sizes = [16, 1], strides = [1, 1]} : vector<16x128xf32> to vector<16x1xf32>
      %47 = vector.extract_strided_slice %45 {offsets = [0, 1], sizes = [16, 1], strides = [1, 1]} : vector<16x128xf32> to vector<16x1xf32>
      %48 = arith.maximumf %46, %47 : vector<16x1xf32>
      %49 = arith.subf %46, %47 : vector<16x1xf32>
      %50 = math.absf %49 : vector<16x1xf32>
      %cst_38 = arith.constant 0.000000e+00 : f32
      %51 = vector.broadcast %cst_38 : f32 to vector<16x1xf32>
      %52 = arith.subf %51, %50 : vector<16x1xf32>
      %53 = math.exp %52 : vector<16x1xf32>
      %cst_39 = arith.constant 1.000000e+00 : f32
      %54 = vector.broadcast %cst_39 : f32 to vector<16x1xf32>
      %55 = arith.addf %54, %53 : vector<16x1xf32>
      %56 = math.log %55 : vector<16x1xf32>
      %57 = arith.addf %48, %56 : vector<16x1xf32>
      %58 = vector.broadcast %57 : vector<16x1xf32> to vector<16x128xf32>
      %59 = arith.subf %45, %58 : vector<16x128xf32>
      %c0_40 = arith.constant 0 : index
      %c0_41 = arith.constant 0 : index
      %60 = vector.load %arg10[%c0_40, %c0_41] : memref<16x128xf32, #tpu.memory_space<vmem>>, vector<16x128xf32>
      tpu.vector_store %arg10[%c0_40, %c0_41], %59 {strides = array<i32>} : memref<16x128xf32, #tpu.memory_space<vmem>>, vector<16x128xf32>,
    } else {
    }
    return
  }
  func.func @transform_0(%arg0: i32, %arg1: i32) -> (i32, i32, i32) {
    %c0_i32 = arith.constant 0 : i32
    %c0_i32_0 = arith.constant 0 : i32
    return %arg0, %arg1, %c0_i32 : i32, i32, i32
  }
  func.func @transform_1(%arg0: i32, %arg1: i32) -> (i32, i32, i32) {
    %c0_i32 = arith.constant 0 : i32
    %c0_i32_0 = arith.constant 0 : i32
    return %arg0, %arg1, %c0_i32 : i32, i32, i32
  }
  func.func @transform_2(%arg0: i32, %arg1: i32) -> (i32, i32) {
    %c0_i32 = arith.constant 0 : i32
    %c0_i32_0 = arith.constant 0 : i32
    %c0_i32_1 = arith.constant 0 : i32
    return %c0_i32, %c0_i32_0 : i32, i32
  }
  func.func @transform_3(%arg0: i32, %arg1: i32) -> (i32, i32) {
    %c0_i32 = arith.constant 0 : i32
    %c0_i32_0 = arith.constant 0 : i32
    %c0_i32_1 = arith.constant 0 : i32
    return %c0_i32, %c0_i32_0 : i32, i32
  }
  func.func @transform_4(%arg0: i32, %arg1: i32) -> (i32, i32) {
    %c0_i32 = arith.constant 0 : i32
    %c0_i32_0 = arith.constant 0 : i32
    %c0_i32_1 = arith.constant 0 : i32
    return %c0_i32, %c0_i32_0 : i32, i32
  }
  func.func @transform_5(%arg0: i32, %arg1: i32) -> (i32, i32) {
    %c0_i32 = arith.constant 0 : i32
    %c0_i32_0 = arith.constant 0 : i32
    %c0_i32_1 = arith.constant 0 : i32
    return %c0_i32, %c0_i32_0 : i32, i32
  }
  func.func @transform_6(%arg0: i32, %arg1: i32) -> (i32, i32) {
    %c0_i32 = arith.constant 0 : i32
    %c0_i32_0 = arith.constant 0 : i32
    %c0_i32_1 = arith.constant 0 : i32
    return %c0_i32, %c0_i32_0 : i32, i32
  }
  func.func @transform_7(%arg0: i32, %arg1: i32) -> (i32, i32) {
    %c0_i32 = arith.constant 0 : i32
    %c0_i32_0 = arith.constant 0 : i32
    %c0_i32_1 = arith.constant 0 : i32
    return %c0_i32, %c0_i32_0 : i32, i32
  }
  func.func @transform_8(%arg0: i32, %arg1: i32) -> (i32, i32) {
    %c0_i32 = arith.constant 0 : i32
    %c0_i32_0 = arith.constant 0 : i32
    return %arg0, %c0_i32 : i32, i32
  }
}

</mosaic_0001>

<llo_original>
// kernel: tpu_custom_call.1
$region0: #{tpu_custom_call.1}
  #allocation0 [shape = 'u32[]', space=smem, size = 0x4, offset = 0x4, fixed_abs, tag = 'smem constant byte address 0x4 - core index']
  #allocation1 [shape = 'u32[144,128]{1,0:T(1,128)}', space=vmem, size = 0x12000, scoped, tag = 'internal scratch']
  #allocation2 [shape = 'f32[16,768]{1,0:T(8,128)}', space=vmem, size = 0xc000, scoped, tag = 'scratch operand']
  #allocation3 [shape = 'f32[16,1]{1,0:T(8,128)}', space=vmem, size = 0x2000, scoped, tag = 'scratch operand']
  %s0 = inlined_call_operand.hbm [shape: bf16[16,16,768], index: 0, kind: input, shape index: {}]
  %s1 = inlined_call_operand.hbm [shape: f32[16,16,1], index: 1, kind: input, shape index: {}]
  %s2 = inlined_call_operand.hbm [shape: bf16[768,768], index: 2, kind: input, shape index: {}]
  %s3 = inlined_call_operand.hbm [shape: f32[1,768], index: 3, kind: input, shape index: {}]
  %s4 = inlined_call_operand.hbm [shape: bf16[768,512], index: 4, kind: input, shape index: {}]
  %s5 = inlined_call_operand.hbm [shape: f32[1,512], index: 5, kind: input, shape index: {}]
  %s6 = inlined_call_operand.hbm [shape: bf16[512,128], index: 6, kind: input, shape index: {}]
  %s7 = inlined_call_operand.hbm [shape: f32[1,128], index: 7, kind: input, shape index: {}]
  %s8 = inlined_call_operand.hbm [shape: f32[16,128], index: 8, kind: output, shape index: {}]
  %s9 = sld [smem:[#allocation0]]
  $region82: #{tpu_custom_call.1} parent=0
    _
  %s11 = ssub.s32 1, %s9
  %s12 = scalar_select 0, %s11, %s9
  $region1: #{tpu_custom_call.1} parent=0
    #allocation4 [shape = 'u8[393216]{0}', space=vmem, size = 0x60000, scoped, tag = 'input window, operand 0, single buffered']
    #allocation5 [shape = 's32[1]{0}', space=sflag, size = 0x4, scoped, tag = 'scoped memory for tpu_custom_call.1']
    #allocation6 [shape = 's32[1]{0}', space=sflag, size = 0x4, scoped, tag = 'scoped memory for tpu_custom_call.1']
    #allocation7 [shape = 'u8[131072]{0}', space=vmem, size = 0x20000, scoped, tag = 'input window, operand 1, single buffered']
    #allocation8 [shape = 's32[1]{0}', space=sflag, size = 0x4, scoped, tag = 'scoped memory for tpu_custom_call.1']
    #allocation9 [shape = 'u8[1179648]{0}', space=vmem, size = 0x120000, scoped, tag = 'input window, operand 2, single buffered']
    #allocation10 [shape = 'u8[3072]{0}', space=vmem, size = 0xc00, scoped, tag = 'input window, operand 3, single buffered']
    #allocation11 [shape = 's32[1]{0}', space=sflag, size = 0x4, scoped, tag = 'scoped memory for tpu_custom_call.1']
    #allocation12 [shape = 'u8[786432]{0}', space=vmem, size = 0xc0000, scoped, tag = 'input window, operand 4, single buffered']
    #allocation13 [shape = 'u8[2048]{0}', space=vmem, size = 0x800, scoped, tag = 'input window, operand 5, single buffered']
    #allocation14 [shape = 's32[1]{0}', space=sflag, size = 0x4, scoped, tag = 'scoped memory for tpu_custom_call.1']
    #allocation15 [shape = 'u8[131072]{0}', space=vmem, size = 0x20000, scoped, tag = 'input window, operand 6, single buffered']
    #allocation16 [shape = 'u8[512]{0}', space=vmem, size = 0x400, scoped, tag = 'input window, operand 7, single buffered']
    #allocation17 [shape = 's32[1]{0}', space=sflag, size = 0x4, scoped, tag = 'scoped memory for tpu_custom_call.1']
    #allocation18 [shape = 'u8[8192]{0}', space=vmem, size = 0x2000, scoped, tag = 'output window, operand 0, single buffered']
    %13 = vsyncpa [#allocation5], 0
    %14 = vsyncpa [#allocation8], 0
    %15 = vsyncpa [#allocation11], 0
    %16 = vsyncpa [#allocation14], 0
    %17 = vsyncpa [#allocation17], 0
    %18 = vsyncpa [#allocation6], 0
    // Predicated region
    $region2: #{tpu_custom_call.1} parent=1 // pred_check
      _
    $region3: #{tpu_custom_call.1} parent=1 // pred_check_branch
      %20 = sbr.rel (0) target = $region5
    $region4: #{tpu_custom_call.1} parent=1 // pred_region
      %s22 = ssub.s32 12288, 12288
      %23 = vsyncadd [#allocation5], %s22
      %s24 = sshll.u32 [#allocation4], 4
      %s25 = int_to_ptr.vmem [resolvable:$true] %s24
      %30 = dma.hbm_to_vmem [thread:$0]  %s0, 12288, %s25, [#allocation5], 384, 384, 24
    $region5: #{tpu_custom_call.1} parent=1 // pred_fallthru
      _
    // Predicated region
    $region6: #{tpu_custom_call.1} parent=1 // pred_check
      _
    $region7: #{tpu_custom_call.1} parent=1 // pred_check_branch
      %32 = sbr.rel (0) target = $region9
    $region8: #{tpu_custom_call.1} parent=1 // pred_region
      %s34 = ssub.s32 4096, 4096
      %35 = vsyncadd [#allocation8], %s34
      %s36 = sshll.u32 [#allocation7], 4
      %s37 = int_to_ptr.vmem [resolvable:$true] %s36
      %42 = dma.hbm_to_vmem [thread:$0]  %s1, 4096, %s37, [#allocation8], 128, 128, 8
    $region9: #{tpu_custom_call.1} parent=1 // pred_fallthru
      _
    // Predicated region
    $region10: #{tpu_custom_call.1} parent=1 // pred_check
      _
    $region11: #{tpu_custom_call.1} parent=1 // pred_check_branch
      %44 = sbr.rel (0) target = $region13
    $region12: #{tpu_custom_call.1} parent=1 // pred_region
      %s46 = ssub.s32 36864, 36864
      %47 = vsyncadd [#allocation8], %s46
      %s48 = sshll.u32 [#allocation9], 4
      %s49 = int_to_ptr.vmem [resolvable:$true] %s48
      %54 = dma.hbm_to_vmem [thread:$0]  %s2, 36864, %s49, [#allocation8], 384, 384, 24
    $region13: #{tpu_custom_call.1} parent=1 // pred_fallthru
      _
    // Predicated region
    $region14: #{tpu_custom_call.1} parent=1 // pred_check
      _
    $region15: #{tpu_custom_call.1} parent=1 // pred_check_branch
      %56 = sbr.rel (0) target = $region17
    $region16: #{tpu_custom_call.1} parent=1 // pred_region
      %s58 = ssub.s32 96, 96
      %59 = vsyncadd [#allocation11], %s58
      %s61 = sshll.u32 [#allocation10], 4
      %s62 = int_to_ptr.vmem [resolvable:$true] %s61
      %64 = dma.hbm_to_vmem [thread:$0]  %s3, 96, %s62, [#allocation11]
    $region17: #{tpu_custom_call.1} parent=1 // pred_fallthru
      _
    // Predicated region
    $region18: #{tpu_custom_call.1} parent=1 // pred_check
      _
    $region19: #{tpu_custom_call.1} parent=1 // pred_check_branch
      %66 = sbr.rel (0) target = $region21
    $region20: #{tpu_custom_call.1} parent=1 // pred_region
      %s68 = ssub.s32 24576, 24576
      %69 = vsyncadd [#allocation11], %s68
      %s70 = sshll.u32 [#allocation12], 4
      %s71 = int_to_ptr.vmem [resolvable:$true] %s70
      %76 = dma.hbm_to_vmem [thread:$0]  %s4, 24576, %s71, [#allocation11], 256, 256, 16
    $region21: #{tpu_custom_call.1} parent=1 // pred_fallthru
      _
    // Predicated region
    $region22: #{tpu_custom_call.1} parent=1 // pred_check
      _
    $region23: #{tpu_custom_call.1} parent=1 // pred_check_branch
      %78 = sbr.rel (0) target = $region25
    $region24: #{tpu_custom_call.1} parent=1 // pred_region
      %s80 = ssub.s32 64, 64
      %81 = vsyncadd [#allocation14], %s80
      %s83 = sshll.u32 [#allocation13], 4
      %s84 = int_to_ptr.vmem [resolvable:$true] %s83
      %86 = dma.hbm_to_vmem [thread:$0]  %s5, 64, %s84, [#allocation14]
    $region25: #{tpu_custom_call.1} parent=1 // pred_fallthru
      _
    // Predicated region
    $region26: #{tpu_custom_call.1} parent=1 // pred_check
      _
    $region27: #{tpu_custom_call.1} parent=1 // pred_check_branch
      %88 = sbr.rel (0) target = $region29
    $region28: #{tpu_custom_call.1} parent=1 // pred_region
      %s90 = ssub.s32 4096, 4096
      %91 = vsyncadd [#allocation14], %s90
      %s92 = sshll.u32 [#allocation15], 4
      %s93 = int_to_ptr.vmem [resolvable:$true] %s92
      %98 = dma.hbm_to_vmem [thread:$0]  %s6, 4096, %s93, [#allocation14], 64, 64, 4
    $region29: #{tpu_custom_call.1} parent=1 // pred_fallthru
      _
    // Predicated region
    $region30: #{tpu_custom_call.1} parent=1 // pred_check
      _
    $region31: #{tpu_custom_call.1} parent=1 // pred_check_branch
      %100 = sbr.rel (0) target = $region33
    $region32: #{tpu_custom_call.1} parent=1 // pred_region
      %s102 = ssub.s32 16, 16
      %103 = vsyncadd [#allocation17], %s102
      %s105 = sshll.u32 [#allocation16], 4
      %s106 = int_to_ptr.vmem [resolvable:$true] %s105
      %108 = dma.hbm_to_vmem [thread:$0]  %s7, 16, %s106, [#allocation17]
    $region33: #{tpu_custom_call.1} parent=1 // pred_fallthru
      _
    // Predicated region
    $region34: #{tpu_custom_call.1} parent=1 // pred_check
      _
    $region35: #{tpu_custom_call.1} parent=1 // pred_check_branch
      %110 = sbr.rel (0) target = $region37
    $region36: #{tpu_custom_call.1} parent=1 // pred_region
      %111 = dma.done [#allocation5], 12288
    $region37: #{tpu_custom_call.1} parent=1 // pred_fallthru
      _
    // Predicated region
    $region38: #{tpu_custom_call.1} parent=1 // pred_check
      _
    $region39: #{tpu_custom_call.1} parent=1 // pred_check_branch
      %113 = sbr.rel (0) target = $region41
    $region40: #{tpu_custom_call.1} parent=1 // pred_region
      %114 = dma.done [#allocation8], 4096
    $region41: #{tpu_custom_call.1} parent=1 // pred_fallthru
      _
    // Predicated region
    $region42: #{tpu_custom_call.1} parent=1 // pred_check
      _
    $region43: #{tpu_custom_call.1} parent=1 // pred_check_branch
      %116 = sbr.rel (0) target = $region45
    $region44: #{tpu_custom_call.1} parent=1 // pred_region
      %117 = dma.done [#allocation8], 36864
    $region45: #{tpu_custom_call.1} parent=1 // pred_fallthru
      _
    // Predicated region
    $region46: #{tpu_custom_call.1} parent=1 // pred_check
      _
    $region47: #{tpu_custom_call.1} parent=1 // pred_check_branch
      %119 = sbr.rel (0) target = $region49
    $region48: #{tpu_custom_call.1} parent=1 // pred_region
      %120 = dma.done [#allocation11], 96
    $region49: #{tpu_custom_call.1} parent=1 // pred_fallthru
      _
    // Predicated region
    $region50: #{tpu_custom_call.1} parent=1 // pred_check
      _
    $region51: #{tpu_custom_call.1} parent=1 // pred_check_branch
      %122 = sbr.rel (0) target = $region53
    $region52: #{tpu_custom_call.1} parent=1 // pred_region
      %123 = dma.done [#allocation11], 24576
    $region53: #{tpu_custom_call.1} parent=1 // pred_fallthru
      _
    // Predicated region
    $region54: #{tpu_custom_call.1} parent=1 // pred_check
      _
    $region55: #{tpu_custom_call.1} parent=1 // pred_check_branch
      %125 = sbr.rel (0) target = $region57
    $region56: #{tpu_custom_call.1} parent=1 // pred_region
      %126 = dma.done [#allocation14], 64
    $region57: #{tpu_custom_call.1} parent=1 // pred_fallthru
      _
    // Predicated region
    $region58: #{tpu_custom_call.1} parent=1 // pred_check
      _
    $region59: #{tpu_custom_call.1} parent=1 // pred_check_branch
      %128 = sbr.rel (0) target = $region61
    $region60: #{tpu_custom_call.1} parent=1 // pred_region
      %129 = dma.done [#allocation14], 4096
    $region61: #{tpu_custom_call.1} parent=1 // pred_fallthru
      _
    // Predicated region
    $region62: #{tpu_custom_call.1} parent=1 // pred_check
      _
    $region63: #{tpu_custom_call.1} parent=1 // pred_check_branch
      %131 = sbr.rel (0) target = $region65
    $region64: #{tpu_custom_call.1} parent=1 // pred_region
      %132 = dma.done [#allocation17], 16
    $region65: #{tpu_custom_call.1} parent=1 // pred_fallthru
      _
    %p134 = scmp.eq.s32.totalorder 0, 0
    // Predicated region
    $region66: #{tpu_custom_call.1} parent=1 // pred_check
      %p135 = pneg %p134
    $region67: #{tpu_custom_call.1} parent=1 // pred_check_branch
      %137 = sbr.rel (%p135) target = $region69
    $region68: #{tpu_custom_call.1} parent=1 // pred_region
      %138 = vst [vmem:[#allocation2] sm:$0xff] 0.0
      %139 = vst [vmem:[#allocation2 + $0x8] sm:$0xff] 0.0
      %140 = vst [vmem:[#allocation2 + $0x10] sm:$0xff] 0.0
      %141 = vst [vmem:[#allocation2 + $0x18] sm:$0xff] 0.0
      %142 = vst [vmem:[#allocation2 + $0x20] sm:$0xff] 0.0
      %143 = vst [vmem:[#allocation2 + $0x28] sm:$0xff] 0.0
      %144 = vst [vmem:[#allocation2 + $0x30] sm:$0xff] 0.0
      %145 = vst [vmem:[#allocation2 + $0x38] sm:$0xff] 0.0
      %146 = vst [vmem:[#allocation2 + $0x40] sm:$0xff] 0.0
      %147 = vst [vmem:[#allocation2 + $0x48] sm:$0xff] 0.0
      %148 = vst [vmem:[#allocation2 + $0x50] sm:$0xff] 0.0
      %149 = vst [vmem:[#allocation2 + $0x58] sm:$0xff] 0.0
      %vm150 = vcmask 7168
      %151 = vst.msk [vmem:[#allocation3] sm:$0xff] %vm150, 0.0
      %152 = vst.msk [vmem:[#allocation3 + $0x8] sm:$0xff] %vm150, 0.0
    $region69: #{tpu_custom_call.1} parent=1 // pred_fallthru
      _
    %v153 = vld [vmem:[#allocation7] sm:$0xff]
    %v154 = vld [vmem:[#allocation7 + $0x8] sm:$0xff]
    %v155 = vld [vmem:[#allocation7 + $0x10] sm:$0xff]
    %v156 = vld [vmem:[#allocation7 + $0x18] sm:$0xff]
    %v157 = vld [vmem:[#allocation7 + $0x20] sm:$0xff]
    %v158 = vld [vmem:[#allocation7 + $0x28] sm:$0xff]
    %v159 = vld [vmem:[#allocation7 + $0x30] sm:$0xff]
    %v160 = vld [vmem:[#allocation7 + $0x38] sm:$0xff]
    %v161 = vld [vmem:[#allocation7 + $0x40] sm:$0xff]
    %v162 = vld [vmem:[#allocation7 + $0x48] sm:$0xff]
    %v163 = vld [vmem:[#allocation7 + $0x50] sm:$0xff]
    %v164 = vld [vmem:[#allocation7 + $0x58] sm:$0xff]
    %v165 = vld [vmem:[#allocation7 + $0x60] sm:$0xff]
    %v166 = vld [vmem:[#allocation7 + $0x68] sm:$0xff]
    %v167 = vld [vmem:[#allocation7 + $0x70] sm:$0xff]
    %v168 = vld [vmem:[#allocation7 + $0x78] sm:$0xff]
    %v169 = vld [vmem:[#allocation7 + $0x80] sm:$0xff]
    %v170 = vld [vmem:[#allocation7 + $0x88] sm:$0xff]
    %v171 = vld [vmem:[#allocation7 + $0x90] sm:$0xff]
    %v172 = vld [vmem:[#allocation7 + $0x98] sm:$0xff]
    %v173 = vld [vmem:[#allocation7 + $0xa0] sm:$0xff]
    %v174 = vld [vmem:[#allocation7 + $0xa8] sm:$0xff]
    %v175 = vld [vmem:[#allocation7 + $0xb0] sm:$0xff]
    %v176 = vld [vmem:[#allocation7 + $0xb8] sm:$0xff]
    %v177 = vld [vmem:[#allocation7 + $0xc0] sm:$0xff]
    %v178 = vld [vmem:[#allocation7 + $0xc8] sm:$0xff]
    %v179 = vld [vmem:[#allocation7 + $0xd0] sm:$0xff]
    %v180 = vld [vmem:[#allocation7 + $0xd8] sm:$0xff]
    %v181 = vld [vmem:[#allocation7 + $0xe0] sm:$0xff]
    %v182 = vld [vmem:[#allocation7 + $0xe8] sm:$0xff]
    %v183 = vld [vmem:[#allocation7 + $0xf0] sm:$0xff]
    %v184 = vld [vmem:[#allocation7 + $0xf8] sm:$0xff]
    %v185 = vld [vmem:[#allocation4] sm:$0xff]
    %v186 = vld [vmem:[#allocation4 + $0x8] sm:$0xff]
    %v187 = vld [vmem:[#allocation4 + $0x10] sm:$0xff]
    %v188 = vld [vmem:[#allocation4 + $0x18] sm:$0xff]
    %v189 = vld [vmem:[#allocation4 + $0x20] sm:$0xff]
    %v190 = vld [vmem:[#allocation4 + $0x28] sm:$0xff]
    %v191 = vld [vmem:[#allocation4 + $0x30] sm:$0xff]
    %v192 = vld [vmem:[#allocation4 + $0x38] sm:$0xff]
    %v193 = vld [vmem:[#allocation4 + $0x40] sm:$0xff]
    %v194 = vld [vmem:[#allocation4 + $0x48] sm:$0xff]
    %v195 = vld [vmem:[#allocation4 + $0x50] sm:$0xff]
    %v196 = vld [vmem:[#allocation4 + $0x58] sm:$0xff]
    %v197 = vld [vmem:[#allocation4 + $0x60] sm:$0xff]
    %v198 = vld [vmem:[#allocation4 + $0x68] sm:$0xff]
    %v199 = vld [vmem:[#allocation4 + $0x70] sm:$0xff]
    %v200 = vld [vmem:[#allocation4 + $0x78] sm:$0xff]
    %v201 = vld [vmem:[#allocation4 + $0x80] sm:$0xff]
    %v202 = vld [vmem:[#allocation4 + $0x88] sm:$0xff]
    %v203 = vld [vmem:[#allocation4 + $0x90] sm:$0xff]
    %v204 = vld [vmem:[#allocation4 + $0x98] sm:$0xff]
    %v205 = vld [vmem:[#allocation4 + $0xa0] sm:$0xff]
    %v206 = vld [vmem:[#allocation4 + $0xa8] sm:$0xff]
    %v207 = vld [vmem:[#allocation4 + $0xb0] sm:$0xff]
    %v208 = vld [vmem:[#allocation4 + $0xb8] sm:$0xff]
    %v209 = vld [vmem:[#allocation4 + $0xc0] sm:$0xff]
    %v210 = vld [vmem:[#allocation4 + $0xc8] sm:$0xff]
    %v211 = vld [vmem:[#allocation4 + $0xd0] sm:$0xff]
    %v212 = vld [vmem:[#allocation4 + $0xd8] sm:$0xff]
    %v213 = vld [vmem:[#allocation4 + $0xe0] sm:$0xff]
    %v214 = vld [vmem:[#allocation4 + $0xe8] sm:$0xff]
    %v215 = vld [vmem:[#allocation4 + $0xf0] sm:$0xff]
    %v216 = vld [vmem:[#allocation4 + $0xf8] sm:$0xff]
    %v217 = vld [vmem:[#allocation4 + $0x100] sm:$0xff]
    %v218 = vld [vmem:[#allocation4 + $0x108] sm:$0xff]
    %v219 = vld [vmem:[#allocation4 + $0x110] sm:$0xff]
    %v220 = vld [vmem:[#allocation4 + $0x118] sm:$0xff]
    %v221 = vld [vmem:[#allocation4 + $0x120] sm:$0xff]
    %v222 = vld [vmem:[#allocation4 + $0x128] sm:$0xff]
    %v223 = vld [vmem:[#allocation4 + $0x130] sm:$0xff]
    %v224 = vld [vmem:[#allocation4 + $0x138] sm:$0xff]
    %v225 = vld [vmem:[#allocation4 + $0x140] sm:$0xff]
    %v226 = vld [vmem:[#allocation4 + $0x148] sm:$0xff]
    %v227 = vld [vmem:[#allocation4 + $0x150] sm:$0xff]
    %v228 = vld [vmem:[#allocation4 + $0x158] sm:$0xff]
    %v229 = vld [vmem:[#allocation4 + $0x160] sm:$0xff]
    %v230 = vld [vmem:[#allocation4 + $0x168] sm:$0xff]
    %v231 = vld [vmem:[#allocation4 + $0x170] sm:$0xff]
    %v232 = vld [vmem:[#allocation4 + $0x178] sm:$0xff]
    %v233 = vld [vmem:[#allocation4 + $0x180] sm:$0xff]
    %v234 = vld [vmem:[#allocation4 + $0x188] sm:$0xff]
    %v235 = vld [vmem:[#allocation4 + $0x190] sm:$0xff]
    %v236 = vld [vmem:[#allocation4 + $0x198] sm:$0xff]
    %v237 = vld [vmem:[#allocation4 + $0x1a0] sm:$0xff]
    %v238 = vld [vmem:[#allocation4 + $0x1a8] sm:$0xff]
    %v239 = vld [vmem:[#allocation4 + $0x1b0] sm:$0xff]
    %v240 = vld [vmem:[#allocation4 + $0x1b8] sm:$0xff]
    %v241 = vld [vmem:[#allocation4 + $0x1c0] sm:$0xff]
    %v242 = vld [vmem:[#allocation4 + $0x1c8] sm:$0xff]
    %v243 = vld [vmem:[#allocation4 + $0x1d0] sm:$0xff]
    %v244 = vld [vmem:[#allocation4 + $0x1d8] sm:$0xff]
    %v245 = vld [vmem:[#allocation4 + $0x1e0] sm:$0xff]
    %v246 = vld [vmem:[#allocation4 + $0x1e8] sm:$0xff]
    %v247 = vld [vmem:[#allocation4 + $0x1f0] sm:$0xff]
    %v248 = vld [vmem:[#allocation4 + $0x1f8] sm:$0xff]
    %v249 = vld [vmem:[#allocation4 + $0x200] sm:$0xff]
    %v250 = vld [vmem:[#allocation4 + $0x208] sm:$0xff]
    %v251 = vld [vmem:[#allocation4 + $0x210] sm:$0xff]
    %v252 = vld [vmem:[#allocation4 + $0x218] sm:$0xff]
    %v253 = vld [vmem:[#allocation4 + $0x220] sm:$0xff]
    %v254 = vld [vmem:[#allocation4 + $0x228] sm:$0xff]
    %v255 = vld [vmem:[#allocation4 + $0x230] sm:$0xff]
    %v256 = vld [vmem:[#allocation4 + $0x238] sm:$0xff]
    %v257 = vld [vmem:[#allocation4 + $0x240] sm:$0xff]
    %v258 = vld [vmem:[#allocation4 + $0x248] sm:$0xff]
    %v259 = vld [vmem:[#allocation4 + $0x250] sm:$0xff]
    %v260 = vld [vmem:[#allocation4 + $0x258] sm:$0xff]
    %v261 = vld [vmem:[#allocation4 + $0x260] sm:$0xff]
    %v262 = vld [vmem:[#allocation4 + $0x268] sm:$0xff]
    %v263 = vld [vmem:[#allocation4 + $0x270] sm:$0xff]
    %v264 = vld [vmem:[#allocation4 + $0x278] sm:$0xff]
    %v265 = vld [vmem:[#allocation4 + $0x280] sm:$0xff]
    %v266 = vld [vmem:[#allocation4 + $0x288] sm:$0xff]
    %v267 = vld [vmem:[#allocation4 + $0x290] sm:$0xff]
    %v268 = vld [vmem:[#allocation4 + $0x298] sm:$0xff]
    %v269 = vld [vmem:[#allocation4 + $0x2a0] sm:$0xff]
    %v270 = vld [vmem:[#allocation4 + $0x2a8] sm:$0xff]
    %v271 = vld [vmem:[#allocation4 + $0x2b0] sm:$0xff]
    %v272 = vld [vmem:[#allocation4 + $0x2b8] sm:$0xff]
    %v273 = vld [vmem:[#allocation4 + $0x2c0] sm:$0xff]
    %v274 = vld [vmem:[#allocation4 + $0x2c8] sm:$0xff]
    %v275 = vld [vmem:[#allocation4 + $0x2d0] sm:$0xff]
    %v276 = vld [vmem:[#allocation4 + $0x2d8] sm:$0xff]
    %v277 = vld [vmem:[#allocation4 + $0x2e0] sm:$0xff]
    %v278 = vld [vmem:[#allocation4 + $0x2e8] sm:$0xff]
    %v279 = vld [vmem:[#allocation4 + $0x2f0] sm:$0xff]
    %v280 = vld [vmem:[#allocation4 + $0x2f8] sm:$0xff]
    %v281 = vunpack.c.l.bf16 %v185
    %v282 = vunpack.c.h.bf16 %v185
    %v283 = vunpack.c.l.bf16 %v186
    %v284 = vunpack.c.h.bf16 %v186
    %v285 = vunpack.c.l.bf16 %v187
    %v286 = vunpack.c.h.bf16 %v187
    %v287 = vunpack.c.l.bf16 %v188
    %v288 = vunpack.c.h.bf16 %v188
    %v289 = vunpack.c.l.bf16 %v189
    %v290 = vunpack.c.h.bf16 %v189
    %v291 = vunpack.c.l.bf16 %v190
    %v292 = vunpack.c.h.bf16 %v190
    %v293 = vunpack.c.l.bf16 %v191
    %v294 = vunpack.c.h.bf16 %v191
    %v295 = vunpack.c.l.bf16 %v192
    %v296 = vunpack.c.h.bf16 %v192
    %v297 = vunpack.c.l.bf16 %v193
    %v298 = vunpack.c.h.bf16 %v193
    %v299 = vunpack.c.l.bf16 %v194
    %v300 = vunpack.c.h.bf16 %v194
    %v301 = vunpack.c.l.bf16 %v195
    %v302 = vunpack.c.h.bf16 %v195
    %v303 = vunpack.c.l.bf16 %v196
    %v304 = vunpack.c.h.bf16 %v196
    %v305 = vunpack.c.l.bf16 %v197
    %v306 = vunpack.c.h.bf16 %v197
    %v307 = vunpack.c.l.bf16 %v198
    %v308 = vunpack.c.h.bf16 %v198
    %v309 = vunpack.c.l.bf16 %v199
    %v310 = vunpack.c.h.bf16 %v199
    %v311 = vunpack.c.l.bf16 %v200
    %v312 = vunpack.c.h.bf16 %v200
    %v313 = vunpack.c.l.bf16 %v201
    %v314 = vunpack.c.h.bf16 %v201
    %v315 = vunpack.c.l.bf16 %v202
    %v316 = vunpack.c.h.bf16 %v202
    %v317 = vunpack.c.l.bf16 %v203
    %v318 = vunpack.c.h.bf16 %v203
    %v319 = vunpack.c.l.bf16 %v204
    %v320 = vunpack.c.h.bf16 %v204
    %v321 = vunpack.c.l.bf16 %v205
    %v322 = vunpack.c.h.bf16 %v205
    %v323 = vunpack.c.l.bf16 %v206
    %v324 = vunpack.c.h.bf16 %v206
    %v325 = vunpack.c.l.bf16 %v207
    %v326 = vunpack.c.h.bf16 %v207
    %v327 = vunpack.c.l.bf16 %v208
    %v328 = vunpack.c.h.bf16 %v208
    %v329 = vunpack.c.l.bf16 %v209
    %v330 = vunpack.c.h.bf16 %v209
    %v331 = vunpack.c.l.bf16 %v210
    %v332 = vunpack.c.h.bf16 %v210
    %v333 = vunpack.c.l.bf16 %v211
    %v334 = vunpack.c.h.bf16 %v211
    %v335 = vunpack.c.l.bf16 %v212
    %v336 = vunpack.c.h.bf16 %v212
    %v337 = vunpack.c.l.bf16 %v213
    %v338 = vunpack.c.h.bf16 %v213
    %v339 = vunpack.c.l.bf16 %v214
    %v340 = vunpack.c.h.bf16 %v214
    %v341 = vunpack.c.l.bf16 %v215
    %v342 = vunpack.c.h.bf16 %v215
    %v343 = vunpack.c.l.bf16 %v216
    %v344 = vunpack.c.h.bf16 %v216
    %v345 = vunpack.c.l.bf16 %v217
    %v346 = vunpack.c.h.bf16 %v217
    %v347 = vunpack.c.l.bf16 %v218
    %v348 = vunpack.c.h.bf16 %v218
    %v349 = vunpack.c.l.bf16 %v219
    %v350 = vunpack.c.h.bf16 %v219
    %v351 = vunpack.c.l.bf16 %v220
    %v352 = vunpack.c.h.bf16 %v220
    %v353 = vunpack.c.l.bf16 %v221
    %v354 = vunpack.c.h.bf16 %v221
    %v355 = vunpack.c.l.bf16 %v222
    %v356 = vunpack.c.h.bf16 %v222
    %v357 = vunpack.c.l.bf16 %v223
    %v358 = vunpack.c.h.bf16 %v223
    %v359 = vunpack.c.l.bf16 %v224
    %v360 = vunpack.c.h.bf16 %v224
    %v361 = vunpack.c.l.bf16 %v225
    %v362 = vunpack.c.h.bf16 %v225
    %v363 = vunpack.c.l.bf16 %v226
    %v364 = vunpack.c.h.bf16 %v226
    %v365 = vunpack.c.l.bf16 %v227
    %v366 = vunpack.c.h.bf16 %v227
    %v367 = vunpack.c.l.bf16 %v228
    %v368 = vunpack.c.h.bf16 %v228
    %v369 = vunpack.c.l.bf16 %v229
    %v370 = vunpack.c.h.bf16 %v229
    %v371 = vunpack.c.l.bf16 %v230
    %v372 = vunpack.c.h.bf16 %v230
    %v373 = vunpack.c.l.bf16 %v231
    %v374 = vunpack.c.h.bf16 %v231
    %v375 = vunpack.c.l.bf16 %v232
    %v376 = vunpack.c.h.bf16 %v232
    %v377 = vunpack.c.l.bf16 %v233
    %v378 = vunpack.c.h.bf16 %v233
    %v379 = vunpack.c.l.bf16 %v234
    %v380 = vunpack.c.h.bf16 %v234
    %v381 = vunpack.c.l.bf16 %v235
    %v382 = vunpack.c.h.bf16 %v235
    %v383 = vunpack.c.l.bf16 %v236
    %v384 = vunpack.c.h.bf16 %v236
    %v385 = vunpack.c.l.bf16 %v237
    %v386 = vunpack.c.h.bf16 %v237
    %v387 = vunpack.c.l.bf16 %v238
    %v388 = vunpack.c.h.bf16 %v238
    %v389 = vunpack.c.l.bf16 %v239
    %v390 = vunpack.c.h.bf16 %v239
    %v391 = vunpack.c.l.bf16 %v240
    %v392 = vunpack.c.h.bf16 %v240
    %v393 = vunpack.c.l.bf16 %v241
    %v394 = vunpack.c.h.bf16 %v241
    %v395 = vunpack.c.l.bf16 %v242
    %v396 = vunpack.c.h.bf16 %v242
    %v397 = vunpack.c.l.bf16 %v243
    %v398 = vunpack.c.h.bf16 %v243
    %v399 = vunpack.c.l.bf16 %v244
    %v400 = vunpack.c.h.bf16 %v244
    %v401 = vunpack.c.l.bf16 %v245
    %v402 = vunpack.c.h.bf16 %v245
    %v403 = vunpack.c.l.bf16 %v246
    %v404 = vunpack.c.h.bf16 %v246
    %v405 = vunpack.c.l.bf16 %v247
    %v406 = vunpack.c.h.bf16 %v247
    %v407 = vunpack.c.l.bf16 %v248
    %v408 = vunpack.c.h.bf16 %v248
    %v409 = vunpack.c.l.bf16 %v249
    %v410 = vunpack.c.h.bf16 %v249
    %v411 = vunpack.c.l.bf16 %v250
    %v412 = vunpack.c.h.bf16 %v250
    %v413 = vunpack.c.l.bf16 %v251
    %v414 = vunpack.c.h.bf16 %v251
    %v415 = vunpack.c.l.bf16 %v252
    %v416 = vunpack.c.h.bf16 %v252
    %v417 = vunpack.c.l.bf16 %v253
    %v418 = vunpack.c.h.bf16 %v253
    %v419 = vunpack.c.l.bf16 %v254
    %v420 = vunpack.c.h.bf16 %v254
    %v421 = vunpack.c.l.bf16 %v255
    %v422 = vunpack.c.h.bf16 %v255
    %v423 = vunpack.c.l.bf16 %v256
    %v424 = vunpack.c.h.bf16 %v256
    %v425 = vunpack.c.l.bf16 %v257
    %v426 = vunpack.c.h.bf16 %v257
    %v427 = vunpack.c.l.bf16 %v258
    %v428 = vunpack.c.h.bf16 %v258
    %v429 = vunpack.c.l.bf16 %v259
    %v430 = vunpack.c.h.bf16 %v259
    %v431 = vunpack.c.l.bf16 %v260
    %v432 = vunpack.c.h.bf16 %v260
    %v433 = vunpack.c.l.bf16 %v261
    %v434 = vunpack.c.h.bf16 %v261
    %v435 = vunpack.c.l.bf16 %v262
    %v436 = vunpack.c.h.bf16 %v262
    %v437 = vunpack.c.l.bf16 %v263
    %v438 = vunpack.c.h.bf16 %v263
    %v439 = vunpack.c.l.bf16 %v264
    %v440 = vunpack.c.h.bf16 %v264
    %v441 = vunpack.c.l.bf16 %v265
    %v442 = vunpack.c.h.bf16 %v265
    %v443 = vunpack.c.l.bf16 %v266
    %v444 = vunpack.c.h.bf16 %v266
    %v445 = vunpack.c.l.bf16 %v267
    %v446 = vunpack.c.h.bf16 %v267
    %v447 = vunpack.c.l.bf16 %v268
    %v448 = vunpack.c.h.bf16 %v268
    %v449 = vunpack.c.l.bf16 %v269
    %v450 = vunpack.c.h.bf16 %v269
    %v451 = vunpack.c.l.bf16 %v270
    %v452 = vunpack.c.h.bf16 %v270
    %v453 = vunpack.c.l.bf16 %v271
    %v454 = vunpack.c.h.bf16 %v271
    %v455 = vunpack.c.l.bf16 %v272
    %v456 = vunpack.c.h.bf16 %v272
    %v457 = vunpack.c.l.bf16 %v273
    %v458 = vunpack.c.h.bf16 %v273
    %v459 = vunpack.c.l.bf16 %v274
    %v460 = vunpack.c.h.bf16 %v274
    %v461 = vunpack.c.l.bf16 %v275
    %v462 = vunpack.c.h.bf16 %v275
    %v463 = vunpack.c.l.bf16 %v276
    %v464 = vunpack.c.h.bf16 %v276
    %v465 = vunpack.c.l.bf16 %v277
    %v466 = vunpack.c.h.bf16 %v277
    %v467 = vunpack.c.l.bf16 %v278
    %v468 = vunpack.c.h.bf16 %v278
    %v469 = vunpack.c.l.bf16 %v279
    %v470 = vunpack.c.h.bf16 %v279
    %v471 = vunpack.c.l.bf16 %v280
    %v472 = vunpack.c.h.bf16 %v280
    %v473 = vld [vmem:[#allocation2] sm:$0xff]
    %v474 = vld [vmem:[#allocation2 + $0x8] sm:$0xff]
    %v475 = vld [vmem:[#allocation2 + $0x10] sm:$0xff]
    %v476 = vld [vmem:[#allocation2 + $0x18] sm:$0xff]
    %v477 = vld [vmem:[#allocation2 + $0x20] sm:$0xff]
    %v478 = vld [vmem:[#allocation2 + $0x28] sm:$0xff]
    %v479 = vld [vmem:[#allocation2 + $0x30] sm:$0xff]
    %v480 = vld [vmem:[#allocation2 + $0x38] sm:$0xff]
    %v481 = vld [vmem:[#allocation2 + $0x40] sm:$0xff]
    %v482 = vld [vmem:[#allocation2 + $0x48] sm:$0xff]
    %v483 = vld [vmem:[#allocation2 + $0x50] sm:$0xff]
    %v484 = vld [vmem:[#allocation2 + $0x58] sm:$0xff]
    %486 = vset.pattern.permute.xlu0 0
    %487 = vperm.xlu0 %486, %v153
    %v488 = vpop.permute.xlu0 %487
    %491 = vset.pattern.permute.xlu0 0
    %492 = vperm.xlu0 %491, %v154
    %v493 = vpop.permute.xlu0 %492
    %496 = vset.pattern.permute.xlu0 0
    %497 = vperm.xlu0 %496, %v155
    %v498 = vpop.permute.xlu0 %497
    %501 = vset.pattern.permute.xlu0 0
    %502 = vperm.xlu0 %501, %v156
    %v503 = vpop.permute.xlu0 %502
    %506 = vset.pattern.permute.xlu0 0
    %507 = vperm.xlu0 %506, %v157
    %v508 = vpop.permute.xlu0 %507
    %511 = vset.pattern.permute.xlu0 0
    %512 = vperm.xlu0 %511, %v158
    %v513 = vpop.permute.xlu0 %512
    %516 = vset.pattern.permute.xlu0 0
    %517 = vperm.xlu0 %516, %v159
    %v518 = vpop.permute.xlu0 %517
    %521 = vset.pattern.permute.xlu0 0
    %522 = vperm.xlu0 %521, %v160
    %v523 = vpop.permute.xlu0 %522
    %526 = vset.pattern.permute.xlu0 0
    %527 = vperm.xlu0 %526, %v161
    %v528 = vpop.permute.xlu0 %527
    %531 = vset.pattern.permute.xlu0 0
    %532 = vperm.xlu0 %531, %v162
    %v533 = vpop.permute.xlu0 %532
    %536 = vset.pattern.permute.xlu0 0
    %537 = vperm.xlu0 %536, %v163
    %v538 = vpop.permute.xlu0 %537
    %541 = vset.pattern.permute.xlu0 0
    %542 = vperm.xlu0 %541, %v164
    %v543 = vpop.permute.xlu0 %542
    %546 = vset.pattern.permute.xlu0 0
    %547 = vperm.xlu0 %546, %v165
    %v548 = vpop.permute.xlu0 %547
    %551 = vset.pattern.permute.xlu0 0
    %552 = vperm.xlu0 %551, %v166
    %v553 = vpop.permute.xlu0 %552
    %556 = vset.pattern.permute.xlu0 0
    %557 = vperm.xlu0 %556, %v167
    %v558 = vpop.permute.xlu0 %557
    %561 = vset.pattern.permute.xlu0 0
    %562 = vperm.xlu0 %561, %v168
    %v563 = vpop.permute.xlu0 %562
    %566 = vset.pattern.permute.xlu0 0
    %567 = vperm.xlu0 %566, %v169
    %v568 = vpop.permute.xlu0 %567
    %571 = vset.pattern.permute.xlu0 0
    %572 = vperm.xlu0 %571, %v170
    %v573 = vpop.permute.xlu0 %572
    %576 = vset.pattern.permute.xlu0 0
    %577 = vperm.xlu0 %576, %v171
    %v578 = vpop.permute.xlu0 %577
    %581 = vset.pattern.permute.xlu0 0
    %582 = vperm.xlu0 %581, %v172
    %v583 = vpop.permute.xlu0 %582
    %586 = vset.pattern.permute.xlu0 0
    %587 = vperm.xlu0 %586, %v173
    %v588 = vpop.permute.xlu0 %587
    %591 = vset.pattern.permute.xlu0 0
    %592 = vperm.xlu0 %591, %v174
    %v593 = vpop.permute.xlu0 %592
    %596 = vset.pattern.permute.xlu0 0
    %597 = vperm.xlu0 %596, %v175
    %v598 = vpop.permute.xlu0 %597
    %601 = vset.pattern.permute.xlu0 0
    %602 = vperm.xlu0 %601, %v176
    %v603 = vpop.permute.xlu0 %602
    %606 = vset.pattern.permute.xlu0 0
    %607 = vperm.xlu0 %606, %v177
    %v608 = vpop.permute.xlu0 %607
    %611 = vset.pattern.permute.xlu0 0
    %612 = vperm.xlu0 %611, %v178
    %v613 = vpop.permute.xlu0 %612
    %616 = vset.pattern.permute.xlu0 0
    %617 = vperm.xlu0 %616, %v179
    %v618 = vpop.permute.xlu0 %617
    %621 = vset.pattern.permute.xlu0 0
    %622 = vperm.xlu0 %621, %v180
    %v623 = vpop.permute.xlu0 %622
    %626 = vset.pattern.permute.xlu0 0
    %627 = vperm.xlu0 %626, %v181
    %v628 = vpop.permute.xlu0 %627
    %631 = vset.pattern.permute.xlu0 0
    %632 = vperm.xlu0 %631, %v182
    %v633 = vpop.permute.xlu0 %632
    %636 = vset.pattern.permute.xlu0 0
    %637 = vperm.xlu0 %636, %v183
    %v638 = vpop.permute.xlu0 %637
    %641 = vset.pattern.permute.xlu0 0
    %642 = vperm.xlu0 %641, %v184
    %v643 = vpop.permute.xlu0 %642
    %v645 = vmul.f32 %v281, %v488
    %v646 = vmul.f32 %v282, %v488
    %v647 = vmul.f32 %v283, %v488
    %v648 = vmul.f32 %v284, %v488
    %v649 = vmul.f32 %v285, %v488
    %v650 = vmul.f32 %v286, %v488
    %v651 = vmul.f32 %v287, %v493
    %v652 = vmul.f32 %v288, %v493
    %v653 = vmul.f32 %v289, %v493
    %v654 = vmul.f32 %v290, %v493
    %v655 = vmul.f32 %v291, %v493
    %v656 = vmul.f32 %v292, %v493
    %v657 = vmul.f32 %v293, %v498
    %v658 = vmul.f32 %v294, %v498
    %v659 = vmul.f32 %v295, %v498
    %v660 = vmul.f32 %v296, %v498
    %v661 = vmul.f32 %v297, %v498
    %v662 = vmul.f32 %v298, %v498
    %v663 = vmul.f32 %v299, %v503
    %v664 = vmul.f32 %v300, %v503
    %v665 = vmul.f32 %v301, %v503
    %v666 = vmul.f32 %v302, %v503
    %v667 = vmul.f32 %v303, %v503
    %v668 = vmul.f32 %v304, %v503
    %v669 = vmul.f32 %v305, %v508
    %v670 = vmul.f32 %v306, %v508
    %v671 = vmul.f32 %v307, %v508
    %v672 = vmul.f32 %v308, %v508
    %v673 = vmul.f32 %v309, %v508
    %v674 = vmul.f32 %v310, %v508
    %v675 = vmul.f32 %v311, %v513
    %v676 = vmul.f32 %v312, %v513
    %v677 = vmul.f32 %v313, %v513
    %v678 = vmul.f32 %v314, %v513
    %v679 = vmul.f32 %v315, %v513
    %v680 = vmul.f32 %v316, %v513
    %v681 = vmul.f32 %v317, %v518
    %v682 = vmul.f32 %v318, %v518
    %v683 = vmul.f32 %v319, %v518
    %v684 = vmul.f32 %v320, %v518
    %v685 = vmul.f32 %v321, %v518
    %v686 = vmul.f32 %v322, %v518
    %v687 = vmul.f32 %v323, %v523
    %v688 = vmul.f32 %v324, %v523
    %v689 = vmul.f32 %v325, %v523
    %v690 = vmul.f32 %v326, %v523
    %v691 = vmul.f32 %v327, %v523
    %v692 = vmul.f32 %v328, %v523
    %v693 = vmul.f32 %v329, %v528
    %v694 = vmul.f32 %v330, %v528
    %v695 = vmul.f32 %v331, %v528
    %v696 = vmul.f32 %v332, %v528
    %v697 = vmul.f32 %v333, %v528
    %v698 = vmul.f32 %v334, %v528
    %v699 = vmul.f32 %v335, %v533
    %v700 = vmul.f32 %v336, %v533
    %v701 = vmul.f32 %v337, %v533
    %v702 = vmul.f32 %v338, %v533
    %v703 = vmul.f32 %v339, %v533
    %v704 = vmul.f32 %v340, %v533
    %v705 = vmul.f32 %v341, %v538
    %v706 = vmul.f32 %v342, %v538
    %v707 = vmul.f32 %v343, %v538
    %v708 = vmul.f32 %v344, %v538
    %v709 = vmul.f32 %v345, %v538
    %v710 = vmul.f32 %v346, %v538
    %v711 = vmul.f32 %v347, %v543
    %v712 = vmul.f32 %v348, %v543
    %v713 = vmul.f32 %v349, %v543
    %v714 = vmul.f32 %v350, %v543
    %v715 = vmul.f32 %v351, %v543
    %v716 = vmul.f32 %v352, %v543
    %v717 = vmul.f32 %v353, %v548
    %v718 = vmul.f32 %v354, %v548
    %v719 = vmul.f32 %v355, %v548
    %v720 = vmul.f32 %v356, %v548
    %v721 = vmul.f32 %v357, %v548
    %v722 = vmul.f32 %v358, %v548
    %v723 = vmul.f32 %v359, %v553
    %v724 = vmul.f32 %v360, %v553
    %v725 = vmul.f32 %v361, %v553
    %v726 = vmul.f32 %v362, %v553
    %v727 = vmul.f32 %v363, %v553
    %v728 = vmul.f32 %v364, %v553
    %v729 = vmul.f32 %v365, %v558
    %v730 = vmul.f32 %v366, %v558
    %v731 = vmul.f32 %v367, %v558
    %v732 = vmul.f32 %v368, %v558
    %v733 = vmul.f32 %v369, %v558
    %v734 = vmul.f32 %v370, %v558
    %v735 = vmul.f32 %v371, %v563
    %v736 = vmul.f32 %v372, %v563
    %v737 = vmul.f32 %v373, %v563
    %v738 = vmul.f32 %v374, %v563
    %v739 = vmul.f32 %v375, %v563
    %v740 = vmul.f32 %v376, %v563
    %v741 = vmul.f32 %v377, %v568
    %v742 = vmul.f32 %v378, %v568
    %v743 = vmul.f32 %v379, %v568
    %v744 = vmul.f32 %v380, %v568
    %v745 = vmul.f32 %v381, %v568
    %v746 = vmul.f32 %v382, %v568
    %v747 = vmul.f32 %v383, %v573
    %v748 = vmul.f32 %v384, %v573
    %v749 = vmul.f32 %v385, %v573
    %v750 = vmul.f32 %v386, %v573
    %v751 = vmul.f32 %v387, %v573
    %v752 = vmul.f32 %v388, %v573
    %v753 = vmul.f32 %v389, %v578
    %v754 = vmul.f32 %v390, %v578
    %v755 = vmul.f32 %v391, %v578
    %v756 = vmul.f32 %v392, %v578
    %v757 = vmul.f32 %v393, %v578
    %v758 = vmul.f32 %v394, %v578
    %v759 = vmul.f32 %v395, %v583
    %v760 = vmul.f32 %v396, %v583
    %v761 = vmul.f32 %v397, %v583
    %v762 = vmul.f32 %v398, %v583
    %v763 = vmul.f32 %v399, %v583
    %v764 = vmul.f32 %v400, %v583
    %v765 = vmul.f32 %v401, %v588
    %v766 = vmul.f32 %v402, %v588
    %v767 = vmul.f32 %v403, %v588
    %v768 = vmul.f32 %v404, %v588
    %v769 = vmul.f32 %v405, %v588
    %v770 = vmul.f32 %v406, %v588
    %v771 = vmul.f32 %v407, %v593
    %v772 = vmul.f32 %v408, %v593
    %v773 = vmul.f32 %v409, %v593
    %v774 = vmul.f32 %v410, %v593
    %v775 = vmul.f32 %v411, %v593
    %v776 = vmul.f32 %v412, %v593
    %v777 = vmul.f32 %v413, %v598
    %v778 = vmul.f32 %v414, %v598
    %v779 = vmul.f32 %v415, %v598
    %v780 = vmul.f32 %v416, %v598
    %v781 = vmul.f32 %v417, %v598
    %v782 = vmul.f32 %v418, %v598
    %v783 = vmul.f32 %v419, %v603
    %v784 = vmul.f32 %v420, %v603
    %v785 = vmul.f32 %v421, %v603
    %v786 = vmul.f32 %v422, %v603
    %v787 = vmul.f32 %v423, %v603
    %v788 = vmul.f32 %v424, %v603
    %v789 = vmul.f32 %v425, %v608
    %v790 = vmul.f32 %v426, %v608
    %v791 = vmul.f32 %v427, %v608
    %v792 = vmul.f32 %v428, %v608
    %v793 = vmul.f32 %v429, %v608
    %v794 = vmul.f32 %v430, %v608
    %v795 = vmul.f32 %v431, %v613
    %v796 = vmul.f32 %v432, %v613
    %v797 = vmul.f32 %v433, %v613
    %v798 = vmul.f32 %v434, %v613
    %v799 = vmul.f32 %v435, %v613
    %v800 = vmul.f32 %v436, %v613
    %v801 = vmul.f32 %v437, %v618
    %v802 = vmul.f32 %v438, %v618
    %v803 = vmul.f32 %v439, %v618
    %v804 = vmul.f32 %v440, %v618
    %v805 = vmul.f32 %v441, %v618
    %v806 = vmul.f32 %v442, %v618
    %v807 = vmul.f32 %v443, %v623
    %v808 = vmul.f32 %v444, %v623
    %v809 = vmul.f32 %v445, %v623
    %v810 = vmul.f32 %v446, %v623
    %v811 = vmul.f32 %v447, %v623
    %v812 = vmul.f32 %v448, %v623
    %v813 = vmul.f32 %v449, %v628
    %v814 = vmul.f32 %v450, %v628
    %v815 = vmul.f32 %v451, %v628
    %v816 = vmul.f32 %v452, %v628
    %v817 = vmul.f32 %v453, %v628
    %v818 = vmul.f32 %v454, %v628
    %v819 = vmul.f32 %v455, %v633
    %v820 = vmul.f32 %v456, %v633
    %v821 = vmul.f32 %v457, %v633
    %v822 = vmul.f32 %v458, %v633
    %v823 = vmul.f32 %v459, %v633
    %v824 = vmul.f32 %v460, %v633
    %v825 = vmul.f32 %v461, %v638
    %v826 = vmul.f32 %v462, %v638
    %v827 = vmul.f32 %v463, %v638
    %v828 = vmul.f32 %v464, %v638
    %v829 = vmul.f32 %v465, %v638
    %v830 = vmul.f32 %v466, %v638
    %v831 = vmul.f32 %v467, %v643
    %v832 = vmul.f32 %v468, %v643
    %v833 = vmul.f32 %v469, %v643
    %v834 = vmul.f32 %v470, %v643
    %v835 = vmul.f32 %v471, %v643
    %v836 = vmul.f32 %v472, %v643
    %v837 = vadd.f32 %v645, %v651
    %v838 = vrot.slane %v837, 4
    %v839 = vadd.f32 %v837, %v838
    %v840 = vrot.slane %v839, 2
    %v841 = vadd.f32 %v839, %v840
    %v842 = vrot.slane %v841, 1
    %v843 = vadd.f32 %v841, %v842
    %v844 = vadd.f32 %v646, %v652
    %v845 = vrot.slane %v844, 4
    %v846 = vadd.f32 %v844, %v845
    %v847 = vrot.slane %v846, 2
    %v848 = vadd.f32 %v846, %v847
    %v849 = vrot.slane %v848, 1
    %v850 = vadd.f32 %v848, %v849
    %v851 = vadd.f32 %v647, %v653
    %v852 = vrot.slane %v851, 4
    %v853 = vadd.f32 %v851, %v852
    %v854 = vrot.slane %v853, 2
    %v855 = vadd.f32 %v853, %v854
    %v856 = vrot.slane %v855, 1
    %v857 = vadd.f32 %v855, %v856
    %v858 = vadd.f32 %v648, %v654
    %v859 = vrot.slane %v858, 4
    %v860 = vadd.f32 %v858, %v859
    %v861 = vrot.slane %v860, 2
    %v862 = vadd.f32 %v860, %v861
    %v863 = vrot.slane %v862, 1
    %v864 = vadd.f32 %v862, %v863
    %v865 = vadd.f32 %v649, %v655
    %v866 = vrot.slane %v865, 4
    %v867 = vadd.f32 %v865, %v866
    %v868 = vrot.slane %v867, 2
    %v869 = vadd.f32 %v867, %v868
    %v870 = vrot.slane %v869, 1
    %v871 = vadd.f32 %v869, %v870
    %v872 = vadd.f32 %v650, %v656
    %v873 = vrot.slane %v872, 4
    %v874 = vadd.f32 %v872, %v873
    %v875 = vrot.slane %v874, 2
    %v876 = vadd.f32 %v874, %v875
    %v877 = vrot.slane %v876, 1
    %v878 = vadd.f32 %v876, %v877
    %v879 = vadd.f32 %v657, %v663
    %v880 = vrot.slane %v879, 4
    %v881 = vadd.f32 %v879, %v880
    %v882 = vrot.slane %v881, 2
    %v883 = vadd.f32 %v881, %v882
    %v884 = vrot.slane %v883, 1
    %v885 = vadd.f32 %v883, %v884
    %v886 = vadd.f32 %v658, %v664
    %v887 = vrot.slane %v886, 4
    %v888 = vadd.f32 %v886, %v887
    %v889 = vrot.slane %v888, 2
    %v890 = vadd.f32 %v888, %v889
    %v891 = vrot.slane %v890, 1
    %v892 = vadd.f32 %v890, %v891
    %v893 = vadd.f32 %v659, %v665
    %v894 = vrot.slane %v893, 4
    %v895 = vadd.f32 %v893, %v894
    %v896 = vrot.slane %v895, 2
    %v897 = vadd.f32 %v895, %v896
    %v898 = vrot.slane %v897, 1
    %v899 = vadd.f32 %v897, %v898
    %v900 = vadd.f32 %v660, %v666
    %v901 = vrot.slane %v900, 4
    %v902 = vadd.f32 %v900, %v901
    %v903 = vrot.slane %v902, 2
    %v904 = vadd.f32 %v902, %v903
    %v905 = vrot.slane %v904, 1
    %v906 = vadd.f32 %v904, %v905
    %v907 = vadd.f32 %v661, %v667
    %v908 = vrot.slane %v907, 4
    %v909 = vadd.f32 %v907, %v908
    %v910 = vrot.slane %v909, 2
    %v911 = vadd.f32 %v909, %v910
    %v912 = vrot.slane %v911, 1
    %v913 = vadd.f32 %v911, %v912
    %v914 = vadd.f32 %v662, %v668
    %v915 = vrot.slane %v914, 4
    %v916 = vadd.f32 %v914, %v915
    %v917 = vrot.slane %v916, 2
    %v918 = vadd.f32 %v916, %v917
    %v919 = vrot.slane %v918, 1
    %v920 = vadd.f32 %v918, %v919
    %v921 = vadd.f32 %v669, %v675
    %v922 = vrot.slane %v921, 4
    %v923 = vadd.f32 %v921, %v922
    %v924 = vrot.slane %v923, 2
    %v925 = vadd.f32 %v923, %v924
    %v926 = vrot.slane %v925, 1
    %v927 = vadd.f32 %v925, %v926
    %v928 = vadd.f32 %v670, %v676
    %v929 = vrot.slane %v928, 4
    %v930 = vadd.f32 %v928, %v929
    %v931 = vrot.slane %v930, 2
    %v932 = vadd.f32 %v930, %v931
    %v933 = vrot.slane %v932, 1
    %v934 = vadd.f32 %v932, %v933
    %v935 = vadd.f32 %v671, %v677
    %v936 = vrot.slane %v935, 4
    %v937 = vadd.f32 %v935, %v936
    %v938 = vrot.slane %v937, 2
    %v939 = vadd.f32 %v937, %v938
    %v940 = vrot.slane %v939, 1
    %v941 = vadd.f32 %v939, %v940
    %v942 = vadd.f32 %v672, %v678
    %v943 = vrot.slane %v942, 4
    %v944 = vadd.f32 %v942, %v943
    %v945 = vrot.slane %v944, 2
    %v946 = vadd.f32 %v944, %v945
    %v947 = vrot.slane %v946, 1
    %v948 = vadd.f32 %v946, %v947
    %v949 = vadd.f32 %v673, %v679
    %v950 = vrot.slane %v949, 4
    %v951 = vadd.f32 %v949, %v950
    %v952 = vrot.slane %v951, 2
    %v953 = vadd.f32 %v951, %v952
    %v954 = vrot.slane %v953, 1
    %v955 = vadd.f32 %v953, %v954
    %v956 = vadd.f32 %v674, %v680
    %v957 = vrot.slane %v956, 4
    %v958 = vadd.f32 %v956, %v957
    %v959 = vrot.slane %v958, 2
    %v960 = vadd.f32 %v958, %v959
    %v961 = vrot.slane %v960, 1
    %v962 = vadd.f32 %v960, %v961
    %v963 = vadd.f32 %v681, %v687
    %v964 = vrot.slane %v963, 4
    %v965 = vadd.f32 %v963, %v964
    %v966 = vrot.slane %v965, 2
    %v967 = vadd.f32 %v965, %v966
    %v968 = vrot.slane %v967, 1
    %v969 = vadd.f32 %v967, %v968
    %v970 = vadd.f32 %v682, %v688
    %v971 = vrot.slane %v970, 4
    %v972 = vadd.f32 %v970, %v971
    %v973 = vrot.slane %v972, 2
    %v974 = vadd.f32 %v972, %v973
    %v975 = vrot.slane %v974, 1
    %v976 = vadd.f32 %v974, %v975
    %v977 = vadd.f32 %v683, %v689
    %v978 = vrot.slane %v977, 4
    %v979 = vadd.f32 %v977, %v978
    %v980 = vrot.slane %v979, 2
    %v981 = vadd.f32 %v979, %v980
    %v982 = vrot.slane %v981, 1
    %v983 = vadd.f32 %v981, %v982
    %v984 = vadd.f32 %v684, %v690
    %v985 = vrot.slane %v984, 4
    %v986 = vadd.f32 %v984, %v985
    %v987 = vrot.slane %v986, 2
    %v988 = vadd.f32 %v986, %v987
    %v989 = vrot.slane %v988, 1
    %v990 = vadd.f32 %v988, %v989
    %v991 = vadd.f32 %v685, %v691
    %v992 = vrot.slane %v991, 4
    %v993 = vadd.f32 %v991, %v992
    %v994 = vrot.slane %v993, 2
    %v995 = vadd.f32 %v993, %v994
    %v996 = vrot.slane %v995, 1
    %v997 = vadd.f32 %v995, %v996
    %v998 = vadd.f32 %v686, %v692
    %v999 = vrot.slane %v998, 4
    %v1000 = vadd.f32 %v998, %v999
    %v1001 = vrot.slane %v1000, 2
    %v1002 = vadd.f32 %v1000, %v1001
    %v1003 = vrot.slane %v1002, 1
    %v1004 = vadd.f32 %v1002, %v1003
    %v1005 = vadd.f32 %v693, %v699
    %v1006 = vrot.slane %v1005, 4
    %v1007 = vadd.f32 %v1005, %v1006
    %v1008 = vrot.slane %v1007, 2
    %v1009 = vadd.f32 %v1007, %v1008
    %v1010 = vrot.slane %v1009, 1
    %v1011 = vadd.f32 %v1009, %v1010
    %v1012 = vadd.f32 %v694, %v700
    %v1013 = vrot.slane %v1012, 4
    %v1014 = vadd.f32 %v1012, %v1013
    %v1015 = vrot.slane %v1014, 2
    %v1016 = vadd.f32 %v1014, %v1015
    %v1017 = vrot.slane %v1016, 1
    %v1018 = vadd.f32 %v1016, %v1017
    %v1019 = vadd.f32 %v695, %v701
    %v1020 = vrot.slane %v1019, 4
    %v1021 = vadd.f32 %v1019, %v1020
    %v1022 = vrot.slane %v1021, 2
    %v1023 = vadd.f32 %v1021, %v1022
    %v1024 = vrot.slane %v1023, 1
    %v1025 = vadd.f32 %v1023, %v1024
    %v1026 = vadd.f32 %v696, %v702
    %v1027 = vrot.slane %v1026, 4
    %v1028 = vadd.f32 %v1026, %v1027
    %v1029 = vrot.slane %v1028, 2
    %v1030 = vadd.f32 %v1028, %v1029
    %v1031 = vrot.slane %v1030, 1
    %v1032 = vadd.f32 %v1030, %v1031
    %v1033 = vadd.f32 %v697, %v703
    %v1034 = vrot.slane %v1033, 4
    %v1035 = vadd.f32 %v1033, %v1034
    %v1036 = vrot.slane %v1035, 2
    %v1037 = vadd.f32 %v1035, %v1036
    %v1038 = vrot.slane %v1037, 1
    %v1039 = vadd.f32 %v1037, %v1038
    %v1040 = vadd.f32 %v698, %v704
    %v1041 = vrot.slane %v1040, 4
    %v1042 = vadd.f32 %v1040, %v1041
    %v1043 = vrot.slane %v1042, 2
    %v1044 = vadd.f32 %v1042, %v1043
    %v1045 = vrot.slane %v1044, 1
    %v1046 = vadd.f32 %v1044, %v1045
    %v1047 = vadd.f32 %v705, %v711
    %v1048 = vrot.slane %v1047, 4
    %v1049 = vadd.f32 %v1047, %v1048
    %v1050 = vrot.slane %v1049, 2
    %v1051 = vadd.f32 %v1049, %v1050
    %v1052 = vrot.slane %v1051, 1
    %v1053 = vadd.f32 %v1051, %v1052
    %v1054 = vadd.f32 %v706, %v712
    %v1055 = vrot.slane %v1054, 4
    %v1056 = vadd.f32 %v1054, %v1055
    %v1057 = vrot.slane %v1056, 2
    %v1058 = vadd.f32 %v1056, %v1057
    %v1059 = vrot.slane %v1058, 1
    %v1060 = vadd.f32 %v1058, %v1059
    %v1061 = vadd.f32 %v707, %v713
    %v1062 = vrot.slane %v1061, 4
    %v1063 = vadd.f32 %v1061, %v1062
    %v1064 = vrot.slane %v1063, 2
    %v1065 = vadd.f32 %v1063, %v1064
    %v1066 = vrot.slane %v1065, 1
    %v1067 = vadd.f32 %v1065, %v1066
    %v1068 = vadd.f32 %v708, %v714
    %v1069 = vrot.slane %v1068, 4
    %v1070 = vadd.f32 %v1068, %v1069
    %v1071 = vrot.slane %v1070, 2
    %v1072 = vadd.f32 %v1070, %v1071
    %v1073 = vrot.slane %v1072, 1
    %v1074 = vadd.f32 %v1072, %v1073
    %v1075 = vadd.f32 %v709, %v715
    %v1076 = vrot.slane %v1075, 4
    %v1077 = vadd.f32 %v1075, %v1076
    %v1078 = vrot.slane %v1077, 2
    %v1079 = vadd.f32 %v1077, %v1078
    %v1080 = vrot.slane %v1079, 1
    %v1081 = vadd.f32 %v1079, %v1080
    %v1082 = vadd.f32 %v710, %v716
    %v1083 = vrot.slane %v1082, 4
    %v1084 = vadd.f32 %v1082, %v1083
    %v1085 = vrot.slane %v1084, 2
    %v1086 = vadd.f32 %v1084, %v1085
    %v1087 = vrot.slane %v1086, 1
    %v1088 = vadd.f32 %v1086, %v1087
    %v1089 = vadd.f32 %v717, %v723
    %v1090 = vrot.slane %v1089, 4
    %v1091 = vadd.f32 %v1089, %v1090
    %v1092 = vrot.slane %v1091, 2
    %v1093 = vadd.f32 %v1091, %v1092
    %v1094 = vrot.slane %v1093, 1
    %v1095 = vadd.f32 %v1093, %v1094
    %v1096 = vadd.f32 %v718, %v724
    %v1097 = vrot.slane %v1096, 4
    %v1098 = vadd.f32 %v1096, %v1097
    %v1099 = vrot.slane %v1098, 2
    %v1100 = vadd.f32 %v1098, %v1099
    %v1101 = vrot.slane %v1100, 1
    %v1102 = vadd.f32 %v1100, %v1101
    %v1103 = vadd.f32 %v719, %v725
    %v1104 = vrot.slane %v1103, 4
    %v1105 = vadd.f32 %v1103, %v1104
    %v1106 = vrot.slane %v1105, 2
    %v1107 = vadd.f32 %v1105, %v1106
    %v1108 = vrot.slane %v1107, 1
    %v1109 = vadd.f32 %v1107, %v1108
    %v1110 = vadd.f32 %v720, %v726
    %v1111 = vrot.slane %v1110, 4
    %v1112 = vadd.f32 %v1110, %v1111
    %v1113 = vrot.slane %v1112, 2
    %v1114 = vadd.f32 %v1112, %v1113
    %v1115 = vrot.slane %v1114, 1
    %v1116 = vadd.f32 %v1114, %v1115
    %v1117 = vadd.f32 %v721, %v727
    %v1118 = vrot.slane %v1117, 4
    %v1119 = vadd.f32 %v1117, %v1118
    %v1120 = vrot.slane %v1119, 2
    %v1121 = vadd.f32 %v1119, %v1120
    %v1122 = vrot.slane %v1121, 1
    %v1123 = vadd.f32 %v1121, %v1122
    %v1124 = vadd.f32 %v722, %v728
    %v1125 = vrot.slane %v1124, 4
    %v1126 = vadd.f32 %v1124, %v1125
    %v1127 = vrot.slane %v1126, 2
    %v1128 = vadd.f32 %v1126, %v1127
    %v1129 = vrot.slane %v1128, 1
    %v1130 = vadd.f32 %v1128, %v1129
    %v1131 = vadd.f32 %v729, %v735
    %v1132 = vrot.slane %v1131, 4
    %v1133 = vadd.f32 %v1131, %v1132
    %v1134 = vrot.slane %v1133, 2
    %v1135 = vadd.f32 %v1133, %v1134
    %v1136 = vrot.slane %v1135, 1
    %v1137 = vadd.f32 %v1135, %v1136
    %v1138 = vadd.f32 %v730, %v736
    %v1139 = vrot.slane %v1138, 4
    %v1140 = vadd.f32 %v1138, %v1139
    %v1141 = vrot.slane %v1140, 2
    %v1142 = vadd.f32 %v1140, %v1141
    %v1143 = vrot.slane %v1142, 1
    %v1144 = vadd.f32 %v1142, %v1143
    %v1145 = vadd.f32 %v731, %v737
    %v1146 = vrot.slane %v1145, 4
    %v1147 = vadd.f32 %v1145, %v1146
    %v1148 = vrot.slane %v1147, 2
    %v1149 = vadd.f32 %v1147, %v1148
    %v1150 = vrot.slane %v1149, 1
    %v1151 = vadd.f32 %v1149, %v1150
    %v1152 = vadd.f32 %v732, %v738
    %v1153 = vrot.slane %v1152, 4
    %v1154 = vadd.f32 %v1152, %v1153
    %v1155 = vrot.slane %v1154, 2
    %v1156 = vadd.f32 %v1154, %v1155
    %v1157 = vrot.slane %v1156, 1
    %v1158 = vadd.f32 %v1156, %v1157
    %v1159 = vadd.f32 %v733, %v739
    %v1160 = vrot.slane %v1159, 4
    %v1161 = vadd.f32 %v1159, %v1160
    %v1162 = vrot.slane %v1161, 2
    %v1163 = vadd.f32 %v1161, %v1162
    %v1164 = vrot.slane %v1163, 1
    %v1165 = vadd.f32 %v1163, %v1164
    %v1166 = vadd.f32 %v734, %v740
    %v1167 = vrot.slane %v1166, 4
    %v1168 = vadd.f32 %v1166, %v1167
    %v1169 = vrot.slane %v1168, 2
    %v1170 = vadd.f32 %v1168, %v1169
    %v1171 = vrot.slane %v1170, 1
    %v1172 = vadd.f32 %v1170, %v1171
    %v1173 = vadd.f32 %v741, %v747
    %v1174 = vrot.slane %v1173, 4
    %v1175 = vadd.f32 %v1173, %v1174
    %v1176 = vrot.slane %v1175, 2
    %v1177 = vadd.f32 %v1175, %v1176
    %v1178 = vrot.slane %v1177, 1
    %v1179 = vadd.f32 %v1177, %v1178
    %v1180 = vadd.f32 %v742, %v748
    %v1181 = vrot.slane %v1180, 4
    %v1182 = vadd.f32 %v1180, %v1181
    %v1183 = vrot.slane %v1182, 2
    %v1184 = vadd.f32 %v1182, %v1183
    %v1185 = vrot.slane %v1184, 1
    %v1186 = vadd.f32 %v1184, %v1185
    %v1187 = vadd.f32 %v743, %v749
    %v1188 = vrot.slane %v1187, 4
    %v1189 = vadd.f32 %v1187, %v1188
    %v1190 = vrot.slane %v1189, 2
    %v1191 = vadd.f32 %v1189, %v1190
    %v1192 = vrot.slane %v1191, 1
    %v1193 = vadd.f32 %v1191, %v1192
    %v1194 = vadd.f32 %v744, %v750
    %v1195 = vrot.slane %v1194, 4
    %v1196 = vadd.f32 %v1194, %v1195
    %v1197 = vrot.slane %v1196, 2
    %v1198 = vadd.f32 %v1196, %v1197
    %v1199 = vrot.slane %v1198, 1
    %v1200 = vadd.f32 %v1198, %v1199
    %v1201 = vadd.f32 %v745, %v751
    %v1202 = vrot.slane %v1201, 4
    %v1203 = vadd.f32 %v1201, %v1202
    %v1204 = vrot.slane %v1203, 2
    %v1205 = vadd.f32 %v1203, %v1204
    %v1206 = vrot.slane %v1205, 1
    %v1207 = vadd.f32 %v1205, %v1206
    %v1208 = vadd.f32 %v746, %v752
    %v1209 = vrot.slane %v1208, 4
    %v1210 = vadd.f32 %v1208, %v1209
    %v1211 = vrot.slane %v1210, 2
    %v1212 = vadd.f32 %v1210, %v1211
    %v1213 = vrot.slane %v1212, 1
    %v1214 = vadd.f32 %v1212, %v1213
    %v1215 = vadd.f32 %v753, %v759
    %v1216 = vrot.slane %v1215, 4
    %v1217 = vadd.f32 %v1215, %v1216
    %v1218 = vrot.slane %v1217, 2
    %v1219 = vadd.f32 %v1217, %v1218
    %v1220 = vrot.slane %v1219, 1
    %v1221 = vadd.f32 %v1219, %v1220
    %v1222 = vadd.f32 %v754, %v760
    %v1223 = vrot.slane %v1222, 4
    %v1224 = vadd.f32 %v1222, %v1223
    %v1225 = vrot.slane %v1224, 2
    %v1226 = vadd.f32 %v1224, %v1225
    %v1227 = vrot.slane %v1226, 1
    %v1228 = vadd.f32 %v1226, %v1227
    %v1229 = vadd.f32 %v755, %v761
    %v1230 = vrot.slane %v1229, 4
    %v1231 = vadd.f32 %v1229, %v1230
    %v1232 = vrot.slane %v1231, 2
    %v1233 = vadd.f32 %v1231, %v1232
    %v1234 = vrot.slane %v1233, 1
    %v1235 = vadd.f32 %v1233, %v1234
    %v1236 = vadd.f32 %v756, %v762
    %v1237 = vrot.slane %v1236, 4
    %v1238 = vadd.f32 %v1236, %v1237
    %v1239 = vrot.slane %v1238, 2
    %v1240 = vadd.f32 %v1238, %v1239
    %v1241 = vrot.slane %v1240, 1
    %v1242 = vadd.f32 %v1240, %v1241
    %v1243 = vadd.f32 %v757, %v763
    %v1244 = vrot.slane %v1243, 4
    %v1245 = vadd.f32 %v1243, %v1244
    %v1246 = vrot.slane %v1245, 2
    %v1247 = vadd.f32 %v1245, %v1246
    %v1248 = vrot.slane %v1247, 1
    %v1249 = vadd.f32 %v1247, %v1248
    %v1250 = vadd.f32 %v758, %v764
    %v1251 = vrot.slane %v1250, 4
    %v1252 = vadd.f32 %v1250, %v1251
    %v1253 = vrot.slane %v1252, 2
    %v1254 = vadd.f32 %v1252, %v1253
    %v1255 = vrot.slane %v1254, 1
    %v1256 = vadd.f32 %v1254, %v1255
    %v1257 = vadd.f32 %v765, %v771
    %v1258 = vrot.slane %v1257, 4
    %v1259 = vadd.f32 %v1257, %v1258
    %v1260 = vrot.slane %v1259, 2
    %v1261 = vadd.f32 %v1259, %v1260
    %v1262 = vrot.slane %v1261, 1
    %v1263 = vadd.f32 %v1261, %v1262
    %v1264 = vadd.f32 %v766, %v772
    %v1265 = vrot.slane %v1264, 4
    %v1266 = vadd.f32 %v1264, %v1265
    %v1267 = vrot.slane %v1266, 2
    %v1268 = vadd.f32 %v1266, %v1267
    %v1269 = vrot.slane %v1268, 1
    %v1270 = vadd.f32 %v1268, %v1269
    %v1271 = vadd.f32 %v767, %v773
    %v1272 = vrot.slane %v1271, 4
    %v1273 = vadd.f32 %v1271, %v1272
    %v1274 = vrot.slane %v1273, 2
    %v1275 = vadd.f32 %v1273, %v1274
    %v1276 = vrot.slane %v1275, 1
    %v1277 = vadd.f32 %v1275, %v1276
    %v1278 = vadd.f32 %v768, %v774
    %v1279 = vrot.slane %v1278, 4
    %v1280 = vadd.f32 %v1278, %v1279
    %v1281 = vrot.slane %v1280, 2
    %v1282 = vadd.f32 %v1280, %v1281
    %v1283 = vrot.slane %v1282, 1
    %v1284 = vadd.f32 %v1282, %v1283
    %v1285 = vadd.f32 %v769, %v775
    %v1286 = vrot.slane %v1285, 4
    %v1287 = vadd.f32 %v1285, %v1286
    %v1288 = vrot.slane %v1287, 2
    %v1289 = vadd.f32 %v1287, %v1288
    %v1290 = vrot.slane %v1289, 1
    %v1291 = vadd.f32 %v1289, %v1290
    %v1292 = vadd.f32 %v770, %v776
    %v1293 = vrot.slane %v1292, 4
    %v1294 = vadd.f32 %v1292, %v1293
    %v1295 = vrot.slane %v1294, 2
    %v1296 = vadd.f32 %v1294, %v1295
    %v1297 = vrot.slane %v1296, 1
    %v1298 = vadd.f32 %v1296, %v1297
    %v1299 = vadd.f32 %v777, %v783
    %v1300 = vrot.slane %v1299, 4
    %v1301 = vadd.f32 %v1299, %v1300
    %v1302 = vrot.slane %v1301, 2
    %v1303 = vadd.f32 %v1301, %v1302
    %v1304 = vrot.slane %v1303, 1
    %v1305 = vadd.f32 %v1303, %v1304
    %v1306 = vadd.f32 %v778, %v784
    %v1307 = vrot.slane %v1306, 4
    %v1308 = vadd.f32 %v1306, %v1307
    %v1309 = vrot.slane %v1308, 2
    %v1310 = vadd.f32 %v1308, %v1309
    %v1311 = vrot.slane %v1310, 1
    %v1312 = vadd.f32 %v1310, %v1311
    %v1313 = vadd.f32 %v779, %v785
    %v1314 = vrot.slane %v1313, 4
    %v1315 = vadd.f32 %v1313, %v1314
    %v1316 = vrot.slane %v1315, 2
    %v1317 = vadd.f32 %v1315, %v1316
    %v1318 = vrot.slane %v1317, 1
    %v1319 = vadd.f32 %v1317, %v1318
    %v1320 = vadd.f32 %v780, %v786
    %v1321 = vrot.slane %v1320, 4
    %v1322 = vadd.f32 %v1320, %v1321
    %v1323 = vrot.slane %v1322, 2
    %v1324 = vadd.f32 %v1322, %v1323
    %v1325 = vrot.slane %v1324, 1
    %v1326 = vadd.f32 %v1324, %v1325
    %v1327 = vadd.f32 %v781, %v787
    %v1328 = vrot.slane %v1327, 4
    %v1329 = vadd.f32 %v1327, %v1328
    %v1330 = vrot.slane %v1329, 2
    %v1331 = vadd.f32 %v1329, %v1330
    %v1332 = vrot.slane %v1331, 1
    %v1333 = vadd.f32 %v1331, %v1332
    %v1334 = vadd.f32 %v782, %v788
    %v1335 = vrot.slane %v1334, 4
    %v1336 = vadd.f32 %v1334, %v1335
    %v1337 = vrot.slane %v1336, 2
    %v1338 = vadd.f32 %v1336, %v1337
    %v1339 = vrot.slane %v1338, 1
    %v1340 = vadd.f32 %v1338, %v1339
    %v1341 = vadd.f32 %v789, %v795
    %v1342 = vrot.slane %v1341, 4
    %v1343 = vadd.f32 %v1341, %v1342
    %v1344 = vrot.slane %v1343, 2
    %v1345 = vadd.f32 %v1343, %v1344
    %v1346 = vrot.slane %v1345, 1
    %v1347 = vadd.f32 %v1345, %v1346
    %v1348 = vadd.f32 %v790, %v796
    %v1349 = vrot.slane %v1348, 4
    %v1350 = vadd.f32 %v1348, %v1349
    %v1351 = vrot.slane %v1350, 2
    %v1352 = vadd.f32 %v1350, %v1351
    %v1353 = vrot.slane %v1352, 1
    %v1354 = vadd.f32 %v1352, %v1353
    %v1355 = vadd.f32 %v791, %v797
    %v1356 = vrot.slane %v1355, 4
    %v1357 = vadd.f32 %v1355, %v1356
    %v1358 = vrot.slane %v1357, 2
    %v1359 = vadd.f32 %v1357, %v1358
    %v1360 = vrot.slane %v1359, 1
    %v1361 = vadd.f32 %v1359, %v1360
    %v1362 = vadd.f32 %v792, %v798
    %v1363 = vrot.slane %v1362, 4
    %v1364 = vadd.f32 %v1362, %v1363
    %v1365 = vrot.slane %v1364, 2
    %v1366 = vadd.f32 %v1364, %v1365
    %v1367 = vrot.slane %v1366, 1
    %v1368 = vadd.f32 %v1366, %v1367
    %v1369 = vadd.f32 %v793, %v799
    %v1370 = vrot.slane %v1369, 4
    %v1371 = vadd.f32 %v1369, %v1370
    %v1372 = vrot.slane %v1371, 2
    %v1373 = vadd.f32 %v1371, %v1372
    %v1374 = vrot.slane %v1373, 1
    %v1375 = vadd.f32 %v1373, %v1374
    %v1376 = vadd.f32 %v794, %v800
    %v1377 = vrot.slane %v1376, 4
    %v1378 = vadd.f32 %v1376, %v1377
    %v1379 = vrot.slane %v1378, 2
    %v1380 = vadd.f32 %v1378, %v1379
    %v1381 = vrot.slane %v1380, 1
    %v1382 = vadd.f32 %v1380, %v1381
    %v1383 = vadd.f32 %v801, %v807
    %v1384 = vrot.slane %v1383, 4
    %v1385 = vadd.f32 %v1383, %v1384
    %v1386 = vrot.slane %v1385, 2
    %v1387 = vadd.f32 %v1385, %v1386
    %v1388 = vrot.slane %v1387, 1
    %v1389 = vadd.f32 %v1387, %v1388
    %v1390 = vadd.f32 %v802, %v808
    %v1391 = vrot.slane %v1390, 4
    %v1392 = vadd.f32 %v1390, %v1391
    %v1393 = vrot.slane %v1392, 2
    %v1394 = vadd.f32 %v1392, %v1393
    %v1395 = vrot.slane %v1394, 1
    %v1396 = vadd.f32 %v1394, %v1395
    %v1397 = vadd.f32 %v803, %v809
    %v1398 = vrot.slane %v1397, 4
    %v1399 = vadd.f32 %v1397, %v1398
    %v1400 = vrot.slane %v1399, 2
    %v1401 = vadd.f32 %v1399, %v1400
    %v1402 = vrot.slane %v1401, 1
    %v1403 = vadd.f32 %v1401, %v1402
    %v1404 = vadd.f32 %v804, %v810
    %v1405 = vrot.slane %v1404, 4
    %v1406 = vadd.f32 %v1404, %v1405
    %v1407 = vrot.slane %v1406, 2
    %v1408 = vadd.f32 %v1406, %v1407
    %v1409 = vrot.slane %v1408, 1
    %v1410 = vadd.f32 %v1408, %v1409
    %v1411 = vadd.f32 %v805, %v811
    %v1412 = vrot.slane %v1411, 4
    %v1413 = vadd.f32 %v1411, %v1412
    %v1414 = vrot.slane %v1413, 2
    %v1415 = vadd.f32 %v1413, %v1414
    %v1416 = vrot.slane %v1415, 1
    %v1417 = vadd.f32 %v1415, %v1416
    %v1418 = vadd.f32 %v806, %v812
    %v1419 = vrot.slane %v1418, 4
    %v1420 = vadd.f32 %v1418, %v1419
    %v1421 = vrot.slane %v1420, 2
    %v1422 = vadd.f32 %v1420, %v1421
    %v1423 = vrot.slane %v1422, 1
    %v1424 = vadd.f32 %v1422, %v1423
    %v1425 = vadd.f32 %v813, %v819
    %v1426 = vrot.slane %v1425, 4
    %v1427 = vadd.f32 %v1425, %v1426
    %v1428 = vrot.slane %v1427, 2
    %v1429 = vadd.f32 %v1427, %v1428
    %v1430 = vrot.slane %v1429, 1
    %v1431 = vadd.f32 %v1429, %v1430
    %v1432 = vadd.f32 %v814, %v820
    %v1433 = vrot.slane %v1432, 4
    %v1434 = vadd.f32 %v1432, %v1433
    %v1435 = vrot.slane %v1434, 2
    %v1436 = vadd.f32 %v1434, %v1435
    %v1437 = vrot.slane %v1436, 1
    %v1438 = vadd.f32 %v1436, %v1437
    %v1439 = vadd.f32 %v815, %v821
    %v1440 = vrot.slane %v1439, 4
    %v1441 = vadd.f32 %v1439, %v1440
    %v1442 = vrot.slane %v1441, 2
    %v1443 = vadd.f32 %v1441, %v1442
    %v1444 = vrot.slane %v1443, 1
    %v1445 = vadd.f32 %v1443, %v1444
    %v1446 = vadd.f32 %v816, %v822
    %v1447 = vrot.slane %v1446, 4
    %v1448 = vadd.f32 %v1446, %v1447
    %v1449 = vrot.slane %v1448, 2
    %v1450 = vadd.f32 %v1448, %v1449
    %v1451 = vrot.slane %v1450, 1
    %v1452 = vadd.f32 %v1450, %v1451
    %v1453 = vadd.f32 %v817, %v823
    %v1454 = vrot.slane %v1453, 4
    %v1455 = vadd.f32 %v1453, %v1454
    %v1456 = vrot.slane %v1455, 2
    %v1457 = vadd.f32 %v1455, %v1456
    %v1458 = vrot.slane %v1457, 1
    %v1459 = vadd.f32 %v1457, %v1458
    %v1460 = vadd.f32 %v818, %v824
    %v1461 = vrot.slane %v1460, 4
    %v1462 = vadd.f32 %v1460, %v1461
    %v1463 = vrot.slane %v1462, 2
    %v1464 = vadd.f32 %v1462, %v1463
    %v1465 = vrot.slane %v1464, 1
    %v1466 = vadd.f32 %v1464, %v1465
    %v1467 = vadd.f32 %v825, %v831
    %v1468 = vrot.slane %v1467, 4
    %v1469 = vadd.f32 %v1467, %v1468
    %v1470 = vrot.slane %v1469, 2
    %v1471 = vadd.f32 %v1469, %v1470
    %v1472 = vrot.slane %v1471, 1
    %v1473 = vadd.f32 %v1471, %v1472
    %v1474 = vadd.f32 %v826, %v832
    %v1475 = vrot.slane %v1474, 4
    %v1476 = vadd.f32 %v1474, %v1475
    %v1477 = vrot.slane %v1476, 2
    %v1478 = vadd.f32 %v1476, %v1477
    %v1479 = vrot.slane %v1478, 1
    %v1480 = vadd.f32 %v1478, %v1479
    %v1481 = vadd.f32 %v827, %v833
    %v1482 = vrot.slane %v1481, 4
    %v1483 = vadd.f32 %v1481, %v1482
    %v1484 = vrot.slane %v1483, 2
    %v1485 = vadd.f32 %v1483, %v1484
    %v1486 = vrot.slane %v1485, 1
    %v1487 = vadd.f32 %v1485, %v1486
    %v1488 = vadd.f32 %v828, %v834
    %v1489 = vrot.slane %v1488, 4
    %v1490 = vadd.f32 %v1488, %v1489
    %v1491 = vrot.slane %v1490, 2
    %v1492 = vadd.f32 %v1490, %v1491
    %v1493 = vrot.slane %v1492, 1
    %v1494 = vadd.f32 %v1492, %v1493
    %v1495 = vadd.f32 %v829, %v835
    %v1496 = vrot.slane %v1495, 4
    %v1497 = vadd.f32 %v1495, %v1496
    %v1498 = vrot.slane %v1497, 2
    %v1499 = vadd.f32 %v1497, %v1498
    %v1500 = vrot.slane %v1499, 1
    %v1501 = vadd.f32 %v1499, %v1500
    %v1502 = vadd.f32 %v830, %v836
    %v1503 = vrot.slane %v1502, 4
    %v1504 = vadd.f32 %v1502, %v1503
    %v1505 = vrot.slane %v1504, 2
    %v1506 = vadd.f32 %v1504, %v1505
    %v1507 = vrot.slane %v1506, 1
    %v1508 = vadd.f32 %v1506, %v1507
    %vm1605 = vcmask 1041409
    %v1606 = vsel %vm1605, %v885, %v843
    %vm1607 = vcmask 1042434
    %v1608 = vsel %vm1607, %v927, %v1606
    %vm1609 = vcmask 1043459
    %v1610 = vsel %vm1609, %v969, %v1608
    %vm1611 = vcmask 1044484
    %v1612 = vsel %vm1611, %v1011, %v1610
    %vm1613 = vcmask 1045509
    %v1614 = vsel %vm1613, %v1053, %v1612
    %vm1615 = vcmask 1046534
    %v1616 = vsel %vm1615, %v1095, %v1614
    %vm1617 = vcmask 1047559
    %v1618 = vsel %vm1617, %v1137, %v1616
    %v1619 = vsel %vm1605, %v892, %v850
    %v1620 = vsel %vm1607, %v934, %v1619
    %v1621 = vsel %vm1609, %v976, %v1620
    %v1622 = vsel %vm1611, %v1018, %v1621
    %v1623 = vsel %vm1613, %v1060, %v1622
    %v1624 = vsel %vm1615, %v1102, %v1623
    %v1625 = vsel %vm1617, %v1144, %v1624
    %v1626 = vsel %vm1605, %v899, %v857
    %v1627 = vsel %vm1607, %v941, %v1626
    %v1628 = vsel %vm1609, %v983, %v1627
    %v1629 = vsel %vm1611, %v1025, %v1628
    %v1630 = vsel %vm1613, %v1067, %v1629
    %v1631 = vsel %vm1615, %v1109, %v1630
    %v1632 = vsel %vm1617, %v1151, %v1631
    %v1633 = vsel %vm1605, %v906, %v864
    %v1634 = vsel %vm1607, %v948, %v1633
    %v1635 = vsel %vm1609, %v990, %v1634
    %v1636 = vsel %vm1611, %v1032, %v1635
    %v1637 = vsel %vm1613, %v1074, %v1636
    %v1638 = vsel %vm1615, %v1116, %v1637
    %v1639 = vsel %vm1617, %v1158, %v1638
    %v1640 = vsel %vm1605, %v913, %v871
    %v1641 = vsel %vm1607, %v955, %v1640
    %v1642 = vsel %vm1609, %v997, %v1641
    %v1643 = vsel %vm1611, %v1039, %v1642
    %v1644 = vsel %vm1613, %v1081, %v1643
    %v1645 = vsel %vm1615, %v1123, %v1644
    %v1646 = vsel %vm1617, %v1165, %v1645
    %v1647 = vsel %vm1605, %v920, %v878
    %v1648 = vsel %vm1607, %v962, %v1647
    %v1649 = vsel %vm1609, %v1004, %v1648
    %v1650 = vsel %vm1611, %v1046, %v1649
    %v1651 = vsel %vm1613, %v1088, %v1650
    %v1652 = vsel %vm1615, %v1130, %v1651
    %v1653 = vsel %vm1617, %v1172, %v1652
    %v1654 = vsel %vm1605, %v1221, %v1179
    %v1655 = vsel %vm1607, %v1263, %v1654
    %v1656 = vsel %vm1609, %v1305, %v1655
    %v1657 = vsel %vm1611, %v1347, %v1656
    %v1658 = vsel %vm1613, %v1389, %v1657
    %v1659 = vsel %vm1615, %v1431, %v1658
    %v1660 = vsel %vm1617, %v1473, %v1659
    %v1661 = vsel %vm1605, %v1228, %v1186
    %v1662 = vsel %vm1607, %v1270, %v1661
    %v1663 = vsel %vm1609, %v1312, %v1662
    %v1664 = vsel %vm1611, %v1354, %v1663
    %v1665 = vsel %vm1613, %v1396, %v1664
    %v1666 = vsel %vm1615, %v1438, %v1665
    %v1667 = vsel %vm1617, %v1480, %v1666
    %v1668 = vsel %vm1605, %v1235, %v1193
    %v1669 = vsel %vm1607, %v1277, %v1668
    %v1670 = vsel %vm1609, %v1319, %v1669
    %v1671 = vsel %vm1611, %v1361, %v1670
    %v1672 = vsel %vm1613, %v1403, %v1671
    %v1673 = vsel %vm1615, %v1445, %v1672
    %v1674 = vsel %vm1617, %v1487, %v1673
    %v1675 = vsel %vm1605, %v1242, %v1200
    %v1676 = vsel %vm1607, %v1284, %v1675
    %v1677 = vsel %vm1609, %v1326, %v1676
    %v1678 = vsel %vm1611, %v1368, %v1677
    %v1679 = vsel %vm1613, %v1410, %v1678
    %v1680 = vsel %vm1615, %v1452, %v1679
    %v1681 = vsel %vm1617, %v1494, %v1680
    %v1682 = vsel %vm1605, %v1249, %v1207
    %v1683 = vsel %vm1607, %v1291, %v1682
    %v1684 = vsel %vm1609, %v1333, %v1683
    %v1685 = vsel %vm1611, %v1375, %v1684
    %v1686 = vsel %vm1613, %v1417, %v1685
    %v1687 = vsel %vm1615, %v1459, %v1686
    %v1688 = vsel %vm1617, %v1501, %v1687
    %v1689 = vsel %vm1605, %v1256, %v1214
    %v1690 = vsel %vm1607, %v1298, %v1689
    %v1691 = vsel %vm1609, %v1340, %v1690
    %v1692 = vsel %vm1611, %v1382, %v1691
    %v1693 = vsel %vm1613, %v1424, %v1692
    %v1694 = vsel %vm1615, %v1466, %v1693
    %v1695 = vsel %vm1617, %v1508, %v1694
    %v1708 = vadd.f32 %v473, %v1618
    %v1709 = vadd.f32 %v474, %v1625
    %v1710 = vadd.f32 %v475, %v1632
    %v1711 = vadd.f32 %v476, %v1639
    %v1712 = vadd.f32 %v477, %v1646
    %v1713 = vadd.f32 %v478, %v1653
    %v1714 = vadd.f32 %v479, %v1660
    %v1715 = vadd.f32 %v480, %v1667
    %v1716 = vadd.f32 %v481, %v1674
    %v1717 = vadd.f32 %v482, %v1681
    %v1718 = vadd.f32 %v483, %v1688
    %v1719 = vadd.f32 %v484, %v1695
    %1720 = vst [vmem:[#allocation2] sm:$0xff] %v1708
    %1721 = vst [vmem:[#allocation2 + $0x8] sm:$0xff] %v1709
    %1722 = vst [vmem:[#allocation2 + $0x10] sm:$0xff] %v1710
    %1723 = vst [vmem:[#allocation2 + $0x18] sm:$0xff] %v1711
    %1724 = vst [vmem:[#allocation2 + $0x20] sm:$0xff] %v1712
    %1725 = vst [vmem:[#allocation2 + $0x28] sm:$0xff] %v1713
    %1726 = vst [vmem:[#allocation2 + $0x30] sm:$0xff] %v1714
    %1727 = vst [vmem:[#allocation2 + $0x38] sm:$0xff] %v1715
    %1728 = vst [vmem:[#allocation2 + $0x40] sm:$0xff] %v1716
    %1729 = vst [vmem:[#allocation2 + $0x48] sm:$0xff] %v1717
    %1730 = vst [vmem:[#allocation2 + $0x50] sm:$0xff] %v1718
    %1731 = vst [vmem:[#allocation2 + $0x58] sm:$0xff] %v1719
    %v1732 = vld [vmem:[#allocation3] sm:$0xff]
    %v1733 = vld [vmem:[#allocation3 + $0x8] sm:$0xff]
    %vm1734 = vcmask 7168
    %v1735 = vsel %vm1734, %v153, 0.0
    %v1736 = vsel %vm1734, %v154, 0.0
    %v1737 = vadd.f32 %v1735, %v1736
    %v1738 = vrot.slane %v1737, 4
    %v1739 = vadd.f32 %v1737, %v1738
    %v1740 = vrot.slane %v1739, 2
    %v1741 = vadd.f32 %v1739, %v1740
    %v1742 = vrot.slane %v1741, 1
    %v1743 = vadd.f32 %v1741, %v1742
    %v1744 = vsel %vm1734, %v155, 0.0
    %v1745 = vsel %vm1734, %v156, 0.0
    %v1746 = vadd.f32 %v1744, %v1745
    %v1747 = vrot.slane %v1746, 4
    %v1748 = vadd.f32 %v1746, %v1747
    %v1749 = vrot.slane %v1748, 2
    %v1750 = vadd.f32 %v1748, %v1749
    %v1751 = vrot.slane %v1750, 1
    %v1752 = vadd.f32 %v1750, %v1751
    %v1753 = vsel %vm1734, %v157, 0.0
    %v1754 = vsel %vm1734, %v158, 0.0
    %v1755 = vadd.f32 %v1753, %v1754
    %v1756 = vrot.slane %v1755, 4
    %v1757 = vadd.f32 %v1755, %v1756
    %v1758 = vrot.slane %v1757, 2
    %v1759 = vadd.f32 %v1757, %v1758
    %v1760 = vrot.slane %v1759, 1
    %v1761 = vadd.f32 %v1759, %v1760
    %v1762 = vsel %vm1734, %v159, 0.0
    %v1763 = vsel %vm1734, %v160, 0.0
    %v1764 = vadd.f32 %v1762, %v1763
    %v1765 = vrot.slane %v1764, 4
    %v1766 = vadd.f32 %v1764, %v1765
    %v1767 = vrot.slane %v1766, 2
    %v1768 = vadd.f32 %v1766, %v1767
    %v1769 = vrot.slane %v1768, 1
    %v1770 = vadd.f32 %v1768, %v1769
    %v1771 = vsel %vm1734, %v161, 0.0
    %v1772 = vsel %vm1734, %v162, 0.0
    %v1773 = vadd.f32 %v1771, %v1772
    %v1774 = vrot.slane %v1773, 4
    %v1775 = vadd.f32 %v1773, %v1774
    %v1776 = vrot.slane %v1775, 2
    %v1777 = vadd.f32 %v1775, %v1776
    %v1778 = vrot.slane %v1777, 1
    %v1779 = vadd.f32 %v1777, %v1778
    %v1780 = vsel %vm1734, %v163, 0.0
    %v1781 = vsel %vm1734, %v164, 0.0
    %v1782 = vadd.f32 %v1780, %v1781
    %v1783 = vrot.slane %v1782, 4
    %v1784 = vadd.f32 %v1782, %v1783
    %v1785 = vrot.slane %v1784, 2
    %v1786 = vadd.f32 %v1784, %v1785
    %v1787 = vrot.slane %v1786, 1
    %v1788 = vadd.f32 %v1786, %v1787
    %v1789 = vsel %vm1734, %v165, 0.0
    %v1790 = vsel %vm1734, %v166, 0.0
    %v1791 = vadd.f32 %v1789, %v1790
    %v1792 = vrot.slane %v1791, 4
    %v1793 = vadd.f32 %v1791, %v1792
    %v1794 = vrot.slane %v1793, 2
    %v1795 = vadd.f32 %v1793, %v1794
    %v1796 = vrot.slane %v1795, 1
    %v1797 = vadd.f32 %v1795, %v1796
    %v1798 = vsel %vm1734, %v167, 0.0
    %v1799 = vsel %vm1734, %v168, 0.0
    %v1800 = vadd.f32 %v1798, %v1799
    %v1801 = vrot.slane %v1800, 4
    %v1802 = vadd.f32 %v1800, %v1801
    %v1803 = vrot.slane %v1802, 2
    %v1804 = vadd.f32 %v1802, %v1803
    %v1805 = vrot.slane %v1804, 1
    %v1806 = vadd.f32 %v1804, %v1805
    %v1807 = vsel %vm1734, %v169, 0.0
    %v1808 = vsel %vm1734, %v170, 0.0
    %v1809 = vadd.f32 %v1807, %v1808
    %v1810 = vrot.slane %v1809, 4
    %v1811 = vadd.f32 %v1809, %v1810
    %v1812 = vrot.slane %v1811, 2
    %v1813 = vadd.f32 %v1811, %v1812
    %v1814 = vrot.slane %v1813, 1
    %v1815 = vadd.f32 %v1813, %v1814
    %v1816 = vsel %vm1734, %v171, 0.0
    %v1817 = vsel %vm1734, %v172, 0.0
    %v1818 = vadd.f32 %v1816, %v1817
    %v1819 = vrot.slane %v1818, 4
    %v1820 = vadd.f32 %v1818, %v1819
    %v1821 = vrot.slane %v1820, 2
    %v1822 = vadd.f32 %v1820, %v1821
    %v1823 = vrot.slane %v1822, 1
    %v1824 = vadd.f32 %v1822, %v1823
    %v1825 = vsel %vm1734, %v173, 0.0
    %v1826 = vsel %vm1734, %v174, 0.0
    %v1827 = vadd.f32 %v1825, %v1826
    %v1828 = vrot.slane %v1827, 4
    %v1829 = vadd.f32 %v1827, %v1828
    %v1830 = vrot.slane %v1829, 2
    %v1831 = vadd.f32 %v1829, %v1830
    %v1832 = vrot.slane %v1831, 1
    %v1833 = vadd.f32 %v1831, %v1832
    %v1834 = vsel %vm1734, %v175, 0.0
    %v1835 = vsel %vm1734, %v176, 0.0
    %v1836 = vadd.f32 %v1834, %v1835
    %v1837 = vrot.slane %v1836, 4
    %v1838 = vadd.f32 %v1836, %v1837
    %v1839 = vrot.slane %v1838, 2
    %v1840 = vadd.f32 %v1838, %v1839
    %v1841 = vrot.slane %v1840, 1
    %v1842 = vadd.f32 %v1840, %v1841
    %v1843 = vsel %vm1734, %v177, 0.0
    %v1844 = vsel %vm1734, %v178, 0.0
    %v1845 = vadd.f32 %v1843, %v1844
    %v1846 = vrot.slane %v1845, 4
    %v1847 = vadd.f32 %v1845, %v1846
    %v1848 = vrot.slane %v1847, 2
    %v1849 = vadd.f32 %v1847, %v1848
    %v1850 = vrot.slane %v1849, 1
    %v1851 = vadd.f32 %v1849, %v1850
    %v1852 = vsel %vm1734, %v179, 0.0
    %v1853 = vsel %vm1734, %v180, 0.0
    %v1854 = vadd.f32 %v1852, %v1853
    %v1855 = vrot.slane %v1854, 4
    %v1856 = vadd.f32 %v1854, %v1855
    %v1857 = vrot.slane %v1856, 2
    %v1858 = vadd.f32 %v1856, %v1857
    %v1859 = vrot.slane %v1858, 1
    %v1860 = vadd.f32 %v1858, %v1859
    %v1861 = vsel %vm1734, %v181, 0.0
    %v1862 = vsel %vm1734, %v182, 0.0
    %v1863 = vadd.f32 %v1861, %v1862
    %v1864 = vrot.slane %v1863, 4
    %v1865 = vadd.f32 %v1863, %v1864
    %v1866 = vrot.slane %v1865, 2
    %v1867 = vadd.f32 %v1865, %v1866
    %v1868 = vrot.slane %v1867, 1
    %v1869 = vadd.f32 %v1867, %v1868
    %v1870 = vsel %vm1734, %v183, 0.0
    %v1871 = vsel %vm1734, %v184, 0.0
    %v1872 = vadd.f32 %v1870, %v1871
    %v1873 = vrot.slane %v1872, 4
    %v1874 = vadd.f32 %v1872, %v1873
    %v1875 = vrot.slane %v1874, 2
    %v1876 = vadd.f32 %v1874, %v1875
    %v1877 = vrot.slane %v1876, 1
    %v1878 = vadd.f32 %v1876, %v1877
    %v1895 = vsel %vm1605, %v1752, %v1743
    %v1896 = vsel %vm1607, %v1761, %v1895
    %v1897 = vsel %vm1609, %v1770, %v1896
    %v1898 = vsel %vm1611, %v1779, %v1897
    %v1899 = vsel %vm1613, %v1788, %v1898
    %v1900 = vsel %vm1615, %v1797, %v1899
    %v1901 = vsel %vm1617, %v1806, %v1900
    %v1902 = vsel %vm1605, %v1824, %v1815
    %v1903 = vsel %vm1607, %v1833, %v1902
    %v1904 = vsel %vm1609, %v1842, %v1903
    %v1905 = vsel %vm1611, %v1851, %v1904
    %v1906 = vsel %vm1613, %v1860, %v1905
    %v1907 = vsel %vm1615, %v1869, %v1906
    %v1908 = vsel %vm1617, %v1878, %v1907
    %v1911 = vadd.f32 %v1732, %v1901
    %v1912 = vadd.f32 %v1733, %v1908
    %1913 = vst.msk [vmem:[#allocation3] sm:$0xff] %vm1734, %v1911
    %1914 = vst.msk [vmem:[#allocation3 + $0x8] sm:$0xff] %vm1734, %v1912
    // Predicated region
    $region70: #{tpu_custom_call.1} parent=1 // pred_check
      %p1915 = pneg %p134
    $region71: #{tpu_custom_call.1} parent=1 // pred_check_branch
      %1917 = sbr.rel (%p1915) target = $region73
    $region72: #{tpu_custom_call.1} parent=1 // pred_region
      %v1918 = vld [vmem:[#allocation2] sm:$0xff]
      %v1919 = vld [vmem:[#allocation2 + $0x8] sm:$0xff]
      %v1920 = vld [vmem:[#allocation2 + $0x10] sm:$0xff]
      %v1921 = vld [vmem:[#allocation2 + $0x18] sm:$0xff]
      %v1922 = vld [vmem:[#allocation2 + $0x20] sm:$0xff]
      %v1923 = vld [vmem:[#allocation2 + $0x28] sm:$0xff]
      %v1924 = vld [vmem:[#allocation2 + $0x30] sm:$0xff]
      %v1925 = vld [vmem:[#allocation2 + $0x38] sm:$0xff]
      %v1926 = vld [vmem:[#allocation2 + $0x40] sm:$0xff]
      %v1927 = vld [vmem:[#allocation2 + $0x48] sm:$0xff]
      %v1928 = vld [vmem:[#allocation2 + $0x50] sm:$0xff]
      %v1929 = vld [vmem:[#allocation2 + $0x58] sm:$0xff]
      %v1930 = vld [vmem:[#allocation3] sm:$0xff]
      %v1931 = vld [vmem:[#allocation3 + $0x8] sm:$0xff]
      %v1932 = vmax.f32 %v1930, 1.0
      %v1933 = vmax.f32 %v1931, 1.0
      %1935 = vset.pattern.permute.xlu0 0
      %1936 = vperm.xlu0 %1935, %v1932
      %v1937 = vpop.permute.xlu0 %1936
      %1940 = vset.pattern.permute.xlu0 0
      %1941 = vperm.xlu0 %1940, %v1933
      %v1942 = vpop.permute.xlu0 %1941
      %v1944 = vrcp.pop %v1937
      %v1945 = vmul.f32 %v1918, %v1944
      %v1946 = vmul.f32 %v1919, %v1944
      %v1947 = vmul.f32 %v1920, %v1944
      %v1948 = vmul.f32 %v1921, %v1944
      %v1949 = vmul.f32 %v1922, %v1944
      %v1950 = vmul.f32 %v1923, %v1944
      %v1951 = vrcp.pop %v1942
      %v1952 = vmul.f32 %v1924, %v1951
      %v1953 = vmul.f32 %v1925, %v1951
      %v1954 = vmul.f32 %v1926, %v1951
      %v1955 = vmul.f32 %v1927, %v1951
      %v1956 = vmul.f32 %v1928, %v1951
      %v1957 = vmul.f32 %v1929, %v1951
      %v1958 = vpack.c.bf16 %v1952, %v1945
      %v1959 = vpack.c.bf16 %v1953, %v1946
      %v1960 = vpack.c.bf16 %v1954, %v1947
      %v1961 = vpack.c.bf16 %v1955, %v1948
      %v1962 = vpack.c.bf16 %v1956, %v1949
      %v1963 = vpack.c.bf16 %v1957, %v1950
      %v1964 = vld [vmem:[#allocation9] sm:$0xff]
      %v1965 = vld [vmem:[#allocation9 + $0x8] sm:$0xff]
      %v1966 = vld [vmem:[#allocation9 + $0x10] sm:$0xff]
      %v1967 = vld [vmem:[#allocation9 + $0x18] sm:$0xff]
      %v1968 = vld [vmem:[#allocation9 + $0x20] sm:$0xff]
      %v1969 = vld [vmem:[#allocation9 + $0x28] sm:$0xff]
      %v1970 = vld [vmem:[#allocation9 + $0x30] sm:$0xff]
      %v1971 = vld [vmem:[#allocation9 + $0x38] sm:$0xff]
      %v1972 = vld [vmem:[#allocation9 + $0x40] sm:$0xff]
      %v1973 = vld [vmem:[#allocation9 + $0x48] sm:$0xff]
      %v1974 = vld [vmem:[#allocation9 + $0x50] sm:$0xff]
      %v1975 = vld [vmem:[#allocation9 + $0x58] sm:$0xff]
      %v1976 = vld [vmem:[#allocation9 + $0x60] sm:$0xff]
      %v1977 = vld [vmem:[#allocation9 + $0x68] sm:$0xff]
      %v1978 = vld [vmem:[#allocation9 + $0x70] sm:$0xff]
      %v1979 = vld [vmem:[#allocation9 + $0x78] sm:$0xff]
      %v1980 = vld [vmem:[#allocation9 + $0x80] sm:$0xff]
      %v1981 = vld [vmem:[#allocation9 + $0x88] sm:$0xff]
      %v1982 = vld [vmem:[#allocation9 + $0x90] sm:$0xff]
      %v1983 = vld [vmem:[#allocation9 + $0x98] sm:$0xff]
      %v1984 = vld [vmem:[#allocation9 + $0xa0] sm:$0xff]
      %v1985 = vld [vmem:[#allocation9 + $0xa8] sm:$0xff]
      %v1986 = vld [vmem:[#allocation9 + $0xb0] sm:$0xff]
      %v1987 = vld [vmem:[#allocation9 + $0xb8] sm:$0xff]
      %v1988 = vld [vmem:[#allocation9 + $0xc0] sm:$0xff]
      %v1989 = vld [vmem:[#allocation9 + $0xc8] sm:$0xff]
      %v1990 = vld [vmem:[#allocation9 + $0xd0] sm:$0xff]
      %v1991 = vld [vmem:[#allocation9 + $0xd8] sm:$0xff]
      %v1992 = vld [vmem:[#allocation9 + $0xe0] sm:$0xff]
      %v1993 = vld [vmem:[#allocation9 + $0xe8] sm:$0xff]
      %v1994 = vld [vmem:[#allocation9 + $0xf0] sm:$0xff]
      %v1995 = vld [vmem:[#allocation9 + $0xf8] sm:$0xff]
      %v1996 = vld [vmem:[#allocation9 + $0x100] sm:$0xff]
      %v1997 = vld [vmem:[#allocation9 + $0x108] sm:$0xff]
      %v1998 = vld [vmem:[#allocation9 + $0x110] sm:$0xff]
      %v1999 = vld [vmem:[#allocation9 + $0x118] sm:$0xff]
      %v2000 = vld [vmem:[#allocation9 + $0x120] sm:$0xff]
      %v2001 = vld [vmem:[#allocation9 + $0x128] sm:$0xff]
      %v2002 = vld [vmem:[#allocation9 + $0x130] sm:$0xff]
      %v2003 = vld [vmem:[#allocation9 + $0x138] sm:$0xff]
      %v2004 = vld [vmem:[#allocation9 + $0x140] sm:$0xff]
      %v2005 = vld [vmem:[#allocation9 + $0x148] sm:$0xff]
      %v2006 = vld [vmem:[#allocation9 + $0x150] sm:$0xff]
      %v2007 = vld [vmem:[#allocation9 + $0x158] sm:$0xff]
      %v2008 = vld [vmem:[#allocation9 + $0x160] sm:$0xff]
      %v2009 = vld [vmem:[#allocation9 + $0x168] sm:$0xff]
      %v2010 = vld [vmem:[#allocation9 + $0x170] sm:$0xff]
      %v2011 = vld [vmem:[#allocation9 + $0x178] sm:$0xff]
      %v2012 = vld [vmem:[#allocation9 + $0x180] sm:$0xff]
      %v2013 = vld [vmem:[#allocation9 + $0x188] sm:$0xff]
      %v2014 = vld [vmem:[#allocation9 + $0x190] sm:$0xff]
      %v2015 = vld [vmem:[#allocation9 + $0x198] sm:$0xff]
      %v2016 = vld [vmem:[#allocation9 + $0x1a0] sm:$0xff]
      %v2017 = vld [vmem:[#allocation9 + $0x1a8] sm:$0xff]
      %v2018 = vld [vmem:[#allocation9 + $0x1b0] sm:$0xff]
      %v2019 = vld [vmem:[#allocation9 + $0x1b8] sm:$0xff]
      %v2020 = vld [vmem:[#allocation9 + $0x1c0] sm:$0xff]
      %v2021 = vld [vmem:[#allocation9 + $0x1c8] sm:$0xff]
      %v2022 = vld [vmem:[#allocation9 + $0x1d0] sm:$0xff]
      %v2023 = vld [vmem:[#allocation9 + $0x1d8] sm:$0xff]
      %v2024 = vld [vmem:[#allocation9 + $0x1e0] sm:$0xff]
      %v2025 = vld [vmem:[#allocation9 + $0x1e8] sm:$0xff]
      %v2026 = vld [vmem:[#allocation9 + $0x1f0] sm:$0xff]
      %v2027 = vld [vmem:[#allocation9 + $0x1f8] sm:$0xff]
      %v2028 = vld [vmem:[#allocation9 + $0x200] sm:$0xff]
      %v2029 = vld [vmem:[#allocation9 + $0x208] sm:$0xff]
      %v2030 = vld [vmem:[#allocation9 + $0x210] sm:$0xff]
      %v2031 = vld [vmem:[#allocation9 + $0x218] sm:$0xff]
      %v2032 = vld [vmem:[#allocation9 + $0x220] sm:$0xff]
      %v2033 = vld [vmem:[#allocation9 + $0x228] sm:$0xff]
      %v2034 = vld [vmem:[#allocation9 + $0x230] sm:$0xff]
      %v2035 = vld [vmem:[#allocation9 + $0x238] sm:$0xff]
      %v2036 = vld [vmem:[#allocation9 + $0x240] sm:$0xff]
      %v2037 = vld [vmem:[#allocation9 + $0x248] sm:$0xff]
      %v2038 = vld [vmem:[#allocation9 + $0x250] sm:$0xff]
      %v2039 = vld [vmem:[#allocation9 + $0x258] sm:$0xff]
      %v2040 = vld [vmem:[#allocation9 + $0x260] sm:$0xff]
      %v2041 = vld [vmem:[#allocation9 + $0x268] sm:$0xff]
      %v2042 = vld [vmem:[#allocation9 + $0x270] sm:$0xff]
      %v2043 = vld [vmem:[#allocation9 + $0x278] sm:$0xff]
      %v2044 = vld [vmem:[#allocation9 + $0x280] sm:$0xff]
      %v2045 = vld [vmem:[#allocation9 + $0x288] sm:$0xff]
      %v2046 = vld [vmem:[#allocation9 + $0x290] sm:$0xff]
      %v2047 = vld [vmem:[#allocation9 + $0x298] sm:$0xff]
      %v2048 = vld [vmem:[#allocation9 + $0x2a0] sm:$0xff]
      %v2049 = vld [vmem:[#allocation9 + $0x2a8] sm:$0xff]
      %v2050 = vld [vmem:[#allocation9 + $0x2b0] sm:$0xff]
      %v2051 = vld [vmem:[#allocation9 + $0x2b8] sm:$0xff]
      %v2052 = vld [vmem:[#allocation9 + $0x2c0] sm:$0xff]
      %v2053 = vld [vmem:[#allocation9 + $0x2c8] sm:$0xff]
      %v2054 = vld [vmem:[#allocation9 + $0x2d0] sm:$0xff]
      %v2055 = vld [vmem:[#allocation9 + $0x2d8] sm:$0xff]
      %v2056 = vld [vmem:[#allocation9 + $0x2e0] sm:$0xff]
      %v2057 = vld [vmem:[#allocation9 + $0x2e8] sm:$0xff]
      %v2058 = vld [vmem:[#allocation9 + $0x2f0] sm:$0xff]
      %v2059 = vld [vmem:[#allocation9 + $0x2f8] sm:$0xff]
      %v2060 = vld [vmem:[#allocation9 + $0x300] sm:$0xff]
      %v2061 = vld [vmem:[#allocation9 + $0x308] sm:$0xff]
      %v2062 = vld [vmem:[#allocation9 + $0x310] sm:$0xff]
      %v2063 = vld [vmem:[#allocation9 + $0x318] sm:$0xff]
      %v2064 = vld [vmem:[#allocation9 + $0x320] sm:$0xff]
      %v2065 = vld [vmem:[#allocation9 + $0x328] sm:$0xff]
      %v2066 = vld [vmem:[#allocation9 + $0x330] sm:$0xff]
      %v2067 = vld [vmem:[#allocation9 + $0x338] sm:$0xff]
      %v2068 = vld [vmem:[#allocation9 + $0x340] sm:$0xff]
      %v2069 = vld [vmem:[#allocation9 + $0x348] sm:$0xff]
      %v2070 = vld [vmem:[#allocation9 + $0x350] sm:$0xff]
      %v2071 = vld [vmem:[#allocation9 + $0x358] sm:$0xff]
      %v2072 = vld [vmem:[#allocation9 + $0x360] sm:$0xff]
      %v2073 = vld [vmem:[#allocation9 + $0x368] sm:$0xff]
      %v2074 = vld [vmem:[#allocation9 + $0x370] sm:$0xff]
      %v2075 = vld [vmem:[#allocation9 + $0x378] sm:$0xff]
      %v2076 = vld [vmem:[#allocation9 + $0x380] sm:$0xff]
      %v2077 = vld [vmem:[#allocation9 + $0x388] sm:$0xff]
      %v2078 = vld [vmem:[#allocation9 + $0x390] sm:$0xff]
      %v2079 = vld [vmem:[#allocation9 + $0x398] sm:$0xff]
      %v2080 = vld [vmem:[#allocation9 + $0x3a0] sm:$0xff]
      %v2081 = vld [vmem:[#allocation9 + $0x3a8] sm:$0xff]
      %v2082 = vld [vmem:[#allocation9 + $0x3b0] sm:$0xff]
      %v2083 = vld [vmem:[#allocation9 + $0x3b8] sm:$0xff]
      %v2084 = vld [vmem:[#allocation9 + $0x3c0] sm:$0xff]
      %v2085 = vld [vmem:[#allocation9 + $0x3c8] sm:$0xff]
      %v2086 = vld [vmem:[#allocation9 + $0x3d0] sm:$0xff]
      %v2087 = vld [vmem:[#allocation9 + $0x3d8] sm:$0xff]
      %v2088 = vld [vmem:[#allocation9 + $0x3e0] sm:$0xff]
      %v2089 = vld [vmem:[#allocation9 + $0x3e8] sm:$0xff]
      %v2090 = vld [vmem:[#allocation9 + $0x3f0] sm:$0xff]
      %v2091 = vld [vmem:[#allocation9 + $0x3f8] sm:$0xff]
      %v2092 = vld [vmem:[#allocation9 + $0x400] sm:$0xff]
      %v2093 = vld [vmem:[#allocation9 + $0x408] sm:$0xff]
      %v2094 = vld [vmem:[#allocation9 + $0x410] sm:$0xff]
      %v2095 = vld [vmem:[#allocation9 + $0x418] sm:$0xff]
      %v2096 = vld [vmem:[#allocation9 + $0x420] sm:$0xff]
      %v2097 = vld [vmem:[#allocation9 + $0x428] sm:$0xff]
      %v2098 = vld [vmem:[#allocation9 + $0x430] sm:$0xff]
      %v2099 = vld [vmem:[#allocation9 + $0x438] sm:$0xff]
      %v2100 = vld [vmem:[#allocation9 + $0x440] sm:$0xff]
      %v2101 = vld [vmem:[#allocation9 + $0x448] sm:$0xff]
      %v2102 = vld [vmem:[#allocation9 + $0x450] sm:$0xff]
      %v2103 = vld [vmem:[#allocation9 + $0x458] sm:$0xff]
      %v2104 = vld [vmem:[#allocation9 + $0x460] sm:$0xff]
      %v2105 = vld [vmem:[#allocation9 + $0x468] sm:$0xff]
      %v2106 = vld [vmem:[#allocation9 + $0x470] sm:$0xff]
      %v2107 = vld [vmem:[#allocation9 + $0x478] sm:$0xff]
      %v2108 = vld [vmem:[#allocation9 + $0x480] sm:$0xff]
      %v2109 = vld [vmem:[#allocation9 + $0x488] sm:$0xff]
      %v2110 = vld [vmem:[#allocation9 + $0x490] sm:$0xff]
      %v2111 = vld [vmem:[#allocation9 + $0x498] sm:$0xff]
      %v2112 = vld [vmem:[#allocation9 + $0x4a0] sm:$0xff]
      %v2113 = vld [vmem:[#allocation9 + $0x4a8] sm:$0xff]
      %v2114 = vld [vmem:[#allocation9 + $0x4b0] sm:$0xff]
      %v2115 = vld [vmem:[#allocation9 + $0x4b8] sm:$0xff]
      %v2116 = vld [vmem:[#allocation9 + $0x4c0] sm:$0xff]
      %v2117 = vld [vmem:[#allocation9 + $0x4c8] sm:$0xff]
      %v2118 = vld [vmem:[#allocation9 + $0x4d0] sm:$0xff]
      %v2119 = vld [vmem:[#allocation9 + $0x4d8] sm:$0xff]
      %v2120 = vld [vmem:[#allocation9 + $0x4e0] sm:$0xff]
      %v2121 = vld [vmem:[#allocation9 + $0x4e8] sm:$0xff]
      %v2122 = vld [vmem:[#allocation9 + $0x4f0] sm:$0xff]
      %v2123 = vld [vmem:[#allocation9 + $0x4f8] sm:$0xff]
      %v2124 = vld [vmem:[#allocation9 + $0x500] sm:$0xff]
      %v2125 = vld [vmem:[#allocation9 + $0x508] sm:$0xff]
      %v2126 = vld [vmem:[#allocation9 + $0x510] sm:$0xff]
      %v2127 = vld [vmem:[#allocation9 + $0x518] sm:$0xff]
      %v2128 = vld [vmem:[#allocation9 + $0x520] sm:$0xff]
      %v2129 = vld [vmem:[#allocation9 + $0x528] sm:$0xff]
      %v2130 = vld [vmem:[#allocation9 + $0x530] sm:$0xff]
      %v2131 = vld [vmem:[#allocation9 + $0x538] sm:$0xff]
      %v2132 = vld [vmem:[#allocation9 + $0x540] sm:$0xff]
      %v2133 = vld [vmem:[#allocation9 + $0x548] sm:$0xff]
      %v2134 = vld [vmem:[#allocation9 + $0x550] sm:$0xff]
      %v2135 = vld [vmem:[#allocation9 + $0x558] sm:$0xff]
      %v2136 = vld [vmem:[#allocation9 + $0x560] sm:$0xff]
      %v2137 = vld [vmem:[#allocation9 + $0x568] sm:$0xff]
      %v2138 = vld [vmem:[#allocation9 + $0x570] sm:$0xff]
      %v2139 = vld [vmem:[#allocation9 + $0x578] sm:$0xff]
      %v2140 = vld [vmem:[#allocation9 + $0x580] sm:$0xff]
      %v2141 = vld [vmem:[#allocation9 + $0x588] sm:$0xff]
      %v2142 = vld [vmem:[#allocation9 + $0x590] sm:$0xff]
      %v2143 = vld [vmem:[#allocation9 + $0x598] sm:$0xff]
      %v2144 = vld [vmem:[#allocation9 + $0x5a0] sm:$0xff]
      %v2145 = vld [vmem:[#allocation9 + $0x5a8] sm:$0xff]
      %v2146 = vld [vmem:[#allocation9 + $0x5b0] sm:$0xff]
      %v2147 = vld [vmem:[#allocation9 + $0x5b8] sm:$0xff]
      %v2148 = vld [vmem:[#allocation9 + $0x5c0] sm:$0xff]
      %v2149 = vld [vmem:[#allocation9 + $0x5c8] sm:$0xff]
      %v2150 = vld [vmem:[#allocation9 + $0x5d0] sm:$0xff]
      %v2151 = vld [vmem:[#allocation9 + $0x5d8] sm:$0xff]
      %v2152 = vld [vmem:[#allocation9 + $0x5e0] sm:$0xff]
      %v2153 = vld [vmem:[#allocation9 + $0x5e8] sm:$0xff]
      %v2154 = vld [vmem:[#allocation9 + $0x5f0] sm:$0xff]
      %v2155 = vld [vmem:[#allocation9 + $0x5f8] sm:$0xff]
      %v2156 = vld [vmem:[#allocation9 + $0x600] sm:$0xff]
      %v2157 = vld [vmem:[#allocation9 + $0x608] sm:$0xff]
      %v2158 = vld [vmem:[#allocation9 + $0x610] sm:$0xff]
      %v2159 = vld [vmem:[#allocation9 + $0x618] sm:$0xff]
      %v2160 = vld [vmem:[#allocation9 + $0x620] sm:$0xff]
      %v2161 = vld [vmem:[#allocation9 + $0x628] sm:$0xff]
      %v2162 = vld [vmem:[#allocation9 + $0x630] sm:$0xff]
      %v2163 = vld [vmem:[#allocation9 + $0x638] sm:$0xff]
      %v2164 = vld [vmem:[#allocation9 + $0x640] sm:$0xff]
      %v2165 = vld [vmem:[#allocation9 + $0x648] sm:$0xff]
      %v2166 = vld [vmem:[#allocation9 + $0x650] sm:$0xff]
      %v2167 = vld [vmem:[#allocation9 + $0x658] sm:$0xff]
      %v2168 = vld [vmem:[#allocation9 + $0x660] sm:$0xff]
      %v2169 = vld [vmem:[#allocation9 + $0x668] sm:$0xff]
      %v2170 = vld [vmem:[#allocation9 + $0x670] sm:$0xff]
      %v2171 = vld [vmem:[#allocation9 + $0x678] sm:$0xff]
      %v2172 = vld [vmem:[#allocation9 + $0x680] sm:$0xff]
      %v2173 = vld [vmem:[#allocation9 + $0x688] sm:$0xff]
      %v2174 = vld [vmem:[#allocation9 + $0x690] sm:$0xff]
      %v2175 = vld [vmem:[#allocation9 + $0x698] sm:$0xff]
      %v2176 = vld [vmem:[#allocation9 + $0x6a0] sm:$0xff]
      %v2177 = vld [vmem:[#allocation9 + $0x6a8] sm:$0xff]
      %v2178 = vld [vmem:[#allocation9 + $0x6b0] sm:$0xff]
      %v2179 = vld [vmem:[#allocation9 + $0x6b8] sm:$0xff]
      %v2180 = vld [vmem:[#allocation9 + $0x6c0] sm:$0xff]
      %v2181 = vld [vmem:[#allocation9 + $0x6c8] sm:$0xff]
      %v2182 = vld [vmem:[#allocation9 + $0x6d0] sm:$0xff]
      %v2183 = vld [vmem:[#allocation9 + $0x6d8] sm:$0xff]
      %v2184 = vld [vmem:[#allocation9 + $0x6e0] sm:$0xff]
      %v2185 = vld [vmem:[#allocation9 + $0x6e8] sm:$0xff]
      %v2186 = vld [vmem:[#allocation9 + $0x6f0] sm:$0xff]
      %v2187 = vld [vmem:[#allocation9 + $0x6f8] sm:$0xff]
      %v2188 = vld [vmem:[#allocation9 + $0x700] sm:$0xff]
      %v2189 = vld [vmem:[#allocation9 + $0x708] sm:$0xff]
      %v2190 = vld [vmem:[#allocation9 + $0x710] sm:$0xff]
      %v2191 = vld [vmem:[#allocation9 + $0x718] sm:$0xff]
      %v2192 = vld [vmem:[#allocation9 + $0x720] sm:$0xff]
      %v2193 = vld [vmem:[#allocation9 + $0x728] sm:$0xff]
      %v2194 = vld [vmem:[#allocation9 + $0x730] sm:$0xff]
      %v2195 = vld [vmem:[#allocation9 + $0x738] sm:$0xff]
      %v2196 = vld [vmem:[#allocation9 + $0x740] sm:$0xff]
      %v2197 = vld [vmem:[#allocation9 + $0x748] sm:$0xff]
      %v2198 = vld [vmem:[#allocation9 + $0x750] sm:$0xff]
      %v2199 = vld [vmem:[#allocation9 + $0x758] sm:$0xff]
      %v2200 = vld [vmem:[#allocation9 + $0x760] sm:$0xff]
      %v2201 = vld [vmem:[#allocation9 + $0x768] sm:$0xff]
      %v2202 = vld [vmem:[#allocation9 + $0x770] sm:$0xff]
      %v2203 = vld [vmem:[#allocation9 + $0x778] sm:$0xff]
      %v2204 = vld [vmem:[#allocation9 + $0x780] sm:$0xff]
      %v2205 = vld [vmem:[#allocation9 + $0x788] sm:$0xff]
      %v2206 = vld [vmem:[#allocation9 + $0x790] sm:$0xff]
      %v2207 = vld [vmem:[#allocation9 + $0x798] sm:$0xff]
      %v2208 = vld [vmem:[#allocation9 + $0x7a0] sm:$0xff]
      %v2209 = vld [vmem:[#allocation9 + $0x7a8] sm:$0xff]
      %v2210 = vld [vmem:[#allocation9 + $0x7b0] sm:$0xff]
      %v2211 = vld [vmem:[#allocation9 + $0x7b8] sm:$0xff]
      %v2212 = vld [vmem:[#allocation9 + $0x7c0] sm:$0xff]
      %v2213 = vld [vmem:[#allocation9 + $0x7c8] sm:$0xff]
      %v2214 = vld [vmem:[#allocation9 + $0x7d0] sm:$0xff]
      %v2215 = vld [vmem:[#allocation9 + $0x7d8] sm:$0xff]
      %v2216 = vld [vmem:[#allocation9 + $0x7e0] sm:$0xff]
      %v2217 = vld [vmem:[#allocation9 + $0x7e8] sm:$0xff]
      %v2218 = vld [vmem:[#allocation9 + $0x7f0] sm:$0xff]
      %v2219 = vld [vmem:[#allocation9 + $0x7f8] sm:$0xff]
      %v2220 = vld [vmem:[#allocation9 + $0x800] sm:$0xff]
      %v2221 = vld [vmem:[#allocation9 + $0x808] sm:$0xff]
      %v2222 = vld [vmem:[#allocation9 + $0x810] sm:$0xff]
      %v2223 = vld [vmem:[#allocation9 + $0x818] sm:$0xff]
      %v2224 = vld [vmem:[#allocation9 + $0x820] sm:$0xff]
      %v2225 = vld [vmem:[#allocation9 + $0x828] sm:$0xff]
      %v2226 = vld [vmem:[#allocation9 + $0x830] sm:$0xff]
      %v2227 = vld [vmem:[#allocation9 + $0x838] sm:$0xff]
      %v2228 = vld [vmem:[#allocation9 + $0x840] sm:$0xff]
      %v2229 = vld [vmem:[#allocation9 + $0x848] sm:$0xff]
      %v2230 = vld [vmem:[#allocation9 + $0x850] sm:$0xff]
      %v2231 = vld [vmem:[#allocation9 + $0x858] sm:$0xff]
      %v2232 = vld [vmem:[#allocation9 + $0x860] sm:$0xff]
      %v2233 = vld [vmem:[#allocation9 + $0x868] sm:$0xff]
      %v2234 = vld [vmem:[#allocation9 + $0x870] sm:$0xff]
      %v2235 = vld [vmem:[#allocation9 + $0x878] sm:$0xff]
      %v2236 = vld [vmem:[#allocation9 + $0x880] sm:$0xff]
      %v2237 = vld [vmem:[#allocation9 + $0x888] sm:$0xff]
      %v2238 = vld [vmem:[#allocation9 + $0x890] sm:$0xff]
      %v2239 = vld [vmem:[#allocation9 + $0x898] sm:$0xff]
      %v2240 = vld [vmem:[#allocation9 + $0x8a0] sm:$0xff]
      %v2241 = vld [vmem:[#allocation9 + $0x8a8] sm:$0xff]
      %v2242 = vld [vmem:[#allocation9 + $0x8b0] sm:$0xff]
      %v2243 = vld [vmem:[#allocation9 + $0x8b8] sm:$0xff]
      %v2244 = vld [vmem:[#allocation9 + $0x8c0] sm:$0xff]
      %v2245 = vld [vmem:[#allocation9 + $0x8c8] sm:$0xff]
      %v2246 = vld [vmem:[#allocation9 + $0x8d0] sm:$0xff]
      %v2247 = vld [vmem:[#allocation9 + $0x8d8] sm:$0xff]
      %v2248 = vld [vmem:[#allocation9 + $0x8e0] sm:$0xff]
      %v2249 = vld [vmem:[#allocation9 + $0x8e8] sm:$0xff]
      %v2250 = vld [vmem:[#allocation9 + $0x8f0] sm:$0xff]
      %v2251 = vld [vmem:[#allocation9 + $0x8f8] sm:$0xff]
      %v2252 = vld [vmem:[#allocation10] sm:$0x3f]
      %v2254 = vlaneseq
      %v2255 = vshrl.u32 %v2254, 7
      %v2256 = vsub.s32 0, %v2255
      %v2257 = vrot.slane %v2252, %v2256
      %v2258 = vlaneseq
      %v2259 = vshrl.u32 %v2258, 7
      %v2260 = vsub.s32 1, %v2259
      %v2261 = vrot.slane %v2252, %v2260
      %v2262 = vlaneseq
      %v2263 = vshrl.u32 %v2262, 7
      %v2264 = vsub.s32 2, %v2263
      %v2265 = vrot.slane %v2252, %v2264
      %v2266 = vlaneseq
      %v2267 = vshrl.u32 %v2266, 7
      %v2268 = vsub.s32 3, %v2267
      %v2269 = vrot.slane %v2252, %v2268
      %v2270 = vlaneseq
      %v2271 = vshrl.u32 %v2270, 7
      %v2272 = vsub.s32 4, %v2271
      %v2273 = vrot.slane %v2252, %v2272
      %v2274 = vlaneseq
      %v2275 = vshrl.u32 %v2274, 7
      %v2276 = vsub.s32 5, %v2275
      %v2277 = vrot.slane %v2252, %v2276
      %v2572 = vunpack.c.l.b16 %v1964
      %v2573 = vunpack.c.h.b16 %v1964
      %v2574 = vunpack.c.l.b16 %v1965
      %v2575 = vunpack.c.h.b16 %v1965
      %v2576 = vunpack.c.l.b16 %v1966
      %v2577 = vunpack.c.h.b16 %v1966
      %v2578 = vunpack.c.l.b16 %v1967
      %v2579 = vunpack.c.h.b16 %v1967
      %v2580 = vunpack.c.l.b16 %v1968
      %v2581 = vunpack.c.h.b16 %v1968
      %v2582 = vunpack.c.l.b16 %v1969
      %v2583 = vunpack.c.h.b16 %v1969
      %v2584 = vunpack.c.l.b16 %v1970
      %v2585 = vunpack.c.h.b16 %v1970
      %v2586 = vunpack.c.l.b16 %v1971
      %v2587 = vunpack.c.h.b16 %v1971
      %v2588 = vunpack.c.l.b16 %v1972
      %v2589 = vunpack.c.h.b16 %v1972
      %v2590 = vunpack.c.l.b16 %v1973
      %v2591 = vunpack.c.h.b16 %v1973
      %v2592 = vunpack.c.l.b16 %v1974
      %v2593 = vunpack.c.h.b16 %v1974
      %v2594 = vunpack.c.l.b16 %v1975
      %v2595 = vunpack.c.h.b16 %v1975
      %v2596 = vunpack.c.l.b16 %v1976
      %v2597 = vunpack.c.h.b16 %v1976
      %v2598 = vunpack.c.l.b16 %v1977
      %v2599 = vunpack.c.h.b16 %v1977
      %v2600 = vunpack.c.l.b16 %v1978
      %v2601 = vunpack.c.h.b16 %v1978
      %v2602 = vunpack.c.l.b16 %v1979
      %v2603 = vunpack.c.h.b16 %v1979
      %v2604 = vunpack.c.l.b16 %v1980
      %v2605 = vunpack.c.h.b16 %v1980
      %v2606 = vunpack.c.l.b16 %v1981
      %v2607 = vunpack.c.h.b16 %v1981
      %v2608 = vunpack.c.l.b16 %v1982
      %v2609 = vunpack.c.h.b16 %v1982
      %v2610 = vunpack.c.l.b16 %v1983
      %v2611 = vunpack.c.h.b16 %v1983
      %v2612 = vunpack.c.l.b16 %v1984
      %v2613 = vunpack.c.h.b16 %v1984
      %v2614 = vunpack.c.l.b16 %v1985
      %v2615 = vunpack.c.h.b16 %v1985
      %v2616 = vunpack.c.l.b16 %v1986
      %v2617 = vunpack.c.h.b16 %v1986
      %v2618 = vunpack.c.l.b16 %v1987
      %v2619 = vunpack.c.h.b16 %v1987
      %v2620 = vunpack.c.l.b16 %v1988
      %v2621 = vunpack.c.h.b16 %v1988
      %v2622 = vunpack.c.l.b16 %v1989
      %v2623 = vunpack.c.h.b16 %v1989
      %v2624 = vunpack.c.l.b16 %v1990
      %v2625 = vunpack.c.h.b16 %v1990
      %v2626 = vunpack.c.l.b16 %v1991
      %v2627 = vunpack.c.h.b16 %v1991
      %v2628 = vunpack.c.l.b16 %v1992
      %v2629 = vunpack.c.h.b16 %v1992
      %v2630 = vunpack.c.l.b16 %v1993
      %v2631 = vunpack.c.h.b16 %v1993
      %v2632 = vunpack.c.l.b16 %v1994
      %v2633 = vunpack.c.h.b16 %v1994
      %v2634 = vunpack.c.l.b16 %v1995
      %v2635 = vunpack.c.h.b16 %v1995
      %v2636 = vunpack.c.l.b16 %v1996
      %v2637 = vunpack.c.h.b16 %v1996
      %v2638 = vunpack.c.l.b16 %v1997
      %v2639 = vunpack.c.h.b16 %v1997
      %v2640 = vunpack.c.l.b16 %v1998
      %v2641 = vunpack.c.h.b16 %v1998
      %v2642 = vunpack.c.l.b16 %v1999
      %v2643 = vunpack.c.h.b16 %v1999
      %v2644 = vunpack.c.l.b16 %v2000
      %v2645 = vunpack.c.h.b16 %v2000
      %v2646 = vunpack.c.l.b16 %v2001
      %v2647 = vunpack.c.h.b16 %v2001
      %v2648 = vunpack.c.l.b16 %v2002
      %v2649 = vunpack.c.h.b16 %v2002
      %v2650 = vunpack.c.l.b16 %v2003
      %v2651 = vunpack.c.h.b16 %v2003
      %v2652 = vunpack.c.l.b16 %v2004
      %v2653 = vunpack.c.h.b16 %v2004
      %v2654 = vunpack.c.l.b16 %v2005
      %v2655 = vunpack.c.h.b16 %v2005
      %v2656 = vunpack.c.l.b16 %v2006
      %v2657 = vunpack.c.h.b16 %v2006
      %v2658 = vunpack.c.l.b16 %v2007
      %v2659 = vunpack.c.h.b16 %v2007
      %v2660 = vunpack.c.l.b16 %v2008
      %v2661 = vunpack.c.h.b16 %v2008
      %v2662 = vunpack.c.l.b16 %v2009
      %v2663 = vunpack.c.h.b16 %v2009
      %v2664 = vunpack.c.l.b16 %v2010
      %v2665 = vunpack.c.h.b16 %v2010
      %v2666 = vunpack.c.l.b16 %v2011
      %v2667 = vunpack.c.h.b16 %v2011
      %v2668 = vunpack.c.l.b16 %v2012
      %v2669 = vunpack.c.h.b16 %v2012
      %v2670 = vunpack.c.l.b16 %v2013
      %v2671 = vunpack.c.h.b16 %v2013
      %v2672 = vunpack.c.l.b16 %v2014
      %v2673 = vunpack.c.h.b16 %v2014
      %v2674 = vunpack.c.l.b16 %v2015
      %v2675 = vunpack.c.h.b16 %v2015
      %v2676 = vunpack.c.l.b16 %v2016
      %v2677 = vunpack.c.h.b16 %v2016
      %v2678 = vunpack.c.l.b16 %v2017
      %v2679 = vunpack.c.h.b16 %v2017
      %v2680 = vunpack.c.l.b16 %v2018
      %v2681 = vunpack.c.h.b16 %v2018
      %v2682 = vunpack.c.l.b16 %v2019
      %v2683 = vunpack.c.h.b16 %v2019
      %v2684 = vunpack.c.l.b16 %v2020
      %v2685 = vunpack.c.h.b16 %v2020
      %v2686 = vunpack.c.l.b16 %v2021
      %v2687 = vunpack.c.h.b16 %v2021
      %v2688 = vunpack.c.l.b16 %v2022
      %v2689 = vunpack.c.h.b16 %v2022
      %v2690 = vunpack.c.l.b16 %v2023
      %v2691 = vunpack.c.h.b16 %v2023
      %v2692 = vunpack.c.l.b16 %v2024
      %v2693 = vunpack.c.h.b16 %v2024
      %v2694 = vunpack.c.l.b16 %v2025
      %v2695 = vunpack.c.h.b16 %v2025
      %v2696 = vunpack.c.l.b16 %v2026
      %v2697 = vunpack.c.h.b16 %v2026
      %v2698 = vunpack.c.l.b16 %v2027
      %v2699 = vunpack.c.h.b16 %v2027
      %v2700 = vunpack.c.l.b16 %v2028
      %v2701 = vunpack.c.h.b16 %v2028
      %v2702 = vunpack.c.l.b16 %v2029
      %v2703 = vunpack.c.h.b16 %v2029
      %v2704 = vunpack.c.l.b16 %v2030
      %v2705 = vunpack.c.h.b16 %v2030
      %v2706 = vunpack.c.l.b16 %v2031
      %v2707 = vunpack.c.h.b16 %v2031
      %v2708 = vunpack.c.l.b16 %v2032
      %v2709 = vunpack.c.h.b16 %v2032
      %v2710 = vunpack.c.l.b16 %v2033
      %v2711 = vunpack.c.h.b16 %v2033
      %v2712 = vunpack.c.l.b16 %v2034
      %v2713 = vunpack.c.h.b16 %v2034
      %v2714 = vunpack.c.l.b16 %v2035
      %v2715 = vunpack.c.h.b16 %v2035
      %v2716 = vunpack.c.l.b16 %v2036
      %v2717 = vunpack.c.h.b16 %v2036
      %v2718 = vunpack.c.l.b16 %v2037
      %v2719 = vunpack.c.h.b16 %v2037
      %v2720 = vunpack.c.l.b16 %v2038
      %v2721 = vunpack.c.h.b16 %v2038
      %v2722 = vunpack.c.l.b16 %v2039
      %v2723 = vunpack.c.h.b16 %v2039
      %v2724 = vunpack.c.l.b16 %v2040
      %v2725 = vunpack.c.h.b16 %v2040
      %v2726 = vunpack.c.l.b16 %v2041
      %v2727 = vunpack.c.h.b16 %v2041
      %v2728 = vunpack.c.l.b16 %v2042
      %v2729 = vunpack.c.h.b16 %v2042
      %v2730 = vunpack.c.l.b16 %v2043
      %v2731 = vunpack.c.h.b16 %v2043
      %v2732 = vunpack.c.l.b16 %v2044
      %v2733 = vunpack.c.h.b16 %v2044
      %v2734 = vunpack.c.l.b16 %v2045
      %v2735 = vunpack.c.h.b16 %v2045
      %v2736 = vunpack.c.l.b16 %v2046
      %v2737 = vunpack.c.h.b16 %v2046
      %v2738 = vunpack.c.l.b16 %v2047
      %v2739 = vunpack.c.h.b16 %v2047
      %v2740 = vunpack.c.l.b16 %v2048
      %v2741 = vunpack.c.h.b16 %v2048
      %v2742 = vunpack.c.l.b16 %v2049
      %v2743 = vunpack.c.h.b16 %v2049
      %v2744 = vunpack.c.l.b16 %v2050
      %v2745 = vunpack.c.h.b16 %v2050
      %v2746 = vunpack.c.l.b16 %v2051
      %v2747 = vunpack.c.h.b16 %v2051
      %v2748 = vunpack.c.l.b16 %v2052
      %v2749 = vunpack.c.h.b16 %v2052
      %v2750 = vunpack.c.l.b16 %v2053
      %v2751 = vunpack.c.h.b16 %v2053
      %v2752 = vunpack.c.l.b16 %v2054
      %v2753 = vunpack.c.h.b16 %v2054
      %v2754 = vunpack.c.l.b16 %v2055
      %v2755 = vunpack.c.h.b16 %v2055
      %v2756 = vunpack.c.l.b16 %v2056
      %v2757 = vunpack.c.h.b16 %v2056
      %v2758 = vunpack.c.l.b16 %v2057
      %v2759 = vunpack.c.h.b16 %v2057
      %v2760 = vunpack.c.l.b16 %v2058
      %v2761 = vunpack.c.h.b16 %v2058
      %v2762 = vunpack.c.l.b16 %v2059
      %v2763 = vunpack.c.h.b16 %v2059
      %v2764 = vunpack.c.l.b16 %v2060
      %v2765 = vunpack.c.h.b16 %v2060
      %v2766 = vunpack.c.l.b16 %v2061
      %v2767 = vunpack.c.h.b16 %v2061
      %v2768 = vunpack.c.l.b16 %v2062
      %v2769 = vunpack.c.h.b16 %v2062
      %v2770 = vunpack.c.l.b16 %v2063
      %v2771 = vunpack.c.h.b16 %v2063
      %v2772 = vunpack.c.l.b16 %v2064
      %v2773 = vunpack.c.h.b16 %v2064
      %v2774 = vunpack.c.l.b16 %v2065
      %v2775 = vunpack.c.h.b16 %v2065
      %v2776 = vunpack.c.l.b16 %v2066
      %v2777 = vunpack.c.h.b16 %v2066
      %v2778 = vunpack.c.l.b16 %v2067
      %v2779 = vunpack.c.h.b16 %v2067
      %v2780 = vunpack.c.l.b16 %v2068
      %v2781 = vunpack.c.h.b16 %v2068
      %v2782 = vunpack.c.l.b16 %v2069
      %v2783 = vunpack.c.h.b16 %v2069
      %v2784 = vunpack.c.l.b16 %v2070
      %v2785 = vunpack.c.h.b16 %v2070
      %v2786 = vunpack.c.l.b16 %v2071
      %v2787 = vunpack.c.h.b16 %v2071
      %v2788 = vunpack.c.l.b16 %v2072
      %v2789 = vunpack.c.h.b16 %v2072
      %v2790 = vunpack.c.l.b16 %v2073
      %v2791 = vunpack.c.h.b16 %v2073
      %v2792 = vunpack.c.l.b16 %v2074
      %v2793 = vunpack.c.h.b16 %v2074
      %v2794 = vunpack.c.l.b16 %v2075
      %v2795 = vunpack.c.h.b16 %v2075
      %v2796 = vunpack.c.l.b16 %v2076
      %v2797 = vunpack.c.h.b16 %v2076
      %v2798 = vunpack.c.l.b16 %v2077
      %v2799 = vunpack.c.h.b16 %v2077
      %v2800 = vunpack.c.l.b16 %v2078
      %v2801 = vunpack.c.h.b16 %v2078
      %v2802 = vunpack.c.l.b16 %v2079
      %v2803 = vunpack.c.h.b16 %v2079
      %v2804 = vunpack.c.l.b16 %v2080
      %v2805 = vunpack.c.h.b16 %v2080
      %v2806 = vunpack.c.l.b16 %v2081
      %v2807 = vunpack.c.h.b16 %v2081
      %v2808 = vunpack.c.l.b16 %v2082
      %v2809 = vunpack.c.h.b16 %v2082
      %v2810 = vunpack.c.l.b16 %v2083
      %v2811 = vunpack.c.h.b16 %v2083
      %v2812 = vunpack.c.l.b16 %v2084
      %v2813 = vunpack.c.h.b16 %v2084
      %v2814 = vunpack.c.l.b16 %v2085
      %v2815 = vunpack.c.h.b16 %v2085
      %v2816 = vunpack.c.l.b16 %v2086
      %v2817 = vunpack.c.h.b16 %v2086
      %v2818 = vunpack.c.l.b16 %v2087
      %v2819 = vunpack.c.h.b16 %v2087
      %v2820 = vunpack.c.l.b16 %v2088
      %v2821 = vunpack.c.h.b16 %v2088
      %v2822 = vunpack.c.l.b16 %v2089
      %v2823 = vunpack.c.h.b16 %v2089
      %v2824 = vunpack.c.l.b16 %v2090
      %v2825 = vunpack.c.h.b16 %v2090
      %v2826 = vunpack.c.l.b16 %v2091
      %v2827 = vunpack.c.h.b16 %v2091
      %v2828 = vunpack.c.l.b16 %v2092
      %v2829 = vunpack.c.h.b16 %v2092
      %v2830 = vunpack.c.l.b16 %v2093
      %v2831 = vunpack.c.h.b16 %v2093
      %v2832 = vunpack.c.l.b16 %v2094
      %v2833 = vunpack.c.h.b16 %v2094
      %v2834 = vunpack.c.l.b16 %v2095
      %v2835 = vunpack.c.h.b16 %v2095
      %v2836 = vunpack.c.l.b16 %v2096
      %v2837 = vunpack.c.h.b16 %v2096
      %v2838 = vunpack.c.l.b16 %v2097
      %v2839 = vunpack.c.h.b16 %v2097
      %v2840 = vunpack.c.l.b16 %v2098
      %v2841 = vunpack.c.h.b16 %v2098
      %v2842 = vunpack.c.l.b16 %v2099
      %v2843 = vunpack.c.h.b16 %v2099
      %v2844 = vunpack.c.l.b16 %v2100
      %v2845 = vunpack.c.h.b16 %v2100
      %v2846 = vunpack.c.l.b16 %v2101
      %v2847 = vunpack.c.h.b16 %v2101
      %v2848 = vunpack.c.l.b16 %v2102
      %v2849 = vunpack.c.h.b16 %v2102
      %v2850 = vunpack.c.l.b16 %v2103
      %v2851 = vunpack.c.h.b16 %v2103
      %v2852 = vunpack.c.l.b16 %v2104
      %v2853 = vunpack.c.h.b16 %v2104
      %v2854 = vunpack.c.l.b16 %v2105
      %v2855 = vunpack.c.h.b16 %v2105
      %v2856 = vunpack.c.l.b16 %v2106
      %v2857 = vunpack.c.h.b16 %v2106
      %v2858 = vunpack.c.l.b16 %v2107
      %v2859 = vunpack.c.h.b16 %v2107
      %v2860 = vunpack.c.l.b16 %v2108
      %v2861 = vunpack.c.h.b16 %v2108
      %v2862 = vunpack.c.l.b16 %v2109
      %v2863 = vunpack.c.h.b16 %v2109
      %v2864 = vunpack.c.l.b16 %v2110
      %v2865 = vunpack.c.h.b16 %v2110
      %v2866 = vunpack.c.l.b16 %v2111
      %v2867 = vunpack.c.h.b16 %v2111
      %v2868 = vunpack.c.l.b16 %v2112
      %v2869 = vunpack.c.h.b16 %v2112
      %v2870 = vunpack.c.l.b16 %v2113
      %v2871 = vunpack.c.h.b16 %v2113
      %v2872 = vunpack.c.l.b16 %v2114
      %v2873 = vunpack.c.h.b16 %v2114
      %v2874 = vunpack.c.l.b16 %v2115
      %v2875 = vunpack.c.h.b16 %v2115
      %v2876 = vunpack.c.l.b16 %v2116
      %v2877 = vunpack.c.h.b16 %v2116
      %v2878 = vunpack.c.l.b16 %v2117
      %v2879 = vunpack.c.h.b16 %v2117
      %v2880 = vunpack.c.l.b16 %v2118
      %v2881 = vunpack.c.h.b16 %v2118
      %v2882 = vunpack.c.l.b16 %v2119
      %v2883 = vunpack.c.h.b16 %v2119
      %v2884 = vunpack.c.l.b16 %v2120
      %v2885 = vunpack.c.h.b16 %v2120
      %v2886 = vunpack.c.l.b16 %v2121
      %v2887 = vunpack.c.h.b16 %v2121
      %v2888 = vunpack.c.l.b16 %v2122
      %v2889 = vunpack.c.h.b16 %v2122
      %v2890 = vunpack.c.l.b16 %v2123
      %v2891 = vunpack.c.h.b16 %v2123
      %v2892 = vunpack.c.l.b16 %v2124
      %v2893 = vunpack.c.h.b16 %v2124
      %v2894 = vunpack.c.l.b16 %v2125
      %v2895 = vunpack.c.h.b16 %v2125
      %v2896 = vunpack.c.l.b16 %v2126
      %v2897 = vunpack.c.h.b16 %v2126
      %v2898 = vunpack.c.l.b16 %v2127
      %v2899 = vunpack.c.h.b16 %v2127
      %v2900 = vunpack.c.l.b16 %v2128
      %v2901 = vunpack.c.h.b16 %v2128
      %v2902 = vunpack.c.l.b16 %v2129
      %v2903 = vunpack.c.h.b16 %v2129
      %v2904 = vunpack.c.l.b16 %v2130
      %v2905 = vunpack.c.h.b16 %v2130
      %v2906 = vunpack.c.l.b16 %v2131
      %v2907 = vunpack.c.h.b16 %v2131
      %v2908 = vunpack.c.l.b16 %v2132
      %v2909 = vunpack.c.h.b16 %v2132
      %v2910 = vunpack.c.l.b16 %v2133
      %v2911 = vunpack.c.h.b16 %v2133
      %v2912 = vunpack.c.l.b16 %v2134
      %v2913 = vunpack.c.h.b16 %v2134
      %v2914 = vunpack.c.l.b16 %v2135
      %v2915 = vunpack.c.h.b16 %v2135
      %v2916 = vunpack.c.l.b16 %v2136
      %v2917 = vunpack.c.h.b16 %v2136
      %v2918 = vunpack.c.l.b16 %v2137
      %v2919 = vunpack.c.h.b16 %v2137
      %v2920 = vunpack.c.l.b16 %v2138
      %v2921 = vunpack.c.h.b16 %v2138
      %v2922 = vunpack.c.l.b16 %v2139
      %v2923 = vunpack.c.h.b16 %v2139
      %v2924 = vunpack.c.l.b16 %v2140
      %v2925 = vunpack.c.h.b16 %v2140
      %v2926 = vunpack.c.l.b16 %v2141
      %v2927 = vunpack.c.h.b16 %v2141
      %v2928 = vunpack.c.l.b16 %v2142
      %v2929 = vunpack.c.h.b16 %v2142
      %v2930 = vunpack.c.l.b16 %v2143
      %v2931 = vunpack.c.h.b16 %v2143
      %v2932 = vunpack.c.l.b16 %v2144
      %v2933 = vunpack.c.h.b16 %v2144
      %v2934 = vunpack.c.l.b16 %v2145
      %v2935 = vunpack.c.h.b16 %v2145
      %v2936 = vunpack.c.l.b16 %v2146
      %v2937 = vunpack.c.h.b16 %v2146
      %v2938 = vunpack.c.l.b16 %v2147
      %v2939 = vunpack.c.h.b16 %v2147
      %v2940 = vunpack.c.l.b16 %v2148
      %v2941 = vunpack.c.h.b16 %v2148
      %v2942 = vunpack.c.l.b16 %v2149
      %v2943 = vunpack.c.h.b16 %v2149
      %v2944 = vunpack.c.l.b16 %v2150
      %v2945 = vunpack.c.h.b16 %v2150
      %v2946 = vunpack.c.l.b16 %v2151
      %v2947 = vunpack.c.h.b16 %v2151
      %v2948 = vunpack.c.l.b16 %v2152
      %v2949 = vunpack.c.h.b16 %v2152
      %v2950 = vunpack.c.l.b16 %v2153
      %v2951 = vunpack.c.h.b16 %v2153
      %v2952 = vunpack.c.l.b16 %v2154
      %v2953 = vunpack.c.h.b16 %v2154
      %v2954 = vunpack.c.l.b16 %v2155
      %v2955 = vunpack.c.h.b16 %v2155
      %v2956 = vunpack.c.l.b16 %v2156
      %v2957 = vunpack.c.h.b16 %v2156
      %v2958 = vunpack.c.l.b16 %v2157
      %v2959 = vunpack.c.h.b16 %v2157
      %v2960 = vunpack.c.l.b16 %v2158
      %v2961 = vunpack.c.h.b16 %v2158
      %v2962 = vunpack.c.l.b16 %v2159
      %v2963 = vunpack.c.h.b16 %v2159
      %v2964 = vunpack.c.l.b16 %v2160
      %v2965 = vunpack.c.h.b16 %v2160
      %v2966 = vunpack.c.l.b16 %v2161
      %v2967 = vunpack.c.h.b16 %v2161
      %v2968 = vunpack.c.l.b16 %v2162
      %v2969 = vunpack.c.h.b16 %v2162
      %v2970 = vunpack.c.l.b16 %v2163
      %v2971 = vunpack.c.h.b16 %v2163
      %v2972 = vunpack.c.l.b16 %v2164
      %v2973 = vunpack.c.h.b16 %v2164
      %v2974 = vunpack.c.l.b16 %v2165
      %v2975 = vunpack.c.h.b16 %v2165
      %v2976 = vunpack.c.l.b16 %v2166
      %v2977 = vunpack.c.h.b16 %v2166
      %v2978 = vunpack.c.l.b16 %v2167
      %v2979 = vunpack.c.h.b16 %v2167
      %v2980 = vunpack.c.l.b16 %v2168
      %v2981 = vunpack.c.h.b16 %v2168
      %v2982 = vunpack.c.l.b16 %v2169
      %v2983 = vunpack.c.h.b16 %v2169
      %v2984 = vunpack.c.l.b16 %v2170
      %v2985 = vunpack.c.h.b16 %v2170
      %v2986 = vunpack.c.l.b16 %v2171
      %v2987 = vunpack.c.h.b16 %v2171
      %v2988 = vunpack.c.l.b16 %v2172
      %v2989 = vunpack.c.h.b16 %v2172
      %v2990 = vunpack.c.l.b16 %v2173
      %v2991 = vunpack.c.h.b16 %v2173
      %v2992 = vunpack.c.l.b16 %v2174
      %v2993 = vunpack.c.h.b16 %v2174
      %v2994 = vunpack.c.l.b16 %v2175
      %v2995 = vunpack.c.h.b16 %v2175
      %v2996 = vunpack.c.l.b16 %v2176
      %v2997 = vunpack.c.h.b16 %v2176
      %v2998 = vunpack.c.l.b16 %v2177
      %v2999 = vunpack.c.h.b16 %v2177
      %v3000 = vunpack.c.l.b16 %v2178
      %v3001 = vunpack.c.h.b16 %v2178
      %v3002 = vunpack.c.l.b16 %v2179
      %v3003 = vunpack.c.h.b16 %v2179
      %v3004 = vunpack.c.l.b16 %v2180
      %v3005 = vunpack.c.h.b16 %v2180
      %v3006 = vunpack.c.l.b16 %v2181
      %v3007 = vunpack.c.h.b16 %v2181
      %v3008 = vunpack.c.l.b16 %v2182
      %v3009 = vunpack.c.h.b16 %v2182
      %v3010 = vunpack.c.l.b16 %v2183
      %v3011 = vunpack.c.h.b16 %v2183
      %v3012 = vunpack.c.l.b16 %v2184
      %v3013 = vunpack.c.h.b16 %v2184
      %v3014 = vunpack.c.l.b16 %v2185
      %v3015 = vunpack.c.h.b16 %v2185
      %v3016 = vunpack.c.l.b16 %v2186
      %v3017 = vunpack.c.h.b16 %v2186
      %v3018 = vunpack.c.l.b16 %v2187
      %v3019 = vunpack.c.h.b16 %v2187
      %v3020 = vunpack.c.l.b16 %v2188
      %v3021 = vunpack.c.h.b16 %v2188
      %v3022 = vunpack.c.l.b16 %v2189
      %v3023 = vunpack.c.h.b16 %v2189
      %v3024 = vunpack.c.l.b16 %v2190
      %v3025 = vunpack.c.h.b16 %v2190
      %v3026 = vunpack.c.l.b16 %v2191
      %v3027 = vunpack.c.h.b16 %v2191
      %v3028 = vunpack.c.l.b16 %v2192
      %v3029 = vunpack.c.h.b16 %v2192
      %v3030 = vunpack.c.l.b16 %v2193
      %v3031 = vunpack.c.h.b16 %v2193
      %v3032 = vunpack.c.l.b16 %v2194
      %v3033 = vunpack.c.h.b16 %v2194
      %v3034 = vunpack.c.l.b16 %v2195
      %v3035 = vunpack.c.h.b16 %v2195
      %v3036 = vunpack.c.l.b16 %v2196
      %v3037 = vunpack.c.h.b16 %v2196
      %v3038 = vunpack.c.l.b16 %v2197
      %v3039 = vunpack.c.h.b16 %v2197
      %v3040 = vunpack.c.l.b16 %v2198
      %v3041 = vunpack.c.h.b16 %v2198
      %v3042 = vunpack.c.l.b16 %v2199
      %v3043 = vunpack.c.h.b16 %v2199
      %v3044 = vunpack.c.l.b16 %v2200
      %v3045 = vunpack.c.h.b16 %v2200
      %v3046 = vunpack.c.l.b16 %v2201
      %v3047 = vunpack.c.h.b16 %v2201
      %v3048 = vunpack.c.l.b16 %v2202
      %v3049 = vunpack.c.h.b16 %v2202
      %v3050 = vunpack.c.l.b16 %v2203
      %v3051 = vunpack.c.h.b16 %v2203
      %v3052 = vunpack.c.l.b16 %v2204
      %v3053 = vunpack.c.h.b16 %v2204
      %v3054 = vunpack.c.l.b16 %v2205
      %v3055 = vunpack.c.h.b16 %v2205
      %v3056 = vunpack.c.l.b16 %v2206
      %v3057 = vunpack.c.h.b16 %v2206
      %v3058 = vunpack.c.l.b16 %v2207
      %v3059 = vunpack.c.h.b16 %v2207
      %v3060 = vunpack.c.l.b16 %v2208
      %v3061 = vunpack.c.h.b16 %v2208
      %v3062 = vunpack.c.l.b16 %v2209
      %v3063 = vunpack.c.h.b16 %v2209
      %v3064 = vunpack.c.l.b16 %v2210
      %v3065 = vunpack.c.h.b16 %v2210
      %v3066 = vunpack.c.l.b16 %v2211
      %v3067 = vunpack.c.h.b16 %v2211
      %v3068 = vunpack.c.l.b16 %v2212
      %v3069 = vunpack.c.h.b16 %v2212
      %v3070 = vunpack.c.l.b16 %v2213
      %v3071 = vunpack.c.h.b16 %v2213
      %v3072 = vunpack.c.l.b16 %v2214
      %v3073 = vunpack.c.h.b16 %v2214
      %v3074 = vunpack.c.l.b16 %v2215
      %v3075 = vunpack.c.h.b16 %v2215
      %v3076 = vunpack.c.l.b16 %v2216
      %v3077 = vunpack.c.h.b16 %v2216
      %v3078 = vunpack.c.l.b16 %v2217
      %v3079 = vunpack.c.h.b16 %v2217
      %v3080 = vunpack.c.l.b16 %v2218
      %v3081 = vunpack.c.h.b16 %v2218
      %v3082 = vunpack.c.l.b16 %v2219
      %v3083 = vunpack.c.h.b16 %v2219
      %v3084 = vunpack.c.l.b16 %v2220
      %v3085 = vunpack.c.h.b16 %v2220
      %v3086 = vunpack.c.l.b16 %v2221
      %v3087 = vunpack.c.h.b16 %v2221
      %v3088 = vunpack.c.l.b16 %v2222
      %v3089 = vunpack.c.h.b16 %v2222
      %v3090 = vunpack.c.l.b16 %v2223
      %v3091 = vunpack.c.h.b16 %v2223
      %v3092 = vunpack.c.l.b16 %v2224
      %v3093 = vunpack.c.h.b16 %v2224
      %v3094 = vunpack.c.l.b16 %v2225
      %v3095 = vunpack.c.h.b16 %v2225
      %v3096 = vunpack.c.l.b16 %v2226
      %v3097 = vunpack.c.h.b16 %v2226
      %v3098 = vunpack.c.l.b16 %v2227
      %v3099 = vunpack.c.h.b16 %v2227
      %v3100 = vunpack.c.l.b16 %v2228
      %v3101 = vunpack.c.h.b16 %v2228
      %v3102 = vunpack.c.l.b16 %v2229
      %v3103 = vunpack.c.h.b16 %v2229
      %v3104 = vunpack.c.l.b16 %v2230
      %v3105 = vunpack.c.h.b16 %v2230
      %v3106 = vunpack.c.l.b16 %v2231
      %v3107 = vunpack.c.h.b16 %v2231
      %v3108 = vunpack.c.l.b16 %v2232
      %v3109 = vunpack.c.h.b16 %v2232
      %v3110 = vunpack.c.l.b16 %v2233
      %v3111 = vunpack.c.h.b16 %v2233
      %v3112 = vunpack.c.l.b16 %v2234
      %v3113 = vunpack.c.h.b16 %v2234
      %v3114 = vunpack.c.l.b16 %v2235
      %v3115 = vunpack.c.h.b16 %v2235
      %v3116 = vunpack.c.l.b16 %v2236
      %v3117 = vunpack.c.h.b16 %v2236
      %v3118 = vunpack.c.l.b16 %v2237
      %v3119 = vunpack.c.h.b16 %v2237
      %v3120 = vunpack.c.l.b16 %v2238
      %v3121 = vunpack.c.h.b16 %v2238
      %v3122 = vunpack.c.l.b16 %v2239
      %v3123 = vunpack.c.h.b16 %v2239
      %v3124 = vunpack.c.l.b16 %v2240
      %v3125 = vunpack.c.h.b16 %v2240
      %v3126 = vunpack.c.l.b16 %v2241
      %v3127 = vunpack.c.h.b16 %v2241
      %v3128 = vunpack.c.l.b16 %v2242
      %v3129 = vunpack.c.h.b16 %v2242
      %v3130 = vunpack.c.l.b16 %v2243
      %v3131 = vunpack.c.h.b16 %v2243
      %v3132 = vunpack.c.l.b16 %v2244
      %v3133 = vunpack.c.h.b16 %v2244
      %v3134 = vunpack.c.l.b16 %v2245
      %v3135 = vunpack.c.h.b16 %v2245
      %v3136 = vunpack.c.l.b16 %v2246
      %v3137 = vunpack.c.h.b16 %v2246
      %v3138 = vunpack.c.l.b16 %v2247
      %v3139 = vunpack.c.h.b16 %v2247
      %v3140 = vunpack.c.l.b16 %v2248
      %v3141 = vunpack.c.h.b16 %v2248
      %v3142 = vunpack.c.l.b16 %v2249
      %v3143 = vunpack.c.h.b16 %v2249
      %v3144 = vunpack.c.l.b16 %v2250
      %v3145 = vunpack.c.h.b16 %v2250
      %v3146 = vunpack.c.l.b16 %v2251
      %v3147 = vunpack.c.h.b16 %v2251
      %v3148 = vpack.c.b16 %v2578, %v2572
      %v3149 = vpack.c.b16 %v2579, %v2573
      %v3150 = vpack.c.b16 %v2580, %v2574
      %v3151 = vpack.c.b16 %v2581, %v2575
      %v3152 = vpack.c.b16 %v2582, %v2576
      %v3153 = vpack.c.b16 %v2583, %v2577
      %v3154 = vpack.c.b16 %v2590, %v2584
      %v3155 = vpack.c.b16 %v2591, %v2585
      %v3156 = vpack.c.b16 %v2592, %v2586
      %v3157 = vpack.c.b16 %v2593, %v2587
      %v3158 = vpack.c.b16 %v2594, %v2588
      %v3159 = vpack.c.b16 %v2595, %v2589
      %v3160 = vpack.c.b16 %v2602, %v2596
      %v3161 = vpack.c.b16 %v2603, %v2597
      %v3162 = vpack.c.b16 %v2604, %v2598
      %v3163 = vpack.c.b16 %v2605, %v2599
      %v3164 = vpack.c.b16 %v2606, %v2600
      %v3165 = vpack.c.b16 %v2607, %v2601
      %v3166 = vpack.c.b16 %v2614, %v2608
      %v3167 = vpack.c.b16 %v2615, %v2609
      %v3168 = vpack.c.b16 %v2616, %v2610
      %v3169 = vpack.c.b16 %v2617, %v2611
      %v3170 = vpack.c.b16 %v2618, %v2612
      %v3171 = vpack.c.b16 %v2619, %v2613
      %v3172 = vpack.c.b16 %v2626, %v2620
      %v3173 = vpack.c.b16 %v2627, %v2621
      %v3174 = vpack.c.b16 %v2628, %v2622
      %v3175 = vpack.c.b16 %v2629, %v2623
      %v3176 = vpack.c.b16 %v2630, %v2624
      %v3177 = vpack.c.b16 %v2631, %v2625
      %v3178 = vpack.c.b16 %v2638, %v2632
      %v3179 = vpack.c.b16 %v2639, %v2633
      %v3180 = vpack.c.b16 %v2640, %v2634
      %v3181 = vpack.c.b16 %v2641, %v2635
      %v3182 = vpack.c.b16 %v2642, %v2636
      %v3183 = vpack.c.b16 %v2643, %v2637
      %v3184 = vpack.c.b16 %v2650, %v2644
      %v3185 = vpack.c.b16 %v2651, %v2645
      %v3186 = vpack.c.b16 %v2652, %v2646
      %v3187 = vpack.c.b16 %v2653, %v2647
      %v3188 = vpack.c.b16 %v2654, %v2648
      %v3189 = vpack.c.b16 %v2655, %v2649
      %v3190 = vpack.c.b16 %v2662, %v2656
      %v3191 = vpack.c.b16 %v2663, %v2657
      %v3192 = vpack.c.b16 %v2664, %v2658
      %v3193 = vpack.c.b16 %v2665, %v2659
      %v3194 = vpack.c.b16 %v2666, %v2660
      %v3195 = vpack.c.b16 %v2667, %v2661
      %v3196 = vpack.c.b16 %v2674, %v2668
      %v3197 = vpack.c.b16 %v2675, %v2669
      %v3198 = vpack.c.b16 %v2676, %v2670
      %v3199 = vpack.c.b16 %v2677, %v2671
      %v3200 = vpack.c.b16 %v2678, %v2672
      %v3201 = vpack.c.b16 %v2679, %v2673
      %v3202 = vpack.c.b16 %v2686, %v2680
      %v3203 = vpack.c.b16 %v2687, %v2681
      %v3204 = vpack.c.b16 %v2688, %v2682
      %v3205 = vpack.c.b16 %v2689, %v2683
      %v3206 = vpack.c.b16 %v2690, %v2684
      %v3207 = vpack.c.b16 %v2691, %v2685
      %v3208 = vpack.c.b16 %v2698, %v2692
      %v3209 = vpack.c.b16 %v2699, %v2693
      %v3210 = vpack.c.b16 %v2700, %v2694
      %v3211 = vpack.c.b16 %v2701, %v2695
      %v3212 = vpack.c.b16 %v2702, %v2696
      %v3213 = vpack.c.b16 %v2703, %v2697
      %v3214 = vpack.c.b16 %v2710, %v2704
      %v3215 = vpack.c.b16 %v2711, %v2705
      %v3216 = vpack.c.b16 %v2712, %v2706
      %v3217 = vpack.c.b16 %v2713, %v2707
      %v3218 = vpack.c.b16 %v2714, %v2708
      %v3219 = vpack.c.b16 %v2715, %v2709
      %v3220 = vpack.c.b16 %v2722, %v2716
      %v3221 = vpack.c.b16 %v2723, %v2717
      %v3222 = vpack.c.b16 %v2724, %v2718
      %v3223 = vpack.c.b16 %v2725, %v2719
      %v3224 = vpack.c.b16 %v2726, %v2720
      %v3225 = vpack.c.b16 %v2727, %v2721
      %v3226 = vpack.c.b16 %v2734, %v2728
      %v3227 = vpack.c.b16 %v2735, %v2729
      %v3228 = vpack.c.b16 %v2736, %v2730
      %v3229 = vpack.c.b16 %v2737, %v2731
      %v3230 = vpack.c.b16 %v2738, %v2732
      %v3231 = vpack.c.b16 %v2739, %v2733
      %v3232 = vpack.c.b16 %v2746, %v2740
      %v3233 = vpack.c.b16 %v2747, %v2741
      %v3234 = vpack.c.b16 %v2748, %v2742
      %v3235 = vpack.c.b16 %v2749, %v2743
      %v3236 = vpack.c.b16 %v2750, %v2744
      %v3237 = vpack.c.b16 %v2751, %v2745
      %v3238 = vpack.c.b16 %v2758, %v2752
      %v3239 = vpack.c.b16 %v2759, %v2753
      %v3240 = vpack.c.b16 %v2760, %v2754
      %v3241 = vpack.c.b16 %v2761, %v2755
      %v3242 = vpack.c.b16 %v2762, %v2756
      %v3243 = vpack.c.b16 %v2763, %v2757
      %v3244 = vpack.c.b16 %v2770, %v2764
      %v3245 = vpack.c.b16 %v2771, %v2765
      %v3246 = vpack.c.b16 %v2772, %v2766
      %v3247 = vpack.c.b16 %v2773, %v2767
      %v3248 = vpack.c.b16 %v2774, %v2768
      %v3249 = vpack.c.b16 %v2775, %v2769
      %v3250 = vpack.c.b16 %v2782, %v2776
      %v3251 = vpack.c.b16 %v2783, %v2777
      %v3252 = vpack.c.b16 %v2784, %v2778
      %v3253 = vpack.c.b16 %v2785, %v2779
      %v3254 = vpack.c.b16 %v2786, %v2780
      %v3255 = vpack.c.b16 %v2787, %v2781
      %v3256 = vpack.c.b16 %v2794, %v2788
      %v3257 = vpack.c.b16 %v2795, %v2789
      %v3258 = vpack.c.b16 %v2796, %v2790
      %v3259 = vpack.c.b16 %v2797, %v2791
      %v3260 = vpack.c.b16 %v2798, %v2792
      %v3261 = vpack.c.b16 %v2799, %v2793
      %v3262 = vpack.c.b16 %v2806, %v2800
      %v3263 = vpack.c.b16 %v2807, %v2801
      %v3264 = vpack.c.b16 %v2808, %v2802
      %v3265 = vpack.c.b16 %v2809, %v2803
      %v3266 = vpack.c.b16 %v2810, %v2804
      %v3267 = vpack.c.b16 %v2811, %v2805
      %v3268 = vpack.c.b16 %v2818, %v2812
      %v3269 = vpack.c.b16 %v2819, %v2813
      %v3270 = vpack.c.b16 %v2820, %v2814
      %v3271 = vpack.c.b16 %v2821, %v2815
      %v3272 = vpack.c.b16 %v2822, %v2816
      %v3273 = vpack.c.b16 %v2823, %v2817
      %v3274 = vpack.c.b16 %v2830, %v2824
      %v3275 = vpack.c.b16 %v2831, %v2825
      %v3276 = vpack.c.b16 %v2832, %v2826
      %v3277 = vpack.c.b16 %v2833, %v2827
      %v3278 = vpack.c.b16 %v2834, %v2828
      %v3279 = vpack.c.b16 %v2835, %v2829
      %v3280 = vpack.c.b16 %v2842, %v2836
      %v3281 = vpack.c.b16 %v2843, %v2837
      %v3282 = vpack.c.b16 %v2844, %v2838
      %v3283 = vpack.c.b16 %v2845, %v2839
      %v3284 = vpack.c.b16 %v2846, %v2840
      %v3285 = vpack.c.b16 %v2847, %v2841
      %v3286 = vpack.c.b16 %v2854, %v2848
      %v3287 = vpack.c.b16 %v2855, %v2849
      %v3288 = vpack.c.b16 %v2856, %v2850
      %v3289 = vpack.c.b16 %v2857, %v2851
      %v3290 = vpack.c.b16 %v2858, %v2852
      %v3291 = vpack.c.b16 %v2859, %v2853
      %v3292 = vpack.c.b16 %v2866, %v2860
      %v3293 = vpack.c.b16 %v2867, %v2861
      %v3294 = vpack.c.b16 %v2868, %v2862
      %v3295 = vpack.c.b16 %v2869, %v2863
      %v3296 = vpack.c.b16 %v2870, %v2864
      %v3297 = vpack.c.b16 %v2871, %v2865
      %v3298 = vpack.c.b16 %v2878, %v2872
      %v3299 = vpack.c.b16 %v2879, %v2873
      %v3300 = vpack.c.b16 %v2880, %v2874
      %v3301 = vpack.c.b16 %v2881, %v2875
      %v3302 = vpack.c.b16 %v2882, %v2876
      %v3303 = vpack.c.b16 %v2883, %v2877
      %v3304 = vpack.c.b16 %v2890, %v2884
      %v3305 = vpack.c.b16 %v2891, %v2885
      %v3306 = vpack.c.b16 %v2892, %v2886
      %v3307 = vpack.c.b16 %v2893, %v2887
      %v3308 = vpack.c.b16 %v2894, %v2888
      %v3309 = vpack.c.b16 %v2895, %v2889
      %v3310 = vpack.c.b16 %v2902, %v2896
      %v3311 = vpack.c.b16 %v2903, %v2897
      %v3312 = vpack.c.b16 %v2904, %v2898
      %v3313 = vpack.c.b16 %v2905, %v2899
      %v3314 = vpack.c.b16 %v2906, %v2900
      %v3315 = vpack.c.b16 %v2907, %v2901
      %v3316 = vpack.c.b16 %v2914, %v2908
      %v3317 = vpack.c.b16 %v2915, %v2909
      %v3318 = vpack.c.b16 %v2916, %v2910
      %v3319 = vpack.c.b16 %v2917, %v2911
      %v3320 = vpack.c.b16 %v2918, %v2912
      %v3321 = vpack.c.b16 %v2919, %v2913
      %v3322 = vpack.c.b16 %v2926, %v2920
      %v3323 = vpack.c.b16 %v2927, %v2921
      %v3324 = vpack.c.b16 %v2928, %v2922
      %v3325 = vpack.c.b16 %v2929, %v2923
      %v3326 = vpack.c.b16 %v2930, %v2924
      %v3327 = vpack.c.b16 %v2931, %v2925
      %v3328 = vpack.c.b16 %v2938, %v2932
      %v3329 = vpack.c.b16 %v2939, %v2933
      %v3330 = vpack.c.b16 %v2940, %v2934
      %v3331 = vpack.c.b16 %v2941, %v2935
      %v3332 = vpack.c.b16 %v2942, %v2936
      %v3333 = vpack.c.b16 %v2943, %v2937
      %v3334 = vpack.c.b16 %v2950, %v2944
      %v3335 = vpack.c.b16 %v2951, %v2945
      %v3336 = vpack.c.b16 %v2952, %v2946
      %v3337 = vpack.c.b16 %v2953, %v2947
      %v3338 = vpack.c.b16 %v2954, %v2948
      %v3339 = vpack.c.b16 %v2955, %v2949
      %v3340 = vpack.c.b16 %v2962, %v2956
      %v3341 = vpack.c.b16 %v2963, %v2957
      %v3342 = vpack.c.b16 %v2964, %v2958
      %v3343 = vpack.c.b16 %v2965, %v2959
      %v3344 = vpack.c.b16 %v2966, %v2960
      %v3345 = vpack.c.b16 %v2967, %v2961
      %v3346 = vpack.c.b16 %v2974, %v2968
      %v3347 = vpack.c.b16 %v2975, %v2969
      %v3348 = vpack.c.b16 %v2976, %v2970
      %v3349 = vpack.c.b16 %v2977, %v2971
      %v3350 = vpack.c.b16 %v2978, %v2972
      %v3351 = vpack.c.b16 %v2979, %v2973
      %v3352 = vpack.c.b16 %v2986, %v2980
      %v3353 = vpack.c.b16 %v2987, %v2981
      %v3354 = vpack.c.b16 %v2988, %v2982
      %v3355 = vpack.c.b16 %v2989, %v2983
      %v3356 = vpack.c.b16 %v2990, %v2984
      %v3357 = vpack.c.b16 %v2991, %v2985
      %v3358 = vpack.c.b16 %v2998, %v2992
      %v3359 = vpack.c.b16 %v2999, %v2993
      %v3360 = vpack.c.b16 %v3000, %v2994
      %v3361 = vpack.c.b16 %v3001, %v2995
      %v3362 = vpack.c.b16 %v3002, %v2996
      %v3363 = vpack.c.b16 %v3003, %v2997
      %v3364 = vpack.c.b16 %v3010, %v3004
      %v3365 = vpack.c.b16 %v3011, %v3005
      %v3366 = vpack.c.b16 %v3012, %v3006
      %v3367 = vpack.c.b16 %v3013, %v3007
      %v3368 = vpack.c.b16 %v3014, %v3008
      %v3369 = vpack.c.b16 %v3015, %v3009
      %v3370 = vpack.c.b16 %v3022, %v3016
      %v3371 = vpack.c.b16 %v3023, %v3017
      %v3372 = vpack.c.b16 %v3024, %v3018
      %v3373 = vpack.c.b16 %v3025, %v3019
      %v3374 = vpack.c.b16 %v3026, %v3020
      %v3375 = vpack.c.b16 %v3027, %v3021
      %v3376 = vpack.c.b16 %v3034, %v3028
      %v3377 = vpack.c.b16 %v3035, %v3029
      %v3378 = vpack.c.b16 %v3036, %v3030
      %v3379 = vpack.c.b16 %v3037, %v3031
      %v3380 = vpack.c.b16 %v3038, %v3032
      %v3381 = vpack.c.b16 %v3039, %v3033
      %v3382 = vpack.c.b16 %v3046, %v3040
      %v3383 = vpack.c.b16 %v3047, %v3041
      %v3384 = vpack.c.b16 %v3048, %v3042
      %v3385 = vpack.c.b16 %v3049, %v3043
      %v3386 = vpack.c.b16 %v3050, %v3044
      %v3387 = vpack.c.b16 %v3051, %v3045
      %v3388 = vpack.c.b16 %v3058, %v3052
      %v3389 = vpack.c.b16 %v3059, %v3053
      %v3390 = vpack.c.b16 %v3060, %v3054
      %v3391 = vpack.c.b16 %v3061, %v3055
      %v3392 = vpack.c.b16 %v3062, %v3056
      %v3393 = vpack.c.b16 %v3063, %v3057
      %v3394 = vpack.c.b16 %v3070, %v3064
      %v3395 = vpack.c.b16 %v3071, %v3065
      %v3396 = vpack.c.b16 %v3072, %v3066
      %v3397 = vpack.c.b16 %v3073, %v3067
      %v3398 = vpack.c.b16 %v3074, %v3068
      %v3399 = vpack.c.b16 %v3075, %v3069
      %v3400 = vpack.c.b16 %v3082, %v3076
      %v3401 = vpack.c.b16 %v3083, %v3077
      %v3402 = vpack.c.b16 %v3084, %v3078
      %v3403 = vpack.c.b16 %v3085, %v3079
      %v3404 = vpack.c.b16 %v3086, %v3080
      %v3405 = vpack.c.b16 %v3087, %v3081
      %v3406 = vpack.c.b16 %v3094, %v3088
      %v3407 = vpack.c.b16 %v3095, %v3089
      %v3408 = vpack.c.b16 %v3096, %v3090
      %v3409 = vpack.c.b16 %v3097, %v3091
      %v3410 = vpack.c.b16 %v3098, %v3092
      %v3411 = vpack.c.b16 %v3099, %v3093
      %v3412 = vpack.c.b16 %v3106, %v3100
      %v3413 = vpack.c.b16 %v3107, %v3101
      %v3414 = vpack.c.b16 %v3108, %v3102
      %v3415 = vpack.c.b16 %v3109, %v3103
      %v3416 = vpack.c.b16 %v3110, %v3104
      %v3417 = vpack.c.b16 %v3111, %v3105
      %v3418 = vpack.c.b16 %v3118, %v3112
      %v3419 = vpack.c.b16 %v3119, %v3113
      %v3420 = vpack.c.b16 %v3120, %v3114
      %v3421 = vpack.c.b16 %v3121, %v3115
      %v3422 = vpack.c.b16 %v3122, %v3116
      %v3423 = vpack.c.b16 %v3123, %v3117
      %v3424 = vpack.c.b16 %v3130, %v3124
      %v3425 = vpack.c.b16 %v3131, %v3125
      %v3426 = vpack.c.b16 %v3132, %v3126
      %v3427 = vpack.c.b16 %v3133, %v3127
      %v3428 = vpack.c.b16 %v3134, %v3128
      %v3429 = vpack.c.b16 %v3135, %v3129
      %v3430 = vpack.c.b16 %v3142, %v3136
      %v3431 = vpack.c.b16 %v3143, %v3137
      %v3432 = vpack.c.b16 %v3144, %v3138
      %v3433 = vpack.c.b16 %v3145, %v3139
      %v3434 = vpack.c.b16 %v3146, %v3140
      %v3435 = vpack.c.b16 %v3147, %v3141
      %3724 = vmatprep.subr.bf16.mxu0 %v3149
      %3725 = vmatpush1.bf16.msra.mxu0 %v3148
      %3726 = vmatprep.subr.bf16.mxu0 %v3155
      %3727 = vmatpush1.bf16.msra.mxu0 %v3154
      %3728 = vmatprep.subr.bf16.mxu0 %v3161
      %3729 = vmatpush1.bf16.msra.mxu0 %v3160
      %3730 = vmatprep.subr.bf16.mxu0 %v3167
      %3731 = vmatpush1.bf16.msra.mxu0 %v3166
      %3732 = vmatprep.subr.bf16.mxu0 %v3173
      %3733 = vmatpush1.bf16.msra.mxu0 %v3172
      %3734 = vmatprep.subr.bf16.mxu0 %v3179
      %3735 = vmatpush1.bf16.msra.mxu0 %v3178
      %3736 = vmatprep.subr.bf16.mxu0 %v3185
      %3737 = vmatpush1.bf16.msra.mxu0 %v3184
      %3738 = vmatprep.subr.bf16.mxu0 %v3191
      %3739 = vmatpush1.bf16.msra.mxu0 %v3190
      %3740 = vmatprep.subr.bf16.mxu0 %v3197
      %3741 = vmatpush1.bf16.msra.mxu0 %v3196
      %3742 = vmatprep.subr.bf16.mxu0 %v3203
      %3743 = vmatpush1.bf16.msra.mxu0 %v3202
      %3744 = vmatprep.subr.bf16.mxu0 %v3209
      %3745 = vmatpush1.bf16.msra.mxu0 %v3208
      %3746 = vmatprep.subr.bf16.mxu0 %v3215
      %3747 = vmatpush1.bf16.msra.mxu0 %v3214
      %3748 = vmatprep.subr.bf16.mxu0 %v3221
      %3749 = vmatpush1.bf16.msra.mxu0 %v3220
      %3750 = vmatprep.subr.bf16.mxu0 %v3227
      %3751 = vmatpush1.bf16.msra.mxu0 %v3226
      %3752 = vmatprep.subr.bf16.mxu0 %v3233
      %3753 = vmatpush1.bf16.msra.mxu0 %v3232
      %3754 = vmatprep.subr.bf16.mxu0 %v3239
      %3755 = vmatpush1.bf16.msra.mxu0 %v3238
      %3756 = vmatprep.mubr.bf16.mxu0 %v1959
      %3757 = vmatmul.mubr.bf16.gmra.mrb[0].mxu0 %v1958
      %v3758 = vpop.f32.mrb[0].mxu0
      %v3759 = vadd.f32 %v2257, %v3758
      %v3760 = vpop.f32.mrb[0].mxu0
      %v3761 = vadd.f32 %v2261, %v3760
      %v3762 = vpop.f32.mrb[0].mxu0
      %v3763 = vadd.f32 %v2257, %v3762
      %v3764 = vpop.f32.mrb[0].mxu0
      %v3765 = vadd.f32 %v2261, %v3764
      %3766 = vdwg.mxu0
      %3767 = vmatprep.subr.bf16.mxu0 %v3245
      %3768 = vmatpush1.bf16.msra.mxu0 %v3244
      %3769 = vmatprep.subr.bf16.mxu0 %v3251
      %3770 = vmatpush1.bf16.msra.mxu0 %v3250
      %3771 = vmatprep.subr.bf16.mxu0 %v3257
      %3772 = vmatpush1.bf16.msra.mxu0 %v3256
      %3773 = vmatprep.subr.bf16.mxu0 %v3263
      %3774 = vmatpush1.bf16.msra.mxu0 %v3262
      %3775 = vmatprep.subr.bf16.mxu0 %v3269
      %3776 = vmatpush1.bf16.msra.mxu0 %v3268
      %3777 = vmatprep.subr.bf16.mxu0 %v3275
      %3778 = vmatpush1.bf16.msra.mxu0 %v3274
      %3779 = vmatprep.subr.bf16.mxu0 %v3281
      %3780 = vmatpush1.bf16.msra.mxu0 %v3280
      %3781 = vmatprep.subr.bf16.mxu0 %v3287
      %3782 = vmatpush1.bf16.msra.mxu0 %v3286
      %3783 = vmatprep.subr.bf16.mxu0 %v3293
      %3784 = vmatpush1.bf16.msra.mxu0 %v3292
      %3785 = vmatprep.subr.bf16.mxu0 %v3299
      %3786 = vmatpush1.bf16.msra.mxu0 %v3298
      %3787 = vmatprep.subr.bf16.mxu0 %v3305
      %3788 = vmatpush1.bf16.msra.mxu0 %v3304
      %3789 = vmatprep.subr.bf16.mxu0 %v3311
      %3790 = vmatpush1.bf16.msra.mxu0 %v3310
      %3791 = vmatprep.subr.bf16.mxu0 %v3317
      %3792 = vmatpush1.bf16.msra.mxu0 %v3316
      %3793 = vmatprep.subr.bf16.mxu0 %v3323
      %3794 = vmatpush1.bf16.msra.mxu0 %v3322
      %3795 = vmatprep.subr.bf16.mxu0 %v3329
      %3796 = vmatpush1.bf16.msra.mxu0 %v3328
      %3797 = vmatprep.subr.bf16.mxu0 %v3335
      %3798 = vmatpush1.bf16.msra.mxu0 %v3334
      %3799 = vmatprep.mubr.bf16.mxu0 %v1961
      %3800 = vmatmul.mubr.bf16.gmra.mrb[0].mxu0 %v1960
      %v3801 = vpop.f32.mrb[0].mxu0
      %v3802 = vadd.f32 %v3759, %v3801
      %v3803 = vpop.f32.mrb[0].mxu0
      %v3804 = vadd.f32 %v3761, %v3803
      %v3805 = vpop.f32.mrb[0].mxu0
      %v3806 = vadd.f32 %v3763, %v3805
      %v3807 = vpop.f32.mrb[0].mxu0
      %v3808 = vadd.f32 %v3765, %v3807
      %3809 = vdwg.mxu0
      %3810 = vmatprep.subr.bf16.mxu0 %v3341
      %3811 = vmatpush1.bf16.msra.mxu0 %v3340
      %3812 = vmatprep.subr.bf16.mxu0 %v3347
      %3813 = vmatpush1.bf16.msra.mxu0 %v3346
      %3814 = vmatprep.subr.bf16.mxu0 %v3353
      %3815 = vmatpush1.bf16.msra.mxu0 %v3352
      %3816 = vmatprep.subr.bf16.mxu0 %v3359
      %3817 = vmatpush1.bf16.msra.mxu0 %v3358
      %3818 = vmatprep.subr.bf16.mxu0 %v3365
      %3819 = vmatpush1.bf16.msra.mxu0 %v3364
      %3820 = vmatprep.subr.bf16.mxu0 %v3371
      %3821 = vmatpush1.bf16.msra.mxu0 %v3370
      %3822 = vmatprep.subr.bf16.mxu0 %v3377
      %3823 = vmatpush1.bf16.msra.mxu0 %v3376
      %3824 = vmatprep.subr.bf16.mxu0 %v3383
      %3825 = vmatpush1.bf16.msra.mxu0 %v3382
      %3826 = vmatprep.subr.bf16.mxu0 %v3389
      %3827 = vmatpush1.bf16.msra.mxu0 %v3388
      %3828 = vmatprep.subr.bf16.mxu0 %v3395
      %3829 = vmatpush1.bf16.msra.mxu0 %v3394
      %3830 = vmatprep.subr.bf16.mxu0 %v3401
      %3831 = vmatpush1.bf16.msra.mxu0 %v3400
      %3832 = vmatprep.subr.bf16.mxu0 %v3407
      %3833 = vmatpush1.bf16.msra.mxu0 %v3406
      %3834 = vmatprep.subr.bf16.mxu0 %v3413
      %3835 = vmatpush1.bf16.msra.mxu0 %v3412
      %3836 = vmatprep.subr.bf16.mxu0 %v3419
      %3837 = vmatpush1.bf16.msra.mxu0 %v3418
      %3838 = vmatprep.subr.bf16.mxu0 %v3425
      %3839 = vmatpush1.bf16.msra.mxu0 %v3424
      %3840 = vmatprep.subr.bf16.mxu0 %v3431
      %3841 = vmatpush1.bf16.msra.mxu0 %v3430
      %3842 = vmatprep.mubr.bf16.mxu0 %v1963
      %3843 = vmatmul.mubr.bf16.gmra.mrb[0].mxu0 %v1962
      %v3844 = vpop.f32.mrb[0].mxu0
      %v3845 = vadd.f32 %v3802, %v3844
      %v3846 = vpop.f32.mrb[0].mxu0
      %v3847 = vadd.f32 %v3804, %v3846
      %v3848 = vpop.f32.mrb[0].mxu0
      %v3849 = vadd.f32 %v3806, %v3848
      %v3850 = vpop.f32.mrb[0].mxu0
      %v3851 = vadd.f32 %v3808, %v3850
      %3852 = vdwg.mxu0
      %3853 = vmatprep.subr.bf16.mxu0 %v3151
      %3854 = vmatpush1.bf16.msra.mxu0 %v3150
      %3855 = vmatprep.subr.bf16.mxu0 %v3157
      %3856 = vmatpush1.bf16.msra.mxu0 %v3156
      %3857 = vmatprep.subr.bf16.mxu0 %v3163
      %3858 = vmatpush1.bf16.msra.mxu0 %v3162
      %3859 = vmatprep.subr.bf16.mxu0 %v3169
      %3860 = vmatpush1.bf16.msra.mxu0 %v3168
      %3861 = vmatprep.subr.bf16.mxu0 %v3175
      %3862 = vmatpush1.bf16.msra.mxu0 %v3174
      %3863 = vmatprep.subr.bf16.mxu0 %v3181
      %3864 = vmatpush1.bf16.msra.mxu0 %v3180
      %3865 = vmatprep.subr.bf16.mxu0 %v3187
      %3866 = vmatpush1.bf16.msra.mxu0 %v3186
      %3867 = vmatprep.subr.bf16.mxu0 %v3193
      %3868 = vmatpush1.bf16.msra.mxu0 %v3192
      %3869 = vmatprep.subr.bf16.mxu0 %v3199
      %3870 = vmatpush1.bf16.msra.mxu0 %v3198
      %3871 = vmatprep.subr.bf16.mxu0 %v3205
      %3872 = vmatpush1.bf16.msra.mxu0 %v3204
      %3873 = vmatprep.subr.bf16.mxu0 %v3211
      %3874 = vmatpush1.bf16.msra.mxu0 %v3210
      %3875 = vmatprep.subr.bf16.mxu0 %v3217
      %3876 = vmatpush1.bf16.msra.mxu0 %v3216
      %3877 = vmatprep.subr.bf16.mxu0 %v3223
      %3878 = vmatpush1.bf16.msra.mxu0 %v3222
      %3879 = vmatprep.subr.bf16.mxu0 %v3229
      %3880 = vmatpush1.bf16.msra.mxu0 %v3228
      %3881 = vmatprep.subr.bf16.mxu0 %v3235
      %3882 = vmatpush1.bf16.msra.mxu0 %v3234
      %3883 = vmatprep.subr.bf16.mxu0 %v3241
      %3884 = vmatpush1.bf16.msra.mxu0 %v3240
      %3885 = vmatprep.mubr.bf16.mxu0 %v1959
      %3886 = vmatmul.mubr.bf16.gmra.mrb[0].mxu0 %v1958
      %v3887 = vpop.f32.mrb[0].mxu0
      %v3888 = vadd.f32 %v2265, %v3887
      %v3889 = vpop.f32.mrb[0].mxu0
      %v3890 = vadd.f32 %v2269, %v3889
      %v3891 = vpop.f32.mrb[0].mxu0
      %v3892 = vadd.f32 %v2265, %v3891
      %v3893 = vpop.f32.mrb[0].mxu0
      %v3894 = vadd.f32 %v2269, %v3893
      %3895 = vdwg.mxu0
      %3896 = vmatprep.subr.bf16.mxu0 %v3247
      %3897 = vmatpush1.bf16.msra.mxu0 %v3246
      %3898 = vmatprep.subr.bf16.mxu0 %v3253
      %3899 = vmatpush1.bf16.msra.mxu0 %v3252
      %3900 = vmatprep.subr.bf16.mxu0 %v3259
      %3901 = vmatpush1.bf16.msra.mxu0 %v3258
      %3902 = vmatprep.subr.bf16.mxu0 %v3265
      %3903 = vmatpush1.bf16.msra.mxu0 %v3264
      %3904 = vmatprep.subr.bf16.mxu0 %v3271
      %3905 = vmatpush1.bf16.msra.mxu0 %v3270
      %3906 = vmatprep.subr.bf16.mxu0 %v3277
      %3907 = vmatpush1.bf16.msra.mxu0 %v3276
      %3908 = vmatprep.subr.bf16.mxu0 %v3283
      %3909 = vmatpush1.bf16.msra.mxu0 %v3282
      %3910 = vmatprep.subr.bf16.mxu0 %v3289
      %3911 = vmatpush1.bf16.msra.mxu0 %v3288
      %3912 = vmatprep.subr.bf16.mxu0 %v3295
      %3913 = vmatpush1.bf16.msra.mxu0 %v3294
      %3914 = vmatprep.subr.bf16.mxu0 %v3301
      %3915 = vmatpush1.bf16.msra.mxu0 %v3300
      %3916 = vmatprep.subr.bf16.mxu0 %v3307
      %3917 = vmatpush1.bf16.msra.mxu0 %v3306
      %3918 = vmatprep.subr.bf16.mxu0 %v3313
      %3919 = vmatpush1.bf16.msra.mxu0 %v3312
      %3920 = vmatprep.subr.bf16.mxu0 %v3319
      %3921 = vmatpush1.bf16.msra.mxu0 %v3318
      %3922 = vmatprep.subr.bf16.mxu0 %v3325
      %3923 = vmatpush1.bf16.msra.mxu0 %v3324
      %3924 = vmatprep.subr.bf16.mxu0 %v3331
      %3925 = vmatpush1.bf16.msra.mxu0 %v3330
      %3926 = vmatprep.subr.bf16.mxu0 %v3337
      %3927 = vmatpush1.bf16.msra.mxu0 %v3336
      %3928 = vmatprep.mubr.bf16.mxu0 %v1961
      %3929 = vmatmul.mubr.bf16.gmra.mrb[0].mxu0 %v1960
      %v3930 = vpop.f32.mrb[0].mxu0
      %v3931 = vadd.f32 %v3888, %v3930
      %v3932 = vpop.f32.mrb[0].mxu0
      %v3933 = vadd.f32 %v3890, %v3932
      %v3934 = vpop.f32.mrb[0].mxu0
      %v3935 = vadd.f32 %v3892, %v3934
      %v3936 = vpop.f32.mrb[0].mxu0
      %v3937 = vadd.f32 %v3894, %v3936
      %3938 = vdwg.mxu0
      %3939 = vmatprep.subr.bf16.mxu0 %v3343
      %3940 = vmatpush1.bf16.msra.mxu0 %v3342
      %3941 = vmatprep.subr.bf16.mxu0 %v3349
      %3942 = vmatpush1.bf16.msra.mxu0 %v3348
      %3943 = vmatprep.subr.bf16.mxu0 %v3355
      %3944 = vmatpush1.bf16.msra.mxu0 %v3354
      %3945 = vmatprep.subr.bf16.mxu0 %v3361
      %3946 = vmatpush1.bf16.msra.mxu0 %v3360
      %3947 = vmatprep.subr.bf16.mxu0 %v3367
      %3948 = vmatpush1.bf16.msra.mxu0 %v3366
      %3949 = vmatprep.subr.bf16.mxu0 %v3373
      %3950 = vmatpush1.bf16.msra.mxu0 %v3372
      %3951 = vmatprep.subr.bf16.mxu0 %v3379
      %3952 = vmatpush1.bf16.msra.mxu0 %v3378
      %3953 = vmatprep.subr.bf16.mxu0 %v3385
      %3954 = vmatpush1.bf16.msra.mxu0 %v3384
      %3955 = vmatprep.subr.bf16.mxu0 %v3391
      %3956 = vmatpush1.bf16.msra.mxu0 %v3390
      %3957 = vmatprep.subr.bf16.mxu0 %v3397
      %3958 = vmatpush1.bf16.msra.mxu0 %v3396
      %3959 = vmatprep.subr.bf16.mxu0 %v3403
      %3960 = vmatpush1.bf16.msra.mxu0 %v3402
      %3961 = vmatprep.subr.bf16.mxu0 %v3409
      %3962 = vmatpush1.bf16.msra.mxu0 %v3408
      %3963 = vmatprep.subr.bf16.mxu0 %v3415
      %3964 = vmatpush1.bf16.msra.mxu0 %v3414
      %3965 = vmatprep.subr.bf16.mxu0 %v3421
      %3966 = vmatpush1.bf16.msra.mxu0 %v3420
      %3967 = vmatprep.subr.bf16.mxu0 %v3427
      %3968 = vmatpush1.bf16.msra.mxu0 %v3426
      %3969 = vmatprep.subr.bf16.mxu0 %v3433
      %3970 = vmatpush1.bf16.msra.mxu0 %v3432
      %3971 = vmatprep.mubr.bf16.mxu0 %v1963
      %3972 = vmatmul.mubr.bf16.gmra.mrb[0].mxu0 %v1962
      %v3973 = vpop.f32.mrb[0].mxu0
      %v3974 = vadd.f32 %v3931, %v3973
      %v3975 = vpop.f32.mrb[0].mxu0
      %v3976 = vadd.f32 %v3933, %v3975
      %v3977 = vpop.f32.mrb[0].mxu0
      %v3978 = vadd.f32 %v3935, %v3977
      %v3979 = vpop.f32.mrb[0].mxu0
      %v3980 = vadd.f32 %v3937, %v3979
      %3981 = vdwg.mxu0
      %3982 = vmatprep.subr.bf16.mxu0 %v3153
      %3983 = vmatpush1.bf16.msra.mxu0 %v3152
      %3984 = vmatprep.subr.bf16.mxu0 %v3159
      %3985 = vmatpush1.bf16.msra.mxu0 %v3158
      %3986 = vmatprep.subr.bf16.mxu0 %v3165
      %3987 = vmatpush1.bf16.msra.mxu0 %v3164
      %3988 = vmatprep.subr.bf16.mxu0 %v3171
      %3989 = vmatpush1.bf16.msra.mxu0 %v3170
      %3990 = vmatprep.subr.bf16.mxu0 %v3177
      %3991 = vmatpush1.bf16.msra.mxu0 %v3176
      %3992 = vmatprep.subr.bf16.mxu0 %v3183
      %3993 = vmatpush1.bf16.msra.mxu0 %v3182
      %3994 = vmatprep.subr.bf16.mxu0 %v3189
      %3995 = vmatpush1.bf16.msra.mxu0 %v3188
      %3996 = vmatprep.subr.bf16.mxu0 %v3195
      %3997 = vmatpush1.bf16.msra.mxu0 %v3194
      %3998 = vmatprep.subr.bf16.mxu0 %v3201
      %3999 = vmatpush1.bf16.msra.mxu0 %v3200
      %4000 = vmatprep.subr.bf16.mxu0 %v3207
      %4001 = vmatpush1.bf16.msra.mxu0 %v3206
      %4002 = vmatprep.subr.bf16.mxu0 %v3213
      %4003 = vmatpush1.bf16.msra.mxu0 %v3212
      %4004 = vmatprep.subr.bf16.mxu0 %v3219
      %4005 = vmatpush1.bf16.msra.mxu0 %v3218
      %4006 = vmatprep.subr.bf16.mxu0 %v3225
      %4007 = vmatpush1.bf16.msra.mxu0 %v3224
      %4008 = vmatprep.subr.bf16.mxu0 %v3231
      %4009 = vmatpush1.bf16.msra.mxu0 %v3230
      %4010 = vmatprep.subr.bf16.mxu0 %v3237
      %4011 = vmatpush1.bf16.msra.mxu0 %v3236
      %4012 = vmatprep.subr.bf16.mxu0 %v3243
      %4013 = vmatpush1.bf16.msra.mxu0 %v3242
      %4014 = vmatprep.mubr.bf16.mxu0 %v1959
      %4015 = vmatmul.mubr.bf16.gmra.mrb[0].mxu0 %v1958
      %v4016 = vpop.f32.mrb[0].mxu0
      %v4017 = vadd.f32 %v2273, %v4016
      %v4018 = vpop.f32.mrb[0].mxu0
      %v4019 = vadd.f32 %v2277, %v4018
      %v4020 = vpop.f32.mrb[0].mxu0
      %v4021 = vadd.f32 %v2273, %v4020
      %v4022 = vpop.f32.mrb[0].mxu0
      %v4023 = vadd.f32 %v2277, %v4022
      %4024 = vdwg.mxu0
      %4025 = vmatprep.subr.bf16.mxu0 %v3249
      %4026 = vmatpush1.bf16.msra.mxu0 %v3248
      %4027 = vmatprep.subr.bf16.mxu0 %v3255
      %4028 = vmatpush1.bf16.msra.mxu0 %v3254
      %4029 = vmatprep.subr.bf16.mxu0 %v3261
      %4030 = vmatpush1.bf16.msra.mxu0 %v3260
      %4031 = vmatprep.subr.bf16.mxu0 %v3267
      %4032 = vmatpush1.bf16.msra.mxu0 %v3266
      %4033 = vmatprep.subr.bf16.mxu0 %v3273
      %4034 = vmatpush1.bf16.msra.mxu0 %v3272
      %4035 = vmatprep.subr.bf16.mxu0 %v3279
      %4036 = vmatpush1.bf16.msra.mxu0 %v3278
      %4037 = vmatprep.subr.bf16.mxu0 %v3285
      %4038 = vmatpush1.bf16.msra.mxu0 %v3284
      %4039 = vmatprep.subr.bf16.mxu0 %v3291
      %4040 = vmatpush1.bf16.msra.mxu0 %v3290
      %4041 = vmatprep.subr.bf16.mxu0 %v3297
      %4042 = vmatpush1.bf16.msra.mxu0 %v3296
      %4043 = vmatprep.subr.bf16.mxu0 %v3303
      %4044 = vmatpush1.bf16.msra.mxu0 %v3302
      %4045 = vmatprep.subr.bf16.mxu0 %v3309
      %4046 = vmatpush1.bf16.msra.mxu0 %v3308
      %4047 = vmatprep.subr.bf16.mxu0 %v3315
      %4048 = vmatpush1.bf16.msra.mxu0 %v3314
      %4049 = vmatprep.subr.bf16.mxu0 %v3321
      %4050 = vmatpush1.bf16.msra.mxu0 %v3320
      %4051 = vmatprep.subr.bf16.mxu0 %v3327
      %4052 = vmatpush1.bf16.msra.mxu0 %v3326
      %4053 = vmatprep.subr.bf16.mxu0 %v3333
      %4054 = vmatpush1.bf16.msra.mxu0 %v3332
      %4055 = vmatprep.subr.bf16.mxu0 %v3339
      %4056 = vmatpush1.bf16.msra.mxu0 %v3338
      %4057 = vmatprep.mubr.bf16.mxu0 %v1961
      %4058 = vmatmul.mubr.bf16.gmra.mrb[0].mxu0 %v1960
      %v4059 = vpop.f32.mrb[0].mxu0
      %v4060 = vadd.f32 %v4017, %v4059
      %v4061 = vpop.f32.mrb[0].mxu0
      %v4062 = vadd.f32 %v4019, %v4061
      %v4063 = vpop.f32.mrb[0].mxu0
      %v4064 = vadd.f32 %v4021, %v4063
      %v4065 = vpop.f32.mrb[0].mxu0
      %v4066 = vadd.f32 %v4023, %v4065
      %4067 = vdwg.mxu0
      %4068 = vmatprep.subr.bf16.mxu0 %v3345
      %4069 = vmatpush1.bf16.msra.mxu0 %v3344
      %4070 = vmatprep.subr.bf16.mxu0 %v3351
      %4071 = vmatpush1.bf16.msra.mxu0 %v3350
      %4072 = vmatprep.subr.bf16.mxu0 %v3357
      %4073 = vmatpush1.bf16.msra.mxu0 %v3356
      %4074 = vmatprep.subr.bf16.mxu0 %v3363
      %4075 = vmatpush1.bf16.msra.mxu0 %v3362
      %4076 = vmatprep.subr.bf16.mxu0 %v3369
      %4077 = vmatpush1.bf16.msra.mxu0 %v3368
      %4078 = vmatprep.subr.bf16.mxu0 %v3375
      %4079 = vmatpush1.bf16.msra.mxu0 %v3374
      %4080 = vmatprep.subr.bf16.mxu0 %v3381
      %4081 = vmatpush1.bf16.msra.mxu0 %v3380
      %4082 = vmatprep.subr.bf16.mxu0 %v3387
      %4083 = vmatpush1.bf16.msra.mxu0 %v3386
      %4084 = vmatprep.subr.bf16.mxu0 %v3393
      %4085 = vmatpush1.bf16.msra.mxu0 %v3392
      %4086 = vmatprep.subr.bf16.mxu0 %v3399
      %4087 = vmatpush1.bf16.msra.mxu0 %v3398
      %4088 = vmatprep.subr.bf16.mxu0 %v3405
      %4089 = vmatpush1.bf16.msra.mxu0 %v3404
      %4090 = vmatprep.subr.bf16.mxu0 %v3411
      %4091 = vmatpush1.bf16.msra.mxu0 %v3410
      %4092 = vmatprep.subr.bf16.mxu0 %v3417
      %4093 = vmatpush1.bf16.msra.mxu0 %v3416
      %4094 = vmatprep.subr.bf16.mxu0 %v3423
      %4095 = vmatpush1.bf16.msra.mxu0 %v3422
      %4096 = vmatprep.subr.bf16.mxu0 %v3429
      %4097 = vmatpush1.bf16.msra.mxu0 %v3428
      %4098 = vmatprep.subr.bf16.mxu0 %v3435
      %4099 = vmatpush1.bf16.msra.mxu0 %v3434
      %4100 = vmatprep.mubr.bf16.mxu0 %v1963
      %4101 = vmatmul.mubr.bf16.gmra.mrb[0].mxu0 %v1962
      %v4102 = vpop.f32.mrb[0].mxu0
      %v4103 = vadd.f32 %v4060, %v4102
      %v4104 = vpop.f32.mrb[0].mxu0
      %v4105 = vadd.f32 %v4062, %v4104
      %v4106 = vpop.f32.mrb[0].mxu0
      %v4107 = vadd.f32 %v4064, %v4106
      %v4108 = vpop.f32.mrb[0].mxu0
      %v4109 = vadd.f32 %v4066, %v4108
      %4110 = vdwg.mxu0
      %v4111 = vtanh.pop %v3845
      %v4112 = vtanh.pop %v3847
      %v4113 = vtanh.pop %v3974
      %v4114 = vtanh.pop %v3976
      %v4115 = vtanh.pop %v4103
      %v4116 = vtanh.pop %v4105
      %v4117 = vtanh.pop %v3849
      %v4118 = vtanh.pop %v3851
      %v4119 = vtanh.pop %v3978
      %v4120 = vtanh.pop %v3980
      %v4121 = vtanh.pop %v4107
      %v4122 = vtanh.pop %v4109
      %v4123 = vpack.c.bf16 %v4117, %v4111
      %v4124 = vpack.c.bf16 %v4118, %v4112
      %v4125 = vpack.c.bf16 %v4119, %v4113
      %v4126 = vpack.c.bf16 %v4120, %v4114
      %v4127 = vpack.c.bf16 %v4121, %v4115
      %v4128 = vpack.c.bf16 %v4122, %v4116
      %v4129 = vld [vmem:[#allocation12] sm:$0xff]
      %v4130 = vld [vmem:[#allocation12 + $0x8] sm:$0xff]
      %v4131 = vld [vmem:[#allocation12 + $0x10] sm:$0xff]
      %v4132 = vld [vmem:[#allocation12 + $0x18] sm:$0xff]
      %v4133 = vld [vmem:[#allocation12 + $0x20] sm:$0xff]
      %v4134 = vld [vmem:[#allocation12 + $0x28] sm:$0xff]
      %v4135 = vld [vmem:[#allocation12 + $0x30] sm:$0xff]
      %v4136 = vld [vmem:[#allocation12 + $0x38] sm:$0xff]
      %v4137 = vld [vmem:[#allocation12 + $0x40] sm:$0xff]
      %v4138 = vld [vmem:[#allocation12 + $0x48] sm:$0xff]
      %v4139 = vld [vmem:[#allocation12 + $0x50] sm:$0xff]
      %v4140 = vld [vmem:[#allocation12 + $0x58] sm:$0xff]
      %v4141 = vld [vmem:[#allocation12 + $0x60] sm:$0xff]
      %v4142 = vld [vmem:[#allocation12 + $0x68] sm:$0xff]
      %v4143 = vld [vmem:[#allocation12 + $0x70] sm:$0xff]
      %v4144 = vld [vmem:[#allocation12 + $0x78] sm:$0xff]
      %v4145 = vld [vmem:[#allocation12 + $0x80] sm:$0xff]
      %v4146 = vld [vmem:[#allocation12 + $0x88] sm:$0xff]
      %v4147 = vld [vmem:[#allocation12 + $0x90] sm:$0xff]
      %v4148 = vld [vmem:[#allocation12 + $0x98] sm:$0xff]
      %v4149 = vld [vmem:[#allocation12 + $0xa0] sm:$0xff]
      %v4150 = vld [vmem:[#allocation12 + $0xa8] sm:$0xff]
      %v4151 = vld [vmem:[#allocation12 + $0xb0] sm:$0xff]
      %v4152 = vld [vmem:[#allocation12 + $0xb8] sm:$0xff]
      %v4153 = vld [vmem:[#allocation12 + $0xc0] sm:$0xff]
      %v4154 = vld [vmem:[#allocation12 + $0xc8] sm:$0xff]
      %v4155 = vld [vmem:[#allocation12 + $0xd0] sm:$0xff]
      %v4156 = vld [vmem:[#allocation12 + $0xd8] sm:$0xff]
      %v4157 = vld [vmem:[#allocation12 + $0xe0] sm:$0xff]
      %v4158 = vld [vmem:[#allocation12 + $0xe8] sm:$0xff]
      %v4159 = vld [vmem:[#allocation12 + $0xf0] sm:$0xff]
      %v4160 = vld [vmem:[#allocation12 + $0xf8] sm:$0xff]
      %v4161 = vld [vmem:[#allocation12 + $0x100] sm:$0xff]
      %v4162 = vld [vmem:[#allocation12 + $0x108] sm:$0xff]
      %v4163 = vld [vmem:[#allocation12 + $0x110] sm:$0xff]
      %v4164 = vld [vmem:[#allocation12 + $0x118] sm:$0xff]
      %v4165 = vld [vmem:[#allocation12 + $0x120] sm:$0xff]
      %v4166 = vld [vmem:[#allocation12 + $0x128] sm:$0xff]
      %v4167 = vld [vmem:[#allocation12 + $0x130] sm:$0xff]
      %v4168 = vld [vmem:[#allocation12 + $0x138] sm:$0xff]
      %v4169 = vld [vmem:[#allocation12 + $0x140] sm:$0xff]
      %v4170 = vld [vmem:[#allocation12 + $0x148] sm:$0xff]
      %v4171 = vld [vmem:[#allocation12 + $0x150] sm:$0xff]
      %v4172 = vld [vmem:[#allocation12 + $0x158] sm:$0xff]
      %v4173 = vld [vmem:[#allocation12 + $0x160] sm:$0xff]
      %v4174 = vld [vmem:[#allocation12 + $0x168] sm:$0xff]
      %v4175 = vld [vmem:[#allocation12 + $0x170] sm:$0xff]
      %v4176 = vld [vmem:[#allocation12 + $0x178] sm:$0xff]
      %v4177 = vld [vmem:[#allocation12 + $0x180] sm:$0xff]
      %v4178 = vld [vmem:[#allocation12 + $0x188] sm:$0xff]
      %v4179 = vld [vmem:[#allocation12 + $0x190] sm:$0xff]
      %v4180 = vld [vmem:[#allocation12 + $0x198] sm:$0xff]
      %v4181 = vld [vmem:[#allocation12 + $0x1a0] sm:$0xff]
      %v4182 = vld [vmem:[#allocation12 + $0x1a8] sm:$0xff]
      %v4183 = vld [vmem:[#allocation12 + $0x1b0] sm:$0xff]
      %v4184 = vld [vmem:[#allocation12 + $0x1b8] sm:$0xff]
      %v4185 = vld [vmem:[#allocation12 + $0x1c0] sm:$0xff]
      %v4186 = vld [vmem:[#allocation12 + $0x1c8] sm:$0xff]
      %v4187 = vld [vmem:[#allocation12 + $0x1d0] sm:$0xff]
      %v4188 = vld [vmem:[#allocation12 + $0x1d8] sm:$0xff]
      %v4189 = vld [vmem:[#allocation12 + $0x1e0] sm:$0xff]
      %v4190 = vld [vmem:[#allocation12 + $0x1e8] sm:$0xff]
      %v4191 = vld [vmem:[#allocation12 + $0x1f0] sm:$0xff]
      %v4192 = vld [vmem:[#allocation12 + $0x1f8] sm:$0xff]
      %v4193 = vld [vmem:[#allocation12 + $0x200] sm:$0xff]
      %v4194 = vld [vmem:[#allocation12 + $0x208] sm:$0xff]
      %v4195 = vld [vmem:[#allocation12 + $0x210] sm:$0xff]
      %v4196 = vld [vmem:[#allocation12 + $0x218] sm:$0xff]
      %v4197 = vld [vmem:[#allocation12 + $0x220] sm:$0xff]
      %v4198 = vld [vmem:[#allocation12 + $0x228] sm:$0xff]
      %v4199 = vld [vmem:[#allocation12 + $0x230] sm:$0xff]
      %v4200 = vld [vmem:[#allocation12 + $0x238] sm:$0xff]
      %v4201 = vld [vmem:[#allocation12 + $0x240] sm:$0xff]
      %v4202 = vld [vmem:[#allocation12 + $0x248] sm:$0xff]
      %v4203 = vld [vmem:[#allocation12 + $0x250] sm:$0xff]
      %v4204 = vld [vmem:[#allocation12 + $0x258] sm:$0xff]
      %v4205 = vld [vmem:[#allocation12 + $0x260] sm:$0xff]
      %v4206 = vld [vmem:[#allocation12 + $0x268] sm:$0xff]
      %v4207 = vld [vmem:[#allocation12 + $0x270] sm:$0xff]
      %v4208 = vld [vmem:[#allocation12 + $0x278] sm:$0xff]
      %v4209 = vld [vmem:[#allocation12 + $0x280] sm:$0xff]
      %v4210 = vld [vmem:[#allocation12 + $0x288] sm:$0xff]
      %v4211 = vld [vmem:[#allocation12 + $0x290] sm:$0xff]
      %v4212 = vld [vmem:[#allocation12 + $0x298] sm:$0xff]
      %v4213 = vld [vmem:[#allocation12 + $0x2a0] sm:$0xff]
      %v4214 = vld [vmem:[#allocation12 + $0x2a8] sm:$0xff]
      %v4215 = vld [vmem:[#allocation12 + $0x2b0] sm:$0xff]
      %v4216 = vld [vmem:[#allocation12 + $0x2b8] sm:$0xff]
      %v4217 = vld [vmem:[#allocation12 + $0x2c0] sm:$0xff]
      %v4218 = vld [vmem:[#allocation12 + $0x2c8] sm:$0xff]
      %v4219 = vld [vmem:[#allocation12 + $0x2d0] sm:$0xff]
      %v4220 = vld [vmem:[#allocation12 + $0x2d8] sm:$0xff]
      %v4221 = vld [vmem:[#allocation12 + $0x2e0] sm:$0xff]
      %v4222 = vld [vmem:[#allocation12 + $0x2e8] sm:$0xff]
      %v4223 = vld [vmem:[#allocation12 + $0x2f0] sm:$0xff]
      %v4224 = vld [vmem:[#allocation12 + $0x2f8] sm:$0xff]
      %v4225 = vld [vmem:[#allocation12 + $0x300] sm:$0xff]
      %v4226 = vld [vmem:[#allocation12 + $0x308] sm:$0xff]
      %v4227 = vld [vmem:[#allocation12 + $0x310] sm:$0xff]
      %v4228 = vld [vmem:[#allocation12 + $0x318] sm:$0xff]
      %v4229 = vld [vmem:[#allocation12 + $0x320] sm:$0xff]
      %v4230 = vld [vmem:[#allocation12 + $0x328] sm:$0xff]
      %v4231 = vld [vmem:[#allocation12 + $0x330] sm:$0xff]
      %v4232 = vld [vmem:[#allocation12 + $0x338] sm:$0xff]
      %v4233 = vld [vmem:[#allocation12 + $0x340] sm:$0xff]
      %v4234 = vld [vmem:[#allocation12 + $0x348] sm:$0xff]
      %v4235 = vld [vmem:[#allocation12 + $0x350] sm:$0xff]
      %v4236 = vld [vmem:[#allocation12 + $0x358] sm:$0xff]
      %v4237 = vld [vmem:[#allocation12 + $0x360] sm:$0xff]
      %v4238 = vld [vmem:[#allocation12 + $0x368] sm:$0xff]
      %v4239 = vld [vmem:[#allocation12 + $0x370] sm:$0xff]
      %v4240 = vld [vmem:[#allocation12 + $0x378] sm:$0xff]
      %v4241 = vld [vmem:[#allocation12 + $0x380] sm:$0xff]
      %v4242 = vld [vmem:[#allocation12 + $0x388] sm:$0xff]
      %v4243 = vld [vmem:[#allocation12 + $0x390] sm:$0xff]
      %v4244 = vld [vmem:[#allocation12 + $0x398] sm:$0xff]
      %v4245 = vld [vmem:[#allocation12 + $0x3a0] sm:$0xff]
      %v4246 = vld [vmem:[#allocation12 + $0x3a8] sm:$0xff]
      %v4247 = vld [vmem:[#allocation12 + $0x3b0] sm:$0xff]
      %v4248 = vld [vmem:[#allocation12 + $0x3b8] sm:$0xff]
      %v4249 = vld [vmem:[#allocation12 + $0x3c0] sm:$0xff]
      %v4250 = vld [vmem:[#allocation12 + $0x3c8] sm:$0xff]
      %v4251 = vld [vmem:[#allocation12 + $0x3d0] sm:$0xff]
      %v4252 = vld [vmem:[#allocation12 + $0x3d8] sm:$0xff]
      %v4253 = vld [vmem:[#allocation12 + $0x3e0] sm:$0xff]
      %v4254 = vld [vmem:[#allocation12 + $0x3e8] sm:$0xff]
      %v4255 = vld [vmem:[#allocation12 + $0x3f0] sm:$0xff]
      %v4256 = vld [vmem:[#allocation12 + $0x3f8] sm:$0xff]
      %v4257 = vld [vmem:[#allocation12 + $0x400] sm:$0xff]
      %v4258 = vld [vmem:[#allocation12 + $0x408] sm:$0xff]
      %v4259 = vld [vmem:[#allocation12 + $0x410] sm:$0xff]
      %v4260 = vld [vmem:[#allocation12 + $0x418] sm:$0xff]
      %v4261 = vld [vmem:[#allocation12 + $0x420] sm:$0xff]
      %v4262 = vld [vmem:[#allocation12 + $0x428] sm:$0xff]
      %v4263 = vld [vmem:[#allocation12 + $0x430] sm:$0xff]
      %v4264 = vld [vmem:[#allocation12 + $0x438] sm:$0xff]
      %v4265 = vld [vmem:[#allocation12 + $0x440] sm:$0xff]
      %v4266 = vld [vmem:[#allocation12 + $0x448] sm:$0xff]
      %v4267 = vld [vmem:[#allocation12 + $0x450] sm:$0xff]
      %v4268 = vld [vmem:[#allocation12 + $0x458] sm:$0xff]
      %v4269 = vld [vmem:[#allocation12 + $0x460] sm:$0xff]
      %v4270 = vld [vmem:[#allocation12 + $0x468] sm:$0xff]
      %v4271 = vld [vmem:[#allocation12 + $0x470] sm:$0xff]
      %v4272 = vld [vmem:[#allocation12 + $0x478] sm:$0xff]
      %v4273 = vld [vmem:[#allocation12 + $0x480] sm:$0xff]
      %v4274 = vld [vmem:[#allocation12 + $0x488] sm:$0xff]
      %v4275 = vld [vmem:[#allocation12 + $0x490] sm:$0xff]
      %v4276 = vld [vmem:[#allocation12 + $0x498] sm:$0xff]
      %v4277 = vld [vmem:[#allocation12 + $0x4a0] sm:$0xff]
      %v4278 = vld [vmem:[#allocation12 + $0x4a8] sm:$0xff]
      %v4279 = vld [vmem:[#allocation12 + $0x4b0] sm:$0xff]
      %v4280 = vld [vmem:[#allocation12 + $0x4b8] sm:$0xff]
      %v4281 = vld [vmem:[#allocation12 + $0x4c0] sm:$0xff]
      %v4282 = vld [vmem:[#allocation12 + $0x4c8] sm:$0xff]
      %v4283 = vld [vmem:[#allocation12 + $0x4d0] sm:$0xff]
      %v4284 = vld [vmem:[#allocation12 + $0x4d8] sm:$0xff]
      %v4285 = vld [vmem:[#allocation12 + $0x4e0] sm:$0xff]
      %v4286 = vld [vmem:[#allocation12 + $0x4e8] sm:$0xff]
      %v4287 = vld [vmem:[#allocation12 + $0x4f0] sm:$0xff]
      %v4288 = vld [vmem:[#allocation12 + $0x4f8] sm:$0xff]
      %v4289 = vld [vmem:[#allocation12 + $0x500] sm:$0xff]
      %v4290 = vld [vmem:[#allocation12 + $0x508] sm:$0xff]
      %v4291 = vld [vmem:[#allocation12 + $0x510] sm:$0xff]
      %v4292 = vld [vmem:[#allocation12 + $0x518] sm:$0xff]
      %v4293 = vld [vmem:[#allocation12 + $0x520] sm:$0xff]
      %v4294 = vld [vmem:[#allocation12 + $0x528] sm:$0xff]
      %v4295 = vld [vmem:[#allocation12 + $0x530] sm:$0xff]
      %v4296 = vld [vmem:[#allocation12 + $0x538] sm:$0xff]
      %v4297 = vld [vmem:[#allocation12 + $0x540] sm:$0xff]
      %v4298 = vld [vmem:[#allocation12 + $0x548] sm:$0xff]
      %v4299 = vld [vmem:[#allocation12 + $0x550] sm:$0xff]
      %v4300 = vld [vmem:[#allocation12 + $0x558] sm:$0xff]
      %v4301 = vld [vmem:[#allocation12 + $0x560] sm:$0xff]
      %v4302 = vld [vmem:[#allocation12 + $0x568] sm:$0xff]
      %v4303 = vld [vmem:[#allocation12 + $0x570] sm:$0xff]
      %v4304 = vld [vmem:[#allocation12 + $0x578] sm:$0xff]
      %v4305 = vld [vmem:[#allocation12 + $0x580] sm:$0xff]
      %v4306 = vld [vmem:[#allocation12 + $0x588] sm:$0xff]
      %v4307 = vld [vmem:[#allocation12 + $0x590] sm:$0xff]
      %v4308 = vld [vmem:[#allocation12 + $0x598] sm:$0xff]
      %v4309 = vld [vmem:[#allocation12 + $0x5a0] sm:$0xff]
      %v4310 = vld [vmem:[#allocation12 + $0x5a8] sm:$0xff]
      %v4311 = vld [vmem:[#allocation12 + $0x5b0] sm:$0xff]
      %v4312 = vld [vmem:[#allocation12 + $0x5b8] sm:$0xff]
      %v4313 = vld [vmem:[#allocation12 + $0x5c0] sm:$0xff]
      %v4314 = vld [vmem:[#allocation12 + $0x5c8] sm:$0xff]
      %v4315 = vld [vmem:[#allocation12 + $0x5d0] sm:$0xff]
      %v4316 = vld [vmem:[#allocation12 + $0x5d8] sm:$0xff]
      %v4317 = vld [vmem:[#allocation12 + $0x5e0] sm:$0xff]
      %v4318 = vld [vmem:[#allocation12 + $0x5e8] sm:$0xff]
      %v4319 = vld [vmem:[#allocation12 + $0x5f0] sm:$0xff]
      %v4320 = vld [vmem:[#allocation12 + $0x5f8] sm:$0xff]
      %v4321 = vld [vmem:[#allocation13] sm:$0xf]
      %v4323 = vlaneseq
      %v4324 = vshrl.u32 %v4323, 7
      %v4325 = vsub.s32 0, %v4324
      %v4326 = vrot.slane %v4321, %v4325
      %v4327 = vlaneseq
      %v4328 = vshrl.u32 %v4327, 7
      %v4329 = vsub.s32 1, %v4328
      %v4330 = vrot.slane %v4321, %v4329
      %v4331 = vlaneseq
      %v4332 = vshrl.u32 %v4331, 7
      %v4333 = vsub.s32 2, %v4332
      %v4334 = vrot.slane %v4321, %v4333
      %v4335 = vlaneseq
      %v4336 = vshrl.u32 %v4335, 7
      %v4337 = vsub.s32 3, %v4336
      %v4338 = vrot.slane %v4321, %v4337
      %v4535 = vunpack.c.l.b16 %v4129
      %v4536 = vunpack.c.h.b16 %v4129
      %v4537 = vunpack.c.l.b16 %v4130
      %v4538 = vunpack.c.h.b16 %v4130
      %v4539 = vunpack.c.l.b16 %v4131
      %v4540 = vunpack.c.h.b16 %v4131
      %v4541 = vunpack.c.l.b16 %v4132
      %v4542 = vunpack.c.h.b16 %v4132
      %v4543 = vunpack.c.l.b16 %v4133
      %v4544 = vunpack.c.h.b16 %v4133
      %v4545 = vunpack.c.l.b16 %v4134
      %v4546 = vunpack.c.h.b16 %v4134
      %v4547 = vunpack.c.l.b16 %v4135
      %v4548 = vunpack.c.h.b16 %v4135
      %v4549 = vunpack.c.l.b16 %v4136
      %v4550 = vunpack.c.h.b16 %v4136
      %v4551 = vunpack.c.l.b16 %v4137
      %v4552 = vunpack.c.h.b16 %v4137
      %v4553 = vunpack.c.l.b16 %v4138
      %v4554 = vunpack.c.h.b16 %v4138
      %v4555 = vunpack.c.l.b16 %v4139
      %v4556 = vunpack.c.h.b16 %v4139
      %v4557 = vunpack.c.l.b16 %v4140
      %v4558 = vunpack.c.h.b16 %v4140
      %v4559 = vunpack.c.l.b16 %v4141
      %v4560 = vunpack.c.h.b16 %v4141
      %v4561 = vunpack.c.l.b16 %v4142
      %v4562 = vunpack.c.h.b16 %v4142
      %v4563 = vunpack.c.l.b16 %v4143
      %v4564 = vunpack.c.h.b16 %v4143
      %v4565 = vunpack.c.l.b16 %v4144
      %v4566 = vunpack.c.h.b16 %v4144
      %v4567 = vunpack.c.l.b16 %v4145
      %v4568 = vunpack.c.h.b16 %v4145
      %v4569 = vunpack.c.l.b16 %v4146
      %v4570 = vunpack.c.h.b16 %v4146
      %v4571 = vunpack.c.l.b16 %v4147
      %v4572 = vunpack.c.h.b16 %v4147
      %v4573 = vunpack.c.l.b16 %v4148
      %v4574 = vunpack.c.h.b16 %v4148
      %v4575 = vunpack.c.l.b16 %v4149
      %v4576 = vunpack.c.h.b16 %v4149
      %v4577 = vunpack.c.l.b16 %v4150
      %v4578 = vunpack.c.h.b16 %v4150
      %v4579 = vunpack.c.l.b16 %v4151
      %v4580 = vunpack.c.h.b16 %v4151
      %v4581 = vunpack.c.l.b16 %v4152
      %v4582 = vunpack.c.h.b16 %v4152
      %v4583 = vunpack.c.l.b16 %v4153
      %v4584 = vunpack.c.h.b16 %v4153
      %v4585 = vunpack.c.l.b16 %v4154
      %v4586 = vunpack.c.h.b16 %v4154
      %v4587 = vunpack.c.l.b16 %v4155
      %v4588 = vunpack.c.h.b16 %v4155
      %v4589 = vunpack.c.l.b16 %v4156
      %v4590 = vunpack.c.h.b16 %v4156
      %v4591 = vunpack.c.l.b16 %v4157
      %v4592 = vunpack.c.h.b16 %v4157
      %v4593 = vunpack.c.l.b16 %v4158
      %v4594 = vunpack.c.h.b16 %v4158
      %v4595 = vunpack.c.l.b16 %v4159
      %v4596 = vunpack.c.h.b16 %v4159
      %v4597 = vunpack.c.l.b16 %v4160
      %v4598 = vunpack.c.h.b16 %v4160
      %v4599 = vunpack.c.l.b16 %v4161
      %v4600 = vunpack.c.h.b16 %v4161
      %v4601 = vunpack.c.l.b16 %v4162
      %v4602 = vunpack.c.h.b16 %v4162
      %v4603 = vunpack.c.l.b16 %v4163
      %v4604 = vunpack.c.h.b16 %v4163
      %v4605 = vunpack.c.l.b16 %v4164
      %v4606 = vunpack.c.h.b16 %v4164
      %v4607 = vunpack.c.l.b16 %v4165
      %v4608 = vunpack.c.h.b16 %v4165
      %v4609 = vunpack.c.l.b16 %v4166
      %v4610 = vunpack.c.h.b16 %v4166
      %v4611 = vunpack.c.l.b16 %v4167
      %v4612 = vunpack.c.h.b16 %v4167
      %v4613 = vunpack.c.l.b16 %v4168
      %v4614 = vunpack.c.h.b16 %v4168
      %v4615 = vunpack.c.l.b16 %v4169
      %v4616 = vunpack.c.h.b16 %v4169
      %v4617 = vunpack.c.l.b16 %v4170
      %v4618 = vunpack.c.h.b16 %v4170
      %v4619 = vunpack.c.l.b16 %v4171
      %v4620 = vunpack.c.h.b16 %v4171
      %v4621 = vunpack.c.l.b16 %v4172
      %v4622 = vunpack.c.h.b16 %v4172
      %v4623 = vunpack.c.l.b16 %v4173
      %v4624 = vunpack.c.h.b16 %v4173
      %v4625 = vunpack.c.l.b16 %v4174
      %v4626 = vunpack.c.h.b16 %v4174
      %v4627 = vunpack.c.l.b16 %v4175
      %v4628 = vunpack.c.h.b16 %v4175
      %v4629 = vunpack.c.l.b16 %v4176
      %v4630 = vunpack.c.h.b16 %v4176
      %v4631 = vunpack.c.l.b16 %v4177
      %v4632 = vunpack.c.h.b16 %v4177
      %v4633 = vunpack.c.l.b16 %v4178
      %v4634 = vunpack.c.h.b16 %v4178
      %v4635 = vunpack.c.l.b16 %v4179
      %v4636 = vunpack.c.h.b16 %v4179
      %v4637 = vunpack.c.l.b16 %v4180
      %v4638 = vunpack.c.h.b16 %v4180
      %v4639 = vunpack.c.l.b16 %v4181
      %v4640 = vunpack.c.h.b16 %v4181
      %v4641 = vunpack.c.l.b16 %v4182
      %v4642 = vunpack.c.h.b16 %v4182
      %v4643 = vunpack.c.l.b16 %v4183
      %v4644 = vunpack.c.h.b16 %v4183
      %v4645 = vunpack.c.l.b16 %v4184
      %v4646 = vunpack.c.h.b16 %v4184
      %v4647 = vunpack.c.l.b16 %v4185
      %v4648 = vunpack.c.h.b16 %v4185
      %v4649 = vunpack.c.l.b16 %v4186
      %v4650 = vunpack.c.h.b16 %v4186
      %v4651 = vunpack.c.l.b16 %v4187
      %v4652 = vunpack.c.h.b16 %v4187
      %v4653 = vunpack.c.l.b16 %v4188
      %v4654 = vunpack.c.h.b16 %v4188
      %v4655 = vunpack.c.l.b16 %v4189
      %v4656 = vunpack.c.h.b16 %v4189
      %v4657 = vunpack.c.l.b16 %v4190
      %v4658 = vunpack.c.h.b16 %v4190
      %v4659 = vunpack.c.l.b16 %v4191
      %v4660 = vunpack.c.h.b16 %v4191
      %v4661 = vunpack.c.l.b16 %v4192
      %v4662 = vunpack.c.h.b16 %v4192
      %v4663 = vunpack.c.l.b16 %v4193
      %v4664 = vunpack.c.h.b16 %v4193
      %v4665 = vunpack.c.l.b16 %v4194
      %v4666 = vunpack.c.h.b16 %v4194
      %v4667 = vunpack.c.l.b16 %v4195
      %v4668 = vunpack.c.h.b16 %v4195
      %v4669 = vunpack.c.l.b16 %v4196
      %v4670 = vunpack.c.h.b16 %v4196
      %v4671 = vunpack.c.l.b16 %v4197
      %v4672 = vunpack.c.h.b16 %v4197
      %v4673 = vunpack.c.l.b16 %v4198
      %v4674 = vunpack.c.h.b16 %v4198
      %v4675 = vunpack.c.l.b16 %v4199
      %v4676 = vunpack.c.h.b16 %v4199
      %v4677 = vunpack.c.l.b16 %v4200
      %v4678 = vunpack.c.h.b16 %v4200
      %v4679 = vunpack.c.l.b16 %v4201
      %v4680 = vunpack.c.h.b16 %v4201
      %v4681 = vunpack.c.l.b16 %v4202
      %v4682 = vunpack.c.h.b16 %v4202
      %v4683 = vunpack.c.l.b16 %v4203
      %v4684 = vunpack.c.h.b16 %v4203
      %v4685 = vunpack.c.l.b16 %v4204
      %v4686 = vunpack.c.h.b16 %v4204
      %v4687 = vunpack.c.l.b16 %v4205
      %v4688 = vunpack.c.h.b16 %v4205
      %v4689 = vunpack.c.l.b16 %v4206
      %v4690 = vunpack.c.h.b16 %v4206
      %v4691 = vunpack.c.l.b16 %v4207
      %v4692 = vunpack.c.h.b16 %v4207
      %v4693 = vunpack.c.l.b16 %v4208
      %v4694 = vunpack.c.h.b16 %v4208
      %v4695 = vunpack.c.l.b16 %v4209
      %v4696 = vunpack.c.h.b16 %v4209
      %v4697 = vunpack.c.l.b16 %v4210
      %v4698 = vunpack.c.h.b16 %v4210
      %v4699 = vunpack.c.l.b16 %v4211
      %v4700 = vunpack.c.h.b16 %v4211
      %v4701 = vunpack.c.l.b16 %v4212
      %v4702 = vunpack.c.h.b16 %v4212
      %v4703 = vunpack.c.l.b16 %v4213
      %v4704 = vunpack.c.h.b16 %v4213
      %v4705 = vunpack.c.l.b16 %v4214
      %v4706 = vunpack.c.h.b16 %v4214
      %v4707 = vunpack.c.l.b16 %v4215
      %v4708 = vunpack.c.h.b16 %v4215
      %v4709 = vunpack.c.l.b16 %v4216
      %v4710 = vunpack.c.h.b16 %v4216
      %v4711 = vunpack.c.l.b16 %v4217
      %v4712 = vunpack.c.h.b16 %v4217
      %v4713 = vunpack.c.l.b16 %v4218
      %v4714 = vunpack.c.h.b16 %v4218
      %v4715 = vunpack.c.l.b16 %v4219
      %v4716 = vunpack.c.h.b16 %v4219
      %v4717 = vunpack.c.l.b16 %v4220
      %v4718 = vunpack.c.h.b16 %v4220
      %v4719 = vunpack.c.l.b16 %v4221
      %v4720 = vunpack.c.h.b16 %v4221
      %v4721 = vunpack.c.l.b16 %v4222
      %v4722 = vunpack.c.h.b16 %v4222
      %v4723 = vunpack.c.l.b16 %v4223
      %v4724 = vunpack.c.h.b16 %v4223
      %v4725 = vunpack.c.l.b16 %v4224
      %v4726 = vunpack.c.h.b16 %v4224
      %v4727 = vunpack.c.l.b16 %v4225
      %v4728 = vunpack.c.h.b16 %v4225
      %v4729 = vunpack.c.l.b16 %v4226
      %v4730 = vunpack.c.h.b16 %v4226
      %v4731 = vunpack.c.l.b16 %v4227
      %v4732 = vunpack.c.h.b16 %v4227
      %v4733 = vunpack.c.l.b16 %v4228
      %v4734 = vunpack.c.h.b16 %v4228
      %v4735 = vunpack.c.l.b16 %v4229
      %v4736 = vunpack.c.h.b16 %v4229
      %v4737 = vunpack.c.l.b16 %v4230
      %v4738 = vunpack.c.h.b16 %v4230
      %v4739 = vunpack.c.l.b16 %v4231
      %v4740 = vunpack.c.h.b16 %v4231
      %v4741 = vunpack.c.l.b16 %v4232
      %v4742 = vunpack.c.h.b16 %v4232
      %v4743 = vunpack.c.l.b16 %v4233
      %v4744 = vunpack.c.h.b16 %v4233
      %v4745 = vunpack.c.l.b16 %v4234
      %v4746 = vunpack.c.h.b16 %v4234
      %v4747 = vunpack.c.l.b16 %v4235
      %v4748 = vunpack.c.h.b16 %v4235
      %v4749 = vunpack.c.l.b16 %v4236
      %v4750 = vunpack.c.h.b16 %v4236
      %v4751 = vunpack.c.l.b16 %v4237
      %v4752 = vunpack.c.h.b16 %v4237
      %v4753 = vunpack.c.l.b16 %v4238
      %v4754 = vunpack.c.h.b16 %v4238
      %v4755 = vunpack.c.l.b16 %v4239
      %v4756 = vunpack.c.h.b16 %v4239
      %v4757 = vunpack.c.l.b16 %v4240
      %v4758 = vunpack.c.h.b16 %v4240
      %v4759 = vunpack.c.l.b16 %v4241
      %v4760 = vunpack.c.h.b16 %v4241
      %v4761 = vunpack.c.l.b16 %v4242
      %v4762 = vunpack.c.h.b16 %v4242
      %v4763 = vunpack.c.l.b16 %v4243
      %v4764 = vunpack.c.h.b16 %v4243
      %v4765 = vunpack.c.l.b16 %v4244
      %v4766 = vunpack.c.h.b16 %v4244
      %v4767 = vunpack.c.l.b16 %v4245
      %v4768 = vunpack.c.h.b16 %v4245
      %v4769 = vunpack.c.l.b16 %v4246
      %v4770 = vunpack.c.h.b16 %v4246
      %v4771 = vunpack.c.l.b16 %v4247
      %v4772 = vunpack.c.h.b16 %v4247
      %v4773 = vunpack.c.l.b16 %v4248
      %v4774 = vunpack.c.h.b16 %v4248
      %v4775 = vunpack.c.l.b16 %v4249
      %v4776 = vunpack.c.h.b16 %v4249
      %v4777 = vunpack.c.l.b16 %v4250
      %v4778 = vunpack.c.h.b16 %v4250
      %v4779 = vunpack.c.l.b16 %v4251
      %v4780 = vunpack.c.h.b16 %v4251
      %v4781 = vunpack.c.l.b16 %v4252
      %v4782 = vunpack.c.h.b16 %v4252
      %v4783 = vunpack.c.l.b16 %v4253
      %v4784 = vunpack.c.h.b16 %v4253
      %v4785 = vunpack.c.l.b16 %v4254
      %v4786 = vunpack.c.h.b16 %v4254
      %v4787 = vunpack.c.l.b16 %v4255
      %v4788 = vunpack.c.h.b16 %v4255
      %v4789 = vunpack.c.l.b16 %v4256
      %v4790 = vunpack.c.h.b16 %v4256
      %v4791 = vunpack.c.l.b16 %v4257
      %v4792 = vunpack.c.h.b16 %v4257
      %v4793 = vunpack.c.l.b16 %v4258
      %v4794 = vunpack.c.h.b16 %v4258
      %v4795 = vunpack.c.l.b16 %v4259
      %v4796 = vunpack.c.h.b16 %v4259
      %v4797 = vunpack.c.l.b16 %v4260
      %v4798 = vunpack.c.h.b16 %v4260
      %v4799 = vunpack.c.l.b16 %v4261
      %v4800 = vunpack.c.h.b16 %v4261
      %v4801 = vunpack.c.l.b16 %v4262
      %v4802 = vunpack.c.h.b16 %v4262
      %v4803 = vunpack.c.l.b16 %v4263
      %v4804 = vunpack.c.h.b16 %v4263
      %v4805 = vunpack.c.l.b16 %v4264
      %v4806 = vunpack.c.h.b16 %v4264
      %v4807 = vunpack.c.l.b16 %v4265
      %v4808 = vunpack.c.h.b16 %v4265
      %v4809 = vunpack.c.l.b16 %v4266
      %v4810 = vunpack.c.h.b16 %v4266
      %v4811 = vunpack.c.l.b16 %v4267
      %v4812 = vunpack.c.h.b16 %v4267
      %v4813 = vunpack.c.l.b16 %v4268
      %v4814 = vunpack.c.h.b16 %v4268
      %v4815 = vunpack.c.l.b16 %v4269
      %v4816 = vunpack.c.h.b16 %v4269
      %v4817 = vunpack.c.l.b16 %v4270
      %v4818 = vunpack.c.h.b16 %v4270
      %v4819 = vunpack.c.l.b16 %v4271
      %v4820 = vunpack.c.h.b16 %v4271
      %v4821 = vunpack.c.l.b16 %v4272
      %v4822 = vunpack.c.h.b16 %v4272
      %v4823 = vunpack.c.l.b16 %v4273
      %v4824 = vunpack.c.h.b16 %v4273
      %v4825 = vunpack.c.l.b16 %v4274
      %v4826 = vunpack.c.h.b16 %v4274
      %v4827 = vunpack.c.l.b16 %v4275
      %v4828 = vunpack.c.h.b16 %v4275
      %v4829 = vunpack.c.l.b16 %v4276
      %v4830 = vunpack.c.h.b16 %v4276
      %v4831 = vunpack.c.l.b16 %v4277
      %v4832 = vunpack.c.h.b16 %v4277
      %v4833 = vunpack.c.l.b16 %v4278
      %v4834 = vunpack.c.h.b16 %v4278
      %v4835 = vunpack.c.l.b16 %v4279
      %v4836 = vunpack.c.h.b16 %v4279
      %v4837 = vunpack.c.l.b16 %v4280
      %v4838 = vunpack.c.h.b16 %v4280
      %v4839 = vunpack.c.l.b16 %v4281
      %v4840 = vunpack.c.h.b16 %v4281
      %v4841 = vunpack.c.l.b16 %v4282
      %v4842 = vunpack.c.h.b16 %v4282
      %v4843 = vunpack.c.l.b16 %v4283
      %v4844 = vunpack.c.h.b16 %v4283
      %v4845 = vunpack.c.l.b16 %v4284
      %v4846 = vunpack.c.h.b16 %v4284
      %v4847 = vunpack.c.l.b16 %v4285
      %v4848 = vunpack.c.h.b16 %v4285
      %v4849 = vunpack.c.l.b16 %v4286
      %v4850 = vunpack.c.h.b16 %v4286
      %v4851 = vunpack.c.l.b16 %v4287
      %v4852 = vunpack.c.h.b16 %v4287
      %v4853 = vunpack.c.l.b16 %v4288
      %v4854 = vunpack.c.h.b16 %v4288
      %v4855 = vunpack.c.l.b16 %v4289
      %v4856 = vunpack.c.h.b16 %v4289
      %v4857 = vunpack.c.l.b16 %v4290
      %v4858 = vunpack.c.h.b16 %v4290
      %v4859 = vunpack.c.l.b16 %v4291
      %v4860 = vunpack.c.h.b16 %v4291
      %v4861 = vunpack.c.l.b16 %v4292
      %v4862 = vunpack.c.h.b16 %v4292
      %v4863 = vunpack.c.l.b16 %v4293
      %v4864 = vunpack.c.h.b16 %v4293
      %v4865 = vunpack.c.l.b16 %v4294
      %v4866 = vunpack.c.h.b16 %v4294
      %v4867 = vunpack.c.l.b16 %v4295
      %v4868 = vunpack.c.h.b16 %v4295
      %v4869 = vunpack.c.l.b16 %v4296
      %v4870 = vunpack.c.h.b16 %v4296
      %v4871 = vunpack.c.l.b16 %v4297
      %v4872 = vunpack.c.h.b16 %v4297
      %v4873 = vunpack.c.l.b16 %v4298
      %v4874 = vunpack.c.h.b16 %v4298
      %v4875 = vunpack.c.l.b16 %v4299
      %v4876 = vunpack.c.h.b16 %v4299
      %v4877 = vunpack.c.l.b16 %v4300
      %v4878 = vunpack.c.h.b16 %v4300
      %v4879 = vunpack.c.l.b16 %v4301
      %v4880 = vunpack.c.h.b16 %v4301
      %v4881 = vunpack.c.l.b16 %v4302
      %v4882 = vunpack.c.h.b16 %v4302
      %v4883 = vunpack.c.l.b16 %v4303
      %v4884 = vunpack.c.h.b16 %v4303
      %v4885 = vunpack.c.l.b16 %v4304
      %v4886 = vunpack.c.h.b16 %v4304
      %v4887 = vunpack.c.l.b16 %v4305
      %v4888 = vunpack.c.h.b16 %v4305
      %v4889 = vunpack.c.l.b16 %v4306
      %v4890 = vunpack.c.h.b16 %v4306
      %v4891 = vunpack.c.l.b16 %v4307
      %v4892 = vunpack.c.h.b16 %v4307
      %v4893 = vunpack.c.l.b16 %v4308
      %v4894 = vunpack.c.h.b16 %v4308
      %v4895 = vunpack.c.l.b16 %v4309
      %v4896 = vunpack.c.h.b16 %v4309
      %v4897 = vunpack.c.l.b16 %v4310
      %v4898 = vunpack.c.h.b16 %v4310
      %v4899 = vunpack.c.l.b16 %v4311
      %v4900 = vunpack.c.h.b16 %v4311
      %v4901 = vunpack.c.l.b16 %v4312
      %v4902 = vunpack.c.h.b16 %v4312
      %v4903 = vunpack.c.l.b16 %v4313
      %v4904 = vunpack.c.h.b16 %v4313
      %v4905 = vunpack.c.l.b16 %v4314
      %v4906 = vunpack.c.h.b16 %v4314
      %v4907 = vunpack.c.l.b16 %v4315
      %v4908 = vunpack.c.h.b16 %v4315
      %v4909 = vunpack.c.l.b16 %v4316
      %v4910 = vunpack.c.h.b16 %v4316
      %v4911 = vunpack.c.l.b16 %v4317
      %v4912 = vunpack.c.h.b16 %v4317
      %v4913 = vunpack.c.l.b16 %v4318
      %v4914 = vunpack.c.h.b16 %v4318
      %v4915 = vunpack.c.l.b16 %v4319
      %v4916 = vunpack.c.h.b16 %v4319
      %v4917 = vunpack.c.l.b16 %v4320
      %v4918 = vunpack.c.h.b16 %v4320
      %v4919 = vpack.c.b16 %v4539, %v4535
      %v4920 = vpack.c.b16 %v4540, %v4536
      %v4921 = vpack.c.b16 %v4541, %v4537
      %v4922 = vpack.c.b16 %v4542, %v4538
      %v4923 = vpack.c.b16 %v4547, %v4543
      %v4924 = vpack.c.b16 %v4548, %v4544
      %v4925 = vpack.c.b16 %v4549, %v4545
      %v4926 = vpack.c.b16 %v4550, %v4546
      %v4927 = vpack.c.b16 %v4555, %v4551
      %v4928 = vpack.c.b16 %v4556, %v4552
      %v4929 = vpack.c.b16 %v4557, %v4553
      %v4930 = vpack.c.b16 %v4558, %v4554
      %v4931 = vpack.c.b16 %v4563, %v4559
      %v4932 = vpack.c.b16 %v4564, %v4560
      %v4933 = vpack.c.b16 %v4565, %v4561
      %v4934 = vpack.c.b16 %v4566, %v4562
      %v4935 = vpack.c.b16 %v4571, %v4567
      %v4936 = vpack.c.b16 %v4572, %v4568
      %v4937 = vpack.c.b16 %v4573, %v4569
      %v4938 = vpack.c.b16 %v4574, %v4570
      %v4939 = vpack.c.b16 %v4579, %v4575
      %v4940 = vpack.c.b16 %v4580, %v4576
      %v4941 = vpack.c.b16 %v4581, %v4577
      %v4942 = vpack.c.b16 %v4582, %v4578
      %v4943 = vpack.c.b16 %v4587, %v4583
      %v4944 = vpack.c.b16 %v4588, %v4584
      %v4945 = vpack.c.b16 %v4589, %v4585
      %v4946 = vpack.c.b16 %v4590, %v4586
      %v4947 = vpack.c.b16 %v4595, %v4591
      %v4948 = vpack.c.b16 %v4596, %v4592
      %v4949 = vpack.c.b16 %v4597, %v4593
      %v4950 = vpack.c.b16 %v4598, %v4594
      %v4951 = vpack.c.b16 %v4603, %v4599
      %v4952 = vpack.c.b16 %v4604, %v4600
      %v4953 = vpack.c.b16 %v4605, %v4601
      %v4954 = vpack.c.b16 %v4606, %v4602
      %v4955 = vpack.c.b16 %v4611, %v4607
      %v4956 = vpack.c.b16 %v4612, %v4608
      %v4957 = vpack.c.b16 %v4613, %v4609
      %v4958 = vpack.c.b16 %v4614, %v4610
      %v4959 = vpack.c.b16 %v4619, %v4615
      %v4960 = vpack.c.b16 %v4620, %v4616
      %v4961 = vpack.c.b16 %v4621, %v4617
      %v4962 = vpack.c.b16 %v4622, %v4618
      %v4963 = vpack.c.b16 %v4627, %v4623
      %v4964 = vpack.c.b16 %v4628, %v4624
      %v4965 = vpack.c.b16 %v4629, %v4625
      %v4966 = vpack.c.b16 %v4630, %v4626
      %v4967 = vpack.c.b16 %v4635, %v4631
      %v4968 = vpack.c.b16 %v4636, %v4632
      %v4969 = vpack.c.b16 %v4637, %v4633
      %v4970 = vpack.c.b16 %v4638, %v4634
      %v4971 = vpack.c.b16 %v4643, %v4639
      %v4972 = vpack.c.b16 %v4644, %v4640
      %v4973 = vpack.c.b16 %v4645, %v4641
      %v4974 = vpack.c.b16 %v4646, %v4642
      %v4975 = vpack.c.b16 %v4651, %v4647
      %v4976 = vpack.c.b16 %v4652, %v4648
      %v4977 = vpack.c.b16 %v4653, %v4649
      %v4978 = vpack.c.b16 %v4654, %v4650
      %v4979 = vpack.c.b16 %v4659, %v4655
      %v4980 = vpack.c.b16 %v4660, %v4656
      %v4981 = vpack.c.b16 %v4661, %v4657
      %v4982 = vpack.c.b16 %v4662, %v4658
      %v4983 = vpack.c.b16 %v4667, %v4663
      %v4984 = vpack.c.b16 %v4668, %v4664
      %v4985 = vpack.c.b16 %v4669, %v4665
      %v4986 = vpack.c.b16 %v4670, %v4666
      %v4987 = vpack.c.b16 %v4675, %v4671
      %v4988 = vpack.c.b16 %v4676, %v4672
      %v4989 = vpack.c.b16 %v4677, %v4673
      %v4990 = vpack.c.b16 %v4678, %v4674
      %v4991 = vpack.c.b16 %v4683, %v4679
      %v4992 = vpack.c.b16 %v4684, %v4680
      %v4993 = vpack.c.b16 %v4685, %v4681
      %v4994 = vpack.c.b16 %v4686, %v4682
      %v4995 = vpack.c.b16 %v4691, %v4687
      %v4996 = vpack.c.b16 %v4692, %v4688
      %v4997 = vpack.c.b16 %v4693, %v4689
      %v4998 = vpack.c.b16 %v4694, %v4690
      %v4999 = vpack.c.b16 %v4699, %v4695
      %v5000 = vpack.c.b16 %v4700, %v4696
      %v5001 = vpack.c.b16 %v4701, %v4697
      %v5002 = vpack.c.b16 %v4702, %v4698
      %v5003 = vpack.c.b16 %v4707, %v4703
      %v5004 = vpack.c.b16 %v4708, %v4704
      %v5005 = vpack.c.b16 %v4709, %v4705
      %v5006 = vpack.c.b16 %v4710, %v4706
      %v5007 = vpack.c.b16 %v4715, %v4711
      %v5008 = vpack.c.b16 %v4716, %v4712
      %v5009 = vpack.c.b16 %v4717, %v4713
      %v5010 = vpack.c.b16 %v4718, %v4714
      %v5011 = vpack.c.b16 %v4723, %v4719
      %v5012 = vpack.c.b16 %v4724, %v4720
      %v5013 = vpack.c.b16 %v4725, %v4721
      %v5014 = vpack.c.b16 %v4726, %v4722
      %v5015 = vpack.c.b16 %v4731, %v4727
      %v5016 = vpack.c.b16 %v4732, %v4728
      %v5017 = vpack.c.b16 %v4733, %v4729
      %v5018 = vpack.c.b16 %v4734, %v4730
      %v5019 = vpack.c.b16 %v4739, %v4735
      %v5020 = vpack.c.b16 %v4740, %v4736
      %v5021 = vpack.c.b16 %v4741, %v4737
      %v5022 = vpack.c.b16 %v4742, %v4738
      %v5023 = vpack.c.b16 %v4747, %v4743
      %v5024 = vpack.c.b16 %v4748, %v4744
      %v5025 = vpack.c.b16 %v4749, %v4745
      %v5026 = vpack.c.b16 %v4750, %v4746
      %v5027 = vpack.c.b16 %v4755, %v4751
      %v5028 = vpack.c.b16 %v4756, %v4752
      %v5029 = vpack.c.b16 %v4757, %v4753
      %v5030 = vpack.c.b16 %v4758, %v4754
      %v5031 = vpack.c.b16 %v4763, %v4759
      %v5032 = vpack.c.b16 %v4764, %v4760
      %v5033 = vpack.c.b16 %v4765, %v4761
      %v5034 = vpack.c.b16 %v4766, %v4762
      %v5035 = vpack.c.b16 %v4771, %v4767
      %v5036 = vpack.c.b16 %v4772, %v4768
      %v5037 = vpack.c.b16 %v4773, %v4769
      %v5038 = vpack.c.b16 %v4774, %v4770
      %v5039 = vpack.c.b16 %v4779, %v4775
      %v5040 = vpack.c.b16 %v4780, %v4776
      %v5041 = vpack.c.b16 %v4781, %v4777
      %v5042 = vpack.c.b16 %v4782, %v4778
      %v5043 = vpack.c.b16 %v4787, %v4783
      %v5044 = vpack.c.b16 %v4788, %v4784
      %v5045 = vpack.c.b16 %v4789, %v4785
      %v5046 = vpack.c.b16 %v4790, %v4786
      %v5047 = vpack.c.b16 %v4795, %v4791
      %v5048 = vpack.c.b16 %v4796, %v4792
      %v5049 = vpack.c.b16 %v4797, %v4793
      %v5050 = vpack.c.b16 %v4798, %v4794
      %v5051 = vpack.c.b16 %v4803, %v4799
      %v5052 = vpack.c.b16 %v4804, %v4800
      %v5053 = vpack.c.b16 %v4805, %v4801
      %v5054 = vpack.c.b16 %v4806, %v4802
      %v5055 = vpack.c.b16 %v4811, %v4807
      %v5056 = vpack.c.b16 %v4812, %v4808
      %v5057 = vpack.c.b16 %v4813, %v4809
      %v5058 = vpack.c.b16 %v4814, %v4810
      %v5059 = vpack.c.b16 %v4819, %v4815
      %v5060 = vpack.c.b16 %v4820, %v4816
      %v5061 = vpack.c.b16 %v4821, %v4817
      %v5062 = vpack.c.b16 %v4822, %v4818
      %v5063 = vpack.c.b16 %v4827, %v4823
      %v5064 = vpack.c.b16 %v4828, %v4824
      %v5065 = vpack.c.b16 %v4829, %v4825
      %v5066 = vpack.c.b16 %v4830, %v4826
      %v5067 = vpack.c.b16 %v4835, %v4831
      %v5068 = vpack.c.b16 %v4836, %v4832
      %v5069 = vpack.c.b16 %v4837, %v4833
      %v5070 = vpack.c.b16 %v4838, %v4834
      %v5071 = vpack.c.b16 %v4843, %v4839
      %v5072 = vpack.c.b16 %v4844, %v4840
      %v5073 = vpack.c.b16 %v4845, %v4841
      %v5074 = vpack.c.b16 %v4846, %v4842
      %v5075 = vpack.c.b16 %v4851, %v4847
      %v5076 = vpack.c.b16 %v4852, %v4848
      %v5077 = vpack.c.b16 %v4853, %v4849
      %v5078 = vpack.c.b16 %v4854, %v4850
      %v5079 = vpack.c.b16 %v4859, %v4855
      %v5080 = vpack.c.b16 %v4860, %v4856
      %v5081 = vpack.c.b16 %v4861, %v4857
      %v5082 = vpack.c.b16 %v4862, %v4858
      %v5083 = vpack.c.b16 %v4867, %v4863
      %v5084 = vpack.c.b16 %v4868, %v4864
      %v5085 = vpack.c.b16 %v4869, %v4865
      %v5086 = vpack.c.b16 %v4870, %v4866
      %v5087 = vpack.c.b16 %v4875, %v4871
      %v5088 = vpack.c.b16 %v4876, %v4872
      %v5089 = vpack.c.b16 %v4877, %v4873
      %v5090 = vpack.c.b16 %v4878, %v4874
      %v5091 = vpack.c.b16 %v4883, %v4879
      %v5092 = vpack.c.b16 %v4884, %v4880
      %v5093 = vpack.c.b16 %v4885, %v4881
      %v5094 = vpack.c.b16 %v4886, %v4882
      %v5095 = vpack.c.b16 %v4891, %v4887
      %v5096 = vpack.c.b16 %v4892, %v4888
      %v5097 = vpack.c.b16 %v4893, %v4889
      %v5098 = vpack.c.b16 %v4894, %v4890
      %v5099 = vpack.c.b16 %v4899, %v4895
      %v5100 = vpack.c.b16 %v4900, %v4896
      %v5101 = vpack.c.b16 %v4901, %v4897
      %v5102 = vpack.c.b16 %v4902, %v4898
      %v5103 = vpack.c.b16 %v4907, %v4903
      %v5104 = vpack.c.b16 %v4908, %v4904
      %v5105 = vpack.c.b16 %v4909, %v4905
      %v5106 = vpack.c.b16 %v4910, %v4906
      %v5107 = vpack.c.b16 %v4915, %v4911
      %v5108 = vpack.c.b16 %v4916, %v4912
      %v5109 = vpack.c.b16 %v4917, %v4913
      %v5110 = vpack.c.b16 %v4918, %v4914
      %5303 = vmatprep.subr.bf16.mxu0 %v4920
      %5304 = vmatpush1.bf16.msra.mxu0 %v4919
      %5305 = vmatprep.subr.bf16.mxu0 %v4924
      %5306 = vmatpush1.bf16.msra.mxu0 %v4923
      %5307 = vmatprep.subr.bf16.mxu0 %v4928
      %5308 = vmatpush1.bf16.msra.mxu0 %v4927
      %5309 = vmatprep.subr.bf16.mxu0 %v4932
      %5310 = vmatpush1.bf16.msra.mxu0 %v4931
      %5311 = vmatprep.subr.bf16.mxu0 %v4936
      %5312 = vmatpush1.bf16.msra.mxu0 %v4935
      %5313 = vmatprep.subr.bf16.mxu0 %v4940
      %5314 = vmatpush1.bf16.msra.mxu0 %v4939
      %5315 = vmatprep.subr.bf16.mxu0 %v4944
      %5316 = vmatpush1.bf16.msra.mxu0 %v4943
      %5317 = vmatprep.subr.bf16.mxu0 %v4948
      %5318 = vmatpush1.bf16.msra.mxu0 %v4947
      %5319 = vmatprep.subr.bf16.mxu0 %v4952
      %5320 = vmatpush1.bf16.msra.mxu0 %v4951
      %5321 = vmatprep.subr.bf16.mxu0 %v4956
      %5322 = vmatpush1.bf16.msra.mxu0 %v4955
      %5323 = vmatprep.subr.bf16.mxu0 %v4960
      %5324 = vmatpush1.bf16.msra.mxu0 %v4959
      %5325 = vmatprep.subr.bf16.mxu0 %v4964
      %5326 = vmatpush1.bf16.msra.mxu0 %v4963
      %5327 = vmatprep.subr.bf16.mxu0 %v4968
      %5328 = vmatpush1.bf16.msra.mxu0 %v4967
      %5329 = vmatprep.subr.bf16.mxu0 %v4972
      %5330 = vmatpush1.bf16.msra.mxu0 %v4971
      %5331 = vmatprep.subr.bf16.mxu0 %v4976
      %5332 = vmatpush1.bf16.msra.mxu0 %v4975
      %5333 = vmatprep.subr.bf16.mxu0 %v4980
      %5334 = vmatpush1.bf16.msra.mxu0 %v4979
      %5335 = vmatprep.mubr.bf16.mxu0 %v4124
      %5336 = vmatmul.mubr.bf16.gmra.mrb[0].mxu0 %v4123
      %v5337 = vpop.f32.mrb[0].mxu0
      %v5338 = vadd.f32 %v4326, %v5337
      %v5339 = vpop.f32.mrb[0].mxu0
      %v5340 = vadd.f32 %v4330, %v5339
      %v5341 = vpop.f32.mrb[0].mxu0
      %v5342 = vadd.f32 %v4326, %v5341
      %v5343 = vpop.f32.mrb[0].mxu0
      %v5344 = vadd.f32 %v4330, %v5343
      %5345 = vdwg.mxu0
      %5346 = vmatprep.subr.bf16.mxu0 %v4984
      %5347 = vmatpush1.bf16.msra.mxu0 %v4983
      %5348 = vmatprep.subr.bf16.mxu0 %v4988
      %5349 = vmatpush1.bf16.msra.mxu0 %v4987
      %5350 = vmatprep.subr.bf16.mxu0 %v4992
      %5351 = vmatpush1.bf16.msra.mxu0 %v4991
      %5352 = vmatprep.subr.bf16.mxu0 %v4996
      %5353 = vmatpush1.bf16.msra.mxu0 %v4995
      %5354 = vmatprep.subr.bf16.mxu0 %v5000
      %5355 = vmatpush1.bf16.msra.mxu0 %v4999
      %5356 = vmatprep.subr.bf16.mxu0 %v5004
      %5357 = vmatpush1.bf16.msra.mxu0 %v5003
      %5358 = vmatprep.subr.bf16.mxu0 %v5008
      %5359 = vmatpush1.bf16.msra.mxu0 %v5007
      %5360 = vmatprep.subr.bf16.mxu0 %v5012
      %5361 = vmatpush1.bf16.msra.mxu0 %v5011
      %5362 = vmatprep.subr.bf16.mxu0 %v5016
      %5363 = vmatpush1.bf16.msra.mxu0 %v5015
      %5364 = vmatprep.subr.bf16.mxu0 %v5020
      %5365 = vmatpush1.bf16.msra.mxu0 %v5019
      %5366 = vmatprep.subr.bf16.mxu0 %v5024
      %5367 = vmatpush1.bf16.msra.mxu0 %v5023
      %5368 = vmatprep.subr.bf16.mxu0 %v5028
      %5369 = vmatpush1.bf16.msra.mxu0 %v5027
      %5370 = vmatprep.subr.bf16.mxu0 %v5032
      %5371 = vmatpush1.bf16.msra.mxu0 %v5031
      %5372 = vmatprep.subr.bf16.mxu0 %v5036
      %5373 = vmatpush1.bf16.msra.mxu0 %v5035
      %5374 = vmatprep.subr.bf16.mxu0 %v5040
      %5375 = vmatpush1.bf16.msra.mxu0 %v5039
      %5376 = vmatprep.subr.bf16.mxu0 %v5044
      %5377 = vmatpush1.bf16.msra.mxu0 %v5043
      %5378 = vmatprep.mubr.bf16.mxu0 %v4126
      %5379 = vmatmul.mubr.bf16.gmra.mrb[0].mxu0 %v4125
      %v5380 = vpop.f32.mrb[0].mxu0
      %v5381 = vadd.f32 %v5338, %v5380
      %v5382 = vpop.f32.mrb[0].mxu0
      %v5383 = vadd.f32 %v5340, %v5382
      %v5384 = vpop.f32.mrb[0].mxu0
      %v5385 = vadd.f32 %v5342, %v5384
      %v5386 = vpop.f32.mrb[0].mxu0
      %v5387 = vadd.f32 %v5344, %v5386
      %5388 = vdwg.mxu0
      %5389 = vmatprep.subr.bf16.mxu0 %v5048
      %5390 = vmatpush1.bf16.msra.mxu0 %v5047
      %5391 = vmatprep.subr.bf16.mxu0 %v5052
      %5392 = vmatpush1.bf16.msra.mxu0 %v5051
      %5393 = vmatprep.subr.bf16.mxu0 %v5056
      %5394 = vmatpush1.bf16.msra.mxu0 %v5055
      %5395 = vmatprep.subr.bf16.mxu0 %v5060
      %5396 = vmatpush1.bf16.msra.mxu0 %v5059
      %5397 = vmatprep.subr.bf16.mxu0 %v5064
      %5398 = vmatpush1.bf16.msra.mxu0 %v5063
      %5399 = vmatprep.subr.bf16.mxu0 %v5068
      %5400 = vmatpush1.bf16.msra.mxu0 %v5067
      %5401 = vmatprep.subr.bf16.mxu0 %v5072
      %5402 = vmatpush1.bf16.msra.mxu0 %v5071
      %5403 = vmatprep.subr.bf16.mxu0 %v5076
      %5404 = vmatpush1.bf16.msra.mxu0 %v5075
      %5405 = vmatprep.subr.bf16.mxu0 %v5080
      %5406 = vmatpush1.bf16.msra.mxu0 %v5079
      %5407 = vmatprep.subr.bf16.mxu0 %v5084
      %5408 = vmatpush1.bf16.msra.mxu0 %v5083
      %5409 = vmatprep.subr.bf16.mxu0 %v5088
      %5410 = vmatpush1.bf16.msra.mxu0 %v5087
      %5411 = vmatprep.subr.bf16.mxu0 %v5092
      %5412 = vmatpush1.bf16.msra.mxu0 %v5091
      %5413 = vmatprep.subr.bf16.mxu0 %v5096
      %5414 = vmatpush1.bf16.msra.mxu0 %v5095
      %5415 = vmatprep.subr.bf16.mxu0 %v5100
      %5416 = vmatpush1.bf16.msra.mxu0 %v5099
      %5417 = vmatprep.subr.bf16.mxu0 %v5104
      %5418 = vmatpush1.bf16.msra.mxu0 %v5103
      %5419 = vmatprep.subr.bf16.mxu0 %v5108
      %5420 = vmatpush1.bf16.msra.mxu0 %v5107
      %5421 = vmatprep.mubr.bf16.mxu0 %v4128
      %5422 = vmatmul.mubr.bf16.gmra.mrb[0].mxu0 %v4127
      %v5423 = vpop.f32.mrb[0].mxu0
      %v5424 = vadd.f32 %v5381, %v5423
      %v5425 = vpop.f32.mrb[0].mxu0
      %v5426 = vadd.f32 %v5383, %v5425
      %v5427 = vpop.f32.mrb[0].mxu0
      %v5428 = vadd.f32 %v5385, %v5427
      %v5429 = vpop.f32.mrb[0].mxu0
      %v5430 = vadd.f32 %v5387, %v5429
      %5431 = vdwg.mxu0
      %5432 = vmatprep.subr.bf16.mxu0 %v4922
      %5433 = vmatpush1.bf16.msra.mxu0 %v4921
      %5434 = vmatprep.subr.bf16.mxu0 %v4926
      %5435 = vmatpush1.bf16.msra.mxu0 %v4925
      %5436 = vmatprep.subr.bf16.mxu0 %v4930
      %5437 = vmatpush1.bf16.msra.mxu0 %v4929
      %5438 = vmatprep.subr.bf16.mxu0 %v4934
      %5439 = vmatpush1.bf16.msra.mxu0 %v4933
      %5440 = vmatprep.subr.bf16.mxu0 %v4938
      %5441 = vmatpush1.bf16.msra.mxu0 %v4937
      %5442 = vmatprep.subr.bf16.mxu0 %v4942
      %5443 = vmatpush1.bf16.msra.mxu0 %v4941
      %5444 = vmatprep.subr.bf16.mxu0 %v4946
      %5445 = vmatpush1.bf16.msra.mxu0 %v4945
      %5446 = vmatprep.subr.bf16.mxu0 %v4950
      %5447 = vmatpush1.bf16.msra.mxu0 %v4949
      %5448 = vmatprep.subr.bf16.mxu0 %v4954
      %5449 = vmatpush1.bf16.msra.mxu0 %v4953
      %5450 = vmatprep.subr.bf16.mxu0 %v4958
      %5451 = vmatpush1.bf16.msra.mxu0 %v4957
      %5452 = vmatprep.subr.bf16.mxu0 %v4962
      %5453 = vmatpush1.bf16.msra.mxu0 %v4961
      %5454 = vmatprep.subr.bf16.mxu0 %v4966
      %5455 = vmatpush1.bf16.msra.mxu0 %v4965
      %5456 = vmatprep.subr.bf16.mxu0 %v4970
      %5457 = vmatpush1.bf16.msra.mxu0 %v4969
      %5458 = vmatprep.subr.bf16.mxu0 %v4974
      %5459 = vmatpush1.bf16.msra.mxu0 %v4973
      %5460 = vmatprep.subr.bf16.mxu0 %v4978
      %5461 = vmatpush1.bf16.msra.mxu0 %v4977
      %5462 = vmatprep.subr.bf16.mxu0 %v4982
      %5463 = vmatpush1.bf16.msra.mxu0 %v4981
      %5464 = vmatprep.mubr.bf16.mxu0 %v4124
      %5465 = vmatmul.mubr.bf16.gmra.mrb[0].mxu0 %v4123
      %v5466 = vpop.f32.mrb[0].mxu0
      %v5467 = vadd.f32 %v4334, %v5466
      %v5468 = vpop.f32.mrb[0].mxu0
      %v5469 = vadd.f32 %v4338, %v5468
      %v5470 = vpop.f32.mrb[0].mxu0
      %v5471 = vadd.f32 %v4334, %v5470
      %v5472 = vpop.f32.mrb[0].mxu0
      %v5473 = vadd.f32 %v4338, %v5472
      %5474 = vdwg.mxu0
      %5475 = vmatprep.subr.bf16.mxu0 %v4986
      %5476 = vmatpush1.bf16.msra.mxu0 %v4985
      %5477 = vmatprep.subr.bf16.mxu0 %v4990
      %5478 = vmatpush1.bf16.msra.mxu0 %v4989
      %5479 = vmatprep.subr.bf16.mxu0 %v4994
      %5480 = vmatpush1.bf16.msra.mxu0 %v4993
      %5481 = vmatprep.subr.bf16.mxu0 %v4998
      %5482 = vmatpush1.bf16.msra.mxu0 %v4997
      %5483 = vmatprep.subr.bf16.mxu0 %v5002
      %5484 = vmatpush1.bf16.msra.mxu0 %v5001
      %5485 = vmatprep.subr.bf16.mxu0 %v5006
      %5486 = vmatpush1.bf16.msra.mxu0 %v5005
      %5487 = vmatprep.subr.bf16.mxu0 %v5010
      %5488 = vmatpush1.bf16.msra.mxu0 %v5009
      %5489 = vmatprep.subr.bf16.mxu0 %v5014
      %5490 = vmatpush1.bf16.msra.mxu0 %v5013
      %5491 = vmatprep.subr.bf16.mxu0 %v5018
      %5492 = vmatpush1.bf16.msra.mxu0 %v5017
      %5493 = vmatprep.subr.bf16.mxu0 %v5022
      %5494 = vmatpush1.bf16.msra.mxu0 %v5021
      %5495 = vmatprep.subr.bf16.mxu0 %v5026
      %5496 = vmatpush1.bf16.msra.mxu0 %v5025
      %5497 = vmatprep.subr.bf16.mxu0 %v5030
      %5498 = vmatpush1.bf16.msra.mxu0 %v5029
      %5499 = vmatprep.subr.bf16.mxu0 %v5034
      %5500 = vmatpush1.bf16.msra.mxu0 %v5033
      %5501 = vmatprep.subr.bf16.mxu0 %v5038
      %5502 = vmatpush1.bf16.msra.mxu0 %v5037
      %5503 = vmatprep.subr.bf16.mxu0 %v5042
      %5504 = vmatpush1.bf16.msra.mxu0 %v5041
      %5505 = vmatprep.subr.bf16.mxu0 %v5046
      %5506 = vmatpush1.bf16.msra.mxu0 %v5045
      %5507 = vmatprep.mubr.bf16.mxu0 %v4126
      %5508 = vmatmul.mubr.bf16.gmra.mrb[0].mxu0 %v4125
      %v5509 = vpop.f32.mrb[0].mxu0
      %v5510 = vadd.f32 %v5467, %v5509
      %v5511 = vpop.f32.mrb[0].mxu0
      %v5512 = vadd.f32 %v5469, %v5511
      %v5513 = vpop.f32.mrb[0].mxu0
      %v5514 = vadd.f32 %v5471, %v5513
      %v5515 = vpop.f32.mrb[0].mxu0
      %v5516 = vadd.f32 %v5473, %v5515
      %5517 = vdwg.mxu0
      %5518 = vmatprep.subr.bf16.mxu0 %v5050
      %5519 = vmatpush1.bf16.msra.mxu0 %v5049
      %5520 = vmatprep.subr.bf16.mxu0 %v5054
      %5521 = vmatpush1.bf16.msra.mxu0 %v5053
      %5522 = vmatprep.subr.bf16.mxu0 %v5058
      %5523 = vmatpush1.bf16.msra.mxu0 %v5057
      %5524 = vmatprep.subr.bf16.mxu0 %v5062
      %5525 = vmatpush1.bf16.msra.mxu0 %v5061
      %5526 = vmatprep.subr.bf16.mxu0 %v5066
      %5527 = vmatpush1.bf16.msra.mxu0 %v5065
      %5528 = vmatprep.subr.bf16.mxu0 %v5070
      %5529 = vmatpush1.bf16.msra.mxu0 %v5069
      %5530 = vmatprep.subr.bf16.mxu0 %v5074
      %5531 = vmatpush1.bf16.msra.mxu0 %v5073
      %5532 = vmatprep.subr.bf16.mxu0 %v5078
      %5533 = vmatpush1.bf16.msra.mxu0 %v5077
      %5534 = vmatprep.subr.bf16.mxu0 %v5082
      %5535 = vmatpush1.bf16.msra.mxu0 %v5081
      %5536 = vmatprep.subr.bf16.mxu0 %v5086
      %5537 = vmatpush1.bf16.msra.mxu0 %v5085
      %5538 = vmatprep.subr.bf16.mxu0 %v5090
      %5539 = vmatpush1.bf16.msra.mxu0 %v5089
      %5540 = vmatprep.subr.bf16.mxu0 %v5094
      %5541 = vmatpush1.bf16.msra.mxu0 %v5093
      %5542 = vmatprep.subr.bf16.mxu0 %v5098
      %5543 = vmatpush1.bf16.msra.mxu0 %v5097
      %5544 = vmatprep.subr.bf16.mxu0 %v5102
      %5545 = vmatpush1.bf16.msra.mxu0 %v5101
      %5546 = vmatprep.subr.bf16.mxu0 %v5106
      %5547 = vmatpush1.bf16.msra.mxu0 %v5105
      %5548 = vmatprep.subr.bf16.mxu0 %v5110
      %5549 = vmatpush1.bf16.msra.mxu0 %v5109
      %5550 = vmatprep.mubr.bf16.mxu0 %v4128
      %5551 = vmatmul.mubr.bf16.gmra.mrb[0].mxu0 %v4127
      %v5552 = vpop.f32.mrb[0].mxu0
      %v5553 = vadd.f32 %v5510, %v5552
      %v5554 = vpop.f32.mrb[0].mxu0
      %v5555 = vadd.f32 %v5512, %v5554
      %v5556 = vpop.f32.mrb[0].mxu0
      %v5557 = vadd.f32 %v5514, %v5556
      %v5558 = vpop.f32.mrb[0].mxu0
      %v5559 = vadd.f32 %v5516, %v5558
      %5560 = vdwg.mxu0
      %v5561 = vmax.f32 %v5424, 0.0
      %v5562 = vmax.f32 %v5426, 0.0
      %v5563 = vmax.f32 %v5553, 0.0
      %v5564 = vmax.f32 %v5555, 0.0
      %v5565 = vmax.f32 %v5428, 0.0
      %v5566 = vmax.f32 %v5430, 0.0
      %v5567 = vmax.f32 %v5557, 0.0
      %v5568 = vmax.f32 %v5559, 0.0
      %v5569 = vpack.c.bf16 %v5565, %v5561
      %v5570 = vpack.c.bf16 %v5566, %v5562
      %v5571 = vpack.c.bf16 %v5567, %v5563
      %v5572 = vpack.c.bf16 %v5568, %v5564
      %v5573 = vld [vmem:[#allocation15] sm:$0xf]
      %v5574 = vld [vmem:[#allocation15 + $0x4] sm:$0xf]
      %v5575 = vld [vmem:[#allocation15 + $0x8] sm:$0xf]
      %v5576 = vld [vmem:[#allocation15 + $0xc] sm:$0xf]
      %v5577 = vld [vmem:[#allocation15 + $0x10] sm:$0xf]
      %v5578 = vld [vmem:[#allocation15 + $0x14] sm:$0xf]
      %v5579 = vld [vmem:[#allocation15 + $0x18] sm:$0xf]
      %v5580 = vld [vmem:[#allocation15 + $0x1c] sm:$0xf]
      %v5581 = vld [vmem:[#allocation15 + $0x20] sm:$0xf]
      %v5582 = vld [vmem:[#allocation15 + $0x24] sm:$0xf]
      %v5583 = vld [vmem:[#allocation15 + $0x28] sm:$0xf]
      %v5584 = vld [vmem:[#allocation15 + $0x2c] sm:$0xf]
      %v5585 = vld [vmem:[#allocation15 + $0x30] sm:$0xf]
      %v5586 = vld [vmem:[#allocation15 + $0x34] sm:$0xf]
      %v5587 = vld [vmem:[#allocation15 + $0x38] sm:$0xf]
      %v5588 = vld [vmem:[#allocation15 + $0x3c] sm:$0xf]
      %v5589 = vld [vmem:[#allocation15 + $0x40] sm:$0xf]
      %v5590 = vld [vmem:[#allocation15 + $0x44] sm:$0xf]
      %v5591 = vld [vmem:[#allocation15 + $0x48] sm:$0xf]
      %v5592 = vld [vmem:[#allocation15 + $0x4c] sm:$0xf]
      %v5593 = vld [vmem:[#allocation15 + $0x50] sm:$0xf]
      %v5594 = vld [vmem:[#allocation15 + $0x54] sm:$0xf]
      %v5595 = vld [vmem:[#allocation15 + $0x58] sm:$0xf]
      %v5596 = vld [vmem:[#allocation15 + $0x5c] sm:$0xf]
      %v5597 = vld [vmem:[#allocation15 + $0x60] sm:$0xf]
      %v5598 = vld [vmem:[#allocation15 + $0x64] sm:$0xf]
      %v5599 = vld [vmem:[#allocation15 + $0x68] sm:$0xf]
      %v5600 = vld [vmem:[#allocation15 + $0x6c] sm:$0xf]
      %v5601 = vld [vmem:[#allocation15 + $0x70] sm:$0xf]
      %v5602 = vld [vmem:[#allocation15 + $0x74] sm:$0xf]
      %v5603 = vld [vmem:[#allocation15 + $0x78] sm:$0xf]
      %v5604 = vld [vmem:[#allocation15 + $0x7c] sm:$0xf]
      %v5605 = vld [vmem:[#allocation15 + $0x80] sm:$0xf]
      %v5606 = vld [vmem:[#allocation15 + $0x84] sm:$0xf]
      %v5607 = vld [vmem:[#allocation15 + $0x88] sm:$0xf]
      %v5608 = vld [vmem:[#allocation15 + $0x8c] sm:$0xf]
      %v5609 = vld [vmem:[#allocation15 + $0x90] sm:$0xf]
      %v5610 = vld [vmem:[#allocation15 + $0x94] sm:$0xf]
      %v5611 = vld [vmem:[#allocation15 + $0x98] sm:$0xf]
      %v5612 = vld [vmem:[#allocation15 + $0x9c] sm:$0xf]
      %v5613 = vld [vmem:[#allocation15 + $0xa0] sm:$0xf]
      %v5614 = vld [vmem:[#allocation15 + $0xa4] sm:$0xf]
      %v5615 = vld [vmem:[#allocation15 + $0xa8] sm:$0xf]
      %v5616 = vld [vmem:[#allocation15 + $0xac] sm:$0xf]
      %v5617 = vld [vmem:[#allocation15 + $0xb0] sm:$0xf]
      %v5618 = vld [vmem:[#allocation15 + $0xb4] sm:$0xf]
      %v5619 = vld [vmem:[#allocation15 + $0xb8] sm:$0xf]
      %v5620 = vld [vmem:[#allocation15 + $0xbc] sm:$0xf]
      %v5621 = vld [vmem:[#allocation15 + $0xc0] sm:$0xf]
      %v5622 = vld [vmem:[#allocation15 + $0xc4] sm:$0xf]
      %v5623 = vld [vmem:[#allocation15 + $0xc8] sm:$0xf]
      %v5624 = vld [vmem:[#allocation15 + $0xcc] sm:$0xf]
      %v5625 = vld [vmem:[#allocation15 + $0xd0] sm:$0xf]
      %v5626 = vld [vmem:[#allocation15 + $0xd4] sm:$0xf]
      %v5627 = vld [vmem:[#allocation15 + $0xd8] sm:$0xf]
      %v5628 = vld [vmem:[#allocation15 + $0xdc] sm:$0xf]
      %v5629 = vld [vmem:[#allocation15 + $0xe0] sm:$0xf]
      %v5630 = vld [vmem:[#allocation15 + $0xe4] sm:$0xf]
      %v5631 = vld [vmem:[#allocation15 + $0xe8] sm:$0xf]
      %v5632 = vld [vmem:[#allocation15 + $0xec] sm:$0xf]
      %v5633 = vld [vmem:[#allocation15 + $0xf0] sm:$0xf]
      %v5634 = vld [vmem:[#allocation15 + $0xf4] sm:$0xf]
      %v5635 = vld [vmem:[#allocation15 + $0xf8] sm:$0xf]
      %v5636 = vld [vmem:[#allocation15 + $0xfc] sm:$0xf]
      %v5637 = vld [vmem:[#allocation16] sm:$0x1]
      %v5639 = vlaneseq
      %v5640 = vshrl.u32 %v5639, 7
      %v5641 = vsub.s32 0, %v5640
      %v5642 = vrot.slane %v5637, %v5641
      %v5708 = vunpack.c.l.b16 %v5573
      %v5709 = vunpack.c.l.b16 %v5574
      %v5710 = vunpack.c.l.b16 %v5575
      %v5711 = vunpack.c.l.b16 %v5576
      %v5712 = vunpack.c.l.b16 %v5577
      %v5713 = vunpack.c.l.b16 %v5578
      %v5714 = vunpack.c.l.b16 %v5579
      %v5715 = vunpack.c.l.b16 %v5580
      %v5716 = vunpack.c.l.b16 %v5581
      %v5717 = vunpack.c.l.b16 %v5582
      %v5718 = vunpack.c.l.b16 %v5583
      %v5719 = vunpack.c.l.b16 %v5584
      %v5720 = vunpack.c.l.b16 %v5585
      %v5721 = vunpack.c.l.b16 %v5586
      %v5722 = vunpack.c.l.b16 %v5587
      %v5723 = vunpack.c.l.b16 %v5588
      %v5724 = vunpack.c.l.b16 %v5589
      %v5725 = vunpack.c.l.b16 %v5590
      %v5726 = vunpack.c.l.b16 %v5591
      %v5727 = vunpack.c.l.b16 %v5592
      %v5728 = vunpack.c.l.b16 %v5593
      %v5729 = vunpack.c.l.b16 %v5594
      %v5730 = vunpack.c.l.b16 %v5595
      %v5731 = vunpack.c.l.b16 %v5596
      %v5732 = vunpack.c.l.b16 %v5597
      %v5733 = vunpack.c.l.b16 %v5598
      %v5734 = vunpack.c.l.b16 %v5599
      %v5735 = vunpack.c.l.b16 %v5600
      %v5736 = vunpack.c.l.b16 %v5601
      %v5737 = vunpack.c.l.b16 %v5602
      %v5738 = vunpack.c.l.b16 %v5603
      %v5739 = vunpack.c.l.b16 %v5604
      %v5740 = vunpack.c.l.b16 %v5605
      %v5741 = vunpack.c.l.b16 %v5606
      %v5742 = vunpack.c.l.b16 %v5607
      %v5743 = vunpack.c.l.b16 %v5608
      %v5744 = vunpack.c.l.b16 %v5609
      %v5745 = vunpack.c.l.b16 %v5610
      %v5746 = vunpack.c.l.b16 %v5611
      %v5747 = vunpack.c.l.b16 %v5612
      %v5748 = vunpack.c.l.b16 %v5613
      %v5749 = vunpack.c.l.b16 %v5614
      %v5750 = vunpack.c.l.b16 %v5615
      %v5751 = vunpack.c.l.b16 %v5616
      %v5752 = vunpack.c.l.b16 %v5617
      %v5753 = vunpack.c.l.b16 %v5618
      %v5754 = vunpack.c.l.b16 %v5619
      %v5755 = vunpack.c.l.b16 %v5620
      %v5756 = vunpack.c.l.b16 %v5621
      %v5757 = vunpack.c.l.b16 %v5622
      %v5758 = vunpack.c.l.b16 %v5623
      %v5759 = vunpack.c.l.b16 %v5624
      %v5760 = vunpack.c.l.b16 %v5625
      %v5761 = vunpack.c.l.b16 %v5626
      %v5762 = vunpack.c.l.b16 %v5627
      %v5763 = vunpack.c.l.b16 %v5628
      %v5764 = vunpack.c.l.b16 %v5629
      %v5765 = vunpack.c.l.b16 %v5630
      %v5766 = vunpack.c.l.b16 %v5631
      %v5767 = vunpack.c.l.b16 %v5632
      %v5768 = vunpack.c.l.b16 %v5633
      %v5769 = vunpack.c.l.b16 %v5634
      %v5770 = vunpack.c.l.b16 %v5635
      %v5771 = vunpack.c.l.b16 %v5636
      %v5772 = vpack.c.b16 %v5709, %v5708
      %v5773 = vpack.c.b16 %v5711, %v5710
      %v5774 = vpack.c.b16 %v5713, %v5712
      %v5775 = vpack.c.b16 %v5715, %v5714
      %v5776 = vpack.c.b16 %v5717, %v5716
      %v5777 = vpack.c.b16 %v5719, %v5718
      %v5778 = vpack.c.b16 %v5721, %v5720
      %v5779 = vpack.c.b16 %v5723, %v5722
      %v5780 = vpack.c.b16 %v5725, %v5724
      %v5781 = vpack.c.b16 %v5727, %v5726
      %v5782 = vpack.c.b16 %v5729, %v5728
      %v5783 = vpack.c.b16 %v5731, %v5730
      %v5784 = vpack.c.b16 %v5733, %v5732
      %v5785 = vpack.c.b16 %v5735, %v5734
      %v5786 = vpack.c.b16 %v5737, %v5736
      %v5787 = vpack.c.b16 %v5739, %v5738
      %v5788 = vpack.c.b16 %v5741, %v5740
      %v5789 = vpack.c.b16 %v5743, %v5742
      %v5790 = vpack.c.b16 %v5745, %v5744
      %v5791 = vpack.c.b16 %v5747, %v5746
      %v5792 = vpack.c.b16 %v5749, %v5748
      %v5793 = vpack.c.b16 %v5751, %v5750
      %v5794 = vpack.c.b16 %v5753, %v5752
      %v5795 = vpack.c.b16 %v5755, %v5754
      %v5796 = vpack.c.b16 %v5757, %v5756
      %v5797 = vpack.c.b16 %v5759, %v5758
      %v5798 = vpack.c.b16 %v5761, %v5760
      %v5799 = vpack.c.b16 %v5763, %v5762
      %v5800 = vpack.c.b16 %v5765, %v5764
      %v5801 = vpack.c.b16 %v5767, %v5766
      %v5802 = vpack.c.b16 %v5769, %v5768
      %v5803 = vpack.c.b16 %v5771, %v5770
      %5836 = vmatprep.subr.bf16.mxu0 0
      %5837 = vmatpush1.bf16.msra.mxu0 %v5772
      %5838 = vmatprep.subr.bf16.mxu0 0
      %5839 = vmatpush1.bf16.msra.mxu0 %v5773
      %5840 = vmatprep.subr.bf16.mxu0 0
      %5841 = vmatpush1.bf16.msra.mxu0 %v5774
      %5842 = vmatprep.subr.bf16.mxu0 0
      %5843 = vmatpush1.bf16.msra.mxu0 %v5775
      %5844 = vmatprep.subr.bf16.mxu0 0
      %5845 = vmatpush1.bf16.msra.mxu0 %v5776
      %5846 = vmatprep.subr.bf16.mxu0 0
      %5847 = vmatpush1.bf16.msra.mxu0 %v5777
      %5848 = vmatprep.subr.bf16.mxu0 0
      %5849 = vmatpush1.bf16.msra.mxu0 %v5778
      %5850 = vmatprep.subr.bf16.mxu0 0
      %5851 = vmatpush1.bf16.msra.mxu0 %v5779
      %5852 = vmatprep.subr.bf16.mxu0 0
      %5853 = vmatpush1.bf16.msra.mxu0 %v5780
      %5854 = vmatprep.subr.bf16.mxu0 0
      %5855 = vmatpush1.bf16.msra.mxu0 %v5781
      %5856 = vmatprep.subr.bf16.mxu0 0
      %5857 = vmatpush1.bf16.msra.mxu0 %v5782
      %5858 = vmatprep.subr.bf16.mxu0 0
      %5859 = vmatpush1.bf16.msra.mxu0 %v5783
      %5860 = vmatprep.subr.bf16.mxu0 0
      %5861 = vmatpush1.bf16.msra.mxu0 %v5784
      %5862 = vmatprep.subr.bf16.mxu0 0
      %5863 = vmatpush1.bf16.msra.mxu0 %v5785
      %5864 = vmatprep.subr.bf16.mxu0 0
      %5865 = vmatpush1.bf16.msra.mxu0 %v5786
      %5866 = vmatprep.subr.bf16.mxu0 0
      %5867 = vmatpush1.bf16.msra.mxu0 %v5787
      %5868 = vmatprep.mubr.bf16.mxu0 %v5570
      %5869 = vmatmul.mubr.bf16.gmra.mrb[0].mxu0 %v5569
      %v5870 = vpop.f32.mrb[0].mxu0
      %v5871 = vadd.f32 %v5642, %v5870
      %v5872 = vpop.f32.mrb[0].mxu0
      %v5873 = vpop.f32.mrb[0].mxu0
      %v5874 = vadd.f32 %v5642, %v5873
      %v5875 = vpop.f32.mrb[0].mxu0
      %5876 = vdwg.mxu0
      %5877 = vmatprep.subr.bf16.mxu0 0
      %5878 = vmatpush1.bf16.msra.mxu0 %v5788
      %5879 = vmatprep.subr.bf16.mxu0 0
      %5880 = vmatpush1.bf16.msra.mxu0 %v5789
      %5881 = vmatprep.subr.bf16.mxu0 0
      %5882 = vmatpush1.bf16.msra.mxu0 %v5790
      %5883 = vmatprep.subr.bf16.mxu0 0
      %5884 = vmatpush1.bf16.msra.mxu0 %v5791
      %5885 = vmatprep.subr.bf16.mxu0 0
      %5886 = vmatpush1.bf16.msra.mxu0 %v5792
      %5887 = vmatprep.subr.bf16.mxu0 0
      %5888 = vmatpush1.bf16.msra.mxu0 %v5793
      %5889 = vmatprep.subr.bf16.mxu0 0
      %5890 = vmatpush1.bf16.msra.mxu0 %v5794
      %5891 = vmatprep.subr.bf16.mxu0 0
      %5892 = vmatpush1.bf16.msra.mxu0 %v5795
      %5893 = vmatprep.subr.bf16.mxu0 0
      %5894 = vmatpush1.bf16.msra.mxu0 %v5796
      %5895 = vmatprep.subr.bf16.mxu0 0
      %5896 = vmatpush1.bf16.msra.mxu0 %v5797
      %5897 = vmatprep.subr.bf16.mxu0 0
      %5898 = vmatpush1.bf16.msra.mxu0 %v5798
      %5899 = vmatprep.subr.bf16.mxu0 0
      %5900 = vmatpush1.bf16.msra.mxu0 %v5799
      %5901 = vmatprep.subr.bf16.mxu0 0
      %5902 = vmatpush1.bf16.msra.mxu0 %v5800
      %5903 = vmatprep.subr.bf16.mxu0 0
      %5904 = vmatpush1.bf16.msra.mxu0 %v5801
      %5905 = vmatprep.subr.bf16.mxu0 0
      %5906 = vmatpush1.bf16.msra.mxu0 %v5802
      %5907 = vmatprep.subr.bf16.mxu0 0
      %5908 = vmatpush1.bf16.msra.mxu0 %v5803
      %5909 = vmatprep.mubr.bf16.mxu0 %v5572
      %5910 = vmatmul.mubr.bf16.gmra.mrb[0].mxu0 %v5571
      %v5911 = vpop.f32.mrb[0].mxu0
      %v5912 = vadd.f32 %v5871, %v5911
      %v5913 = vpop.f32.mrb[0].mxu0
      %v5914 = vpop.f32.mrb[0].mxu0
      %v5915 = vadd.f32 %v5874, %v5914
      %v5916 = vpop.f32.mrb[0].mxu0
      %5917 = vdwg.mxu0
      %5920 = vrot.lane.b32.xlu0 %v5912, 127
      %v5921 = vpop.permute.xlu0 %5920
      %5922 = vrot.lane.b32.xlu0 %v5915, 127
      %v5923 = vpop.permute.xlu0 %5922
      %v5926 = vmax.f32 %v5912, %v5921
      %v5927 = vmax.f32 %v5915, %v5923
      %v5928 = vsub.f32 %v5912, %v5921
      %v5929 = vsub.f32 %v5915, %v5923
      %v5930 = vand.u32 2147483647, %v5928
      %v5931 = vand.u32 2147483647, %v5929
      %v5932 = vsub.f32 0.0, %v5930
      %v5933 = vsub.f32 0.0, %v5931
      %v5934 = vmul.f32 %v5932, 1.442695
      %v5935 = vpow.pop %v5934
      %v5936 = vmul.f32 %v5933, 1.442695
      %v5937 = vpow.pop %v5936
      %v5938 = vadd.f32 %v5935, 1.0
      %v5939 = vadd.f32 %v5937, 1.0
      %v5940 = vlog2.pop %v5938
      %v5941 = vmul.f32 %v5940, 0.6931472
      %v5942 = vlog2.pop %v5939
      %v5943 = vmul.f32 %v5942, 0.6931472
      %v5944 = vadd.f32 %v5926, %v5941
      %v5945 = vadd.f32 %v5927, %v5943
      %5947 = vset.pattern.permute.xlu0 0
      %5948 = vperm.xlu0 %5947, %v5944
      %v5949 = vpop.permute.xlu0 %5948
      %5952 = vset.pattern.permute.xlu0 0
      %5953 = vperm.xlu0 %5952, %v5945
      %v5954 = vpop.permute.xlu0 %5953
      %v5956 = vsub.f32 %v5912, %v5949
      %v5957 = vsub.f32 %v5915, %v5954
      %5958 = vst [vmem:[#allocation18] sm:$0xff] %v5956
      %5959 = vst [vmem:[#allocation18 + $0x8] sm:$0xff] %v5957
    $region73: #{tpu_custom_call.1} parent=1 // pred_fallthru
      _
    // Predicated region
    $region74: #{tpu_custom_call.1} parent=1 // pred_check
      _
    $region75: #{tpu_custom_call.1} parent=1 // pred_check_branch
      %5961 = sbr.rel (0) target = $region77
    $region76: #{tpu_custom_call.1} parent=1 // pred_region
      %s5963 = ssub.s32 256, 256
      %5964 = vsyncadd [#allocation6], %s5963
      %s5965 = sshll.u32 [#allocation18], 4
      %s5966 = int_to_ptr.vmem [resolvable:$true] %s5965
      %5971 = dma.vmem_to_hbm [thread:$0]  %s5966, 256, %s8, [#allocation6], 128, 128, 8
    $region77: #{tpu_custom_call.1} parent=1 // pred_fallthru
      _
    // Predicated region
    $region78: #{tpu_custom_call.1} parent=1 // pred_check
      _
    $region79: #{tpu_custom_call.1} parent=1 // pred_check_branch
      %5973 = sbr.rel (0) target = $region81
    $region80: #{tpu_custom_call.1} parent=1 // pred_region
      %5974 = dma.done [#allocation6], 256
    $region81: #{tpu_custom_call.1} parent=1 // pred_fallthru
      _
    %5975 = vsyncpa [#allocation5], 1
    %5976 = vsyncpa [#allocation8], 1
    %5977 = vsyncpa [#allocation11], 1
    %5978 = vsyncpa [#allocation14], 1
    %5979 = vsyncpa [#allocation17], 1
    %5980 = vsyncpa [#allocation6], 1

</llo_original>
